<compile_context>
chip_gen: v7x
topology: tpu7x:2x2x1
jax: 0.10.0
libtpu: 0.0.40
codegen_flags: <defaults>
</compile_context>

<pallas_src>
import numpy as np
import jax
import jax.numpy as jnp
from jax import lax
from jax.experimental import pallas as pl
from jax.experimental.pallas import tpu as pltpu

NUM_LAYERS = 4
EMB_DIM = 64
IN_DIM = 11
EDGE_DIM = 4
GRAPH_OUT_DIM = 1
NODE_OUT_DIM = 5


def rmpnn_kernel(src_ref, tgt_ref,                 # SMEM (E,) int32 edge index
                 xh_ref, eattr_ref,                # VMEM (N, in+emb), (E, edge)
                 w_xh_ref, b_xh_ref,               # fused input projection
                 w1_ref, b1_ref, w2_ref, b2_ref,   # message MLP params (L, ...)
                 u1_ref, c1_ref, u2_ref, c2_ref,   # update  MLP params (L, ...)
                 h_ref,                            # output (N, emb) = working h
                 gi_ref, gj_ref, msg_ref, aggr_ref):   # VMEM scratch
    dot = lambda a, b: jnp.dot(a, b, preferred_element_type=jnp.float32)
    relu = lambda v: jnp.maximum(v, 0.0)
    num_edges = msg_ref.shape[0]

    # Fused input projection: h = relu([x | prev_h] @ [w_in; w_hist] + b).
    h_ref[...] = relu(dot(xh_ref[...], w_xh_ref[...]) + b_xh_ref[...])

    eattr = eattr_ref[...]

    for l in range(NUM_LAYERS):
        # ---- gather h rows of message targets (i) and sources (j) -----------
        # Index-based gather (SMEM indices + dynamic row loads) replaces the
        # dense (E, N) one-hot matmuls: O(E*emb) instead of O(E*N*emb).
        def gather_body(e, carry):
            t = tgt_ref[e]
            s = src_ref[e]
            gi_ref[pl.ds(e, 1), :] = h_ref[pl.ds(t, 1), :]
            gj_ref[pl.ds(e, 1), :] = h_ref[pl.ds(s, 1), :]
            return carry

        lax.fori_loop(0, num_edges, gather_body, 0)

        # ---- message MLP: one fused MXU contraction over [h_i | h_j | e] ----
        g = jnp.concatenate([gi_ref[...], gj_ref[...], eattr], axis=1)
        m = relu(dot(g, w1_ref[l]) + b1_ref[l])
        m = relu(dot(m, w2_ref[l]) + b2_ref[l])
        msg_ref[...] = m

        # ---- scatter-add messages onto target nodes (VMEM accumulator) ------
        aggr_ref[...] = jnp.zeros_like(aggr_ref)

        def scatter_body(e, carry):
            t = tgt_ref[e]
            aggr_ref[pl.ds(t, 1), :] = (aggr_ref[pl.ds(t, 1), :]
                                        + msg_ref[pl.ds(e, 1), :])
            return carry

        lax.fori_loop(0, num_edges, scatter_body, 0)

        # ---- update MLP: fused K=128 contraction over [h | aggr]; residual --
        hu = jnp.concatenate([h_ref[...], aggr_ref[...]], axis=1)
        u = relu(dot(hu, u1_ref[l]) + c1_ref[l])
        u = relu(dot(u, u2_ref[l]) + c2_ref[l])
        h_ref[...] = h_ref[...] + u


@jax.jit
def rmpnn_forward(x, prev_h, edge_index, edge_attr, params):
    n = x.shape[0]
    e = edge_attr.shape[0]

    # Parameter packing for the fused contractions (tiny one-time glue).
    xh = jnp.concatenate([x, prev_h], axis=1)                              # (N, in+emb)
    w_xh = jnp.concatenate([params['w_in'], params['w_hist']], axis=0)     # (in+emb, emb)
    b_xh = params['b_in'] + params['b_hist']                               # (1, emb)
    w1 = jnp.concatenate([params['w1a'], params['w1b'], params['w1c']],
                         axis=1)                                           # (L, 2*emb+edge, emb)
    u1 = jnp.concatenate([params['u1a'], params['u1b']], axis=1)           # (L, 2*emb, emb)
    src = edge_index[0].astype(jnp.int32)
    tgt = edge_index[1].astype(jnp.int32)

    inputs = (src, tgt, xh, edge_attr,
              w_xh, b_xh,
              w1, params['b1'], params['w2'], params['b2'],
              u1, params['c1'], params['u2'], params['c2'])

    in_specs = (
        [pl.BlockSpec(memory_space=pltpu.MemorySpace.SMEM) for _ in range(2)] +
        [pl.BlockSpec(memory_space=pltpu.MemorySpace.VMEM)
         for _ in range(len(inputs) - 2)])

    h = pl.pallas_call(
        rmpnn_kernel,
        out_shape=jax.ShapeDtypeStruct((n, EMB_DIM), jnp.float32),
        in_specs=in_specs,
        out_specs=pl.BlockSpec(memory_space=pltpu.MemorySpace.VMEM),
        scratch_shapes=[
            pltpu.VMEM((e, EMB_DIM), jnp.float32),   # gathered h_i
            pltpu.VMEM((e, EMB_DIM), jnp.float32),   # gathered h_j
            pltpu.VMEM((e, EMB_DIM), jnp.float32),   # messages
            pltpu.VMEM((n, EMB_DIM), jnp.float32),   # scatter-add accumulator
        ],
        compiler_params=pltpu.CompilerParams(vmem_limit_bytes=32 * 1024 * 1024),
    )(*inputs)

    # Lane-dense kernel output (N, emb); the tiny heads run here in the wrapper.
    h_graph = jnp.mean(h, axis=0)
    graph_out = (h_graph @ params['w_g'] + params['b_g']).reshape(GRAPH_OUT_DIM)
    node_out = h @ params['w_n'] + params['b_n']
    return graph_out, node_out, h


# ---------------------------------------------------------------------------
# deterministic parameter init (synthetic; BatchNorm folded into Linears)
# ---------------------------------------------------------------------------
def init_params(key):
    keys = iter(jax.random.split(key, 128))

    def lin(din, dout):
        w = jax.random.normal(next(keys), (din, dout), jnp.float32) / np.sqrt(din)
        b = 0.01 * jax.random.normal(next(keys), (1, dout), jnp.float32)
        return w, b

    def bn(dim, eps=1e-5):
        gamma = 1.0 + 0.1 * jax.random.normal(next(keys), (dim,), jnp.float32)
        beta = 0.1 * jax.random.normal(next(keys), (dim,), jnp.float32)
        mean = 0.1 * jax.random.normal(next(keys), (dim,), jnp.float32)
        var = 1.0 + 0.1 * jax.random.uniform(next(keys), (dim,), jnp.float32)
        a = gamma / jnp.sqrt(var + eps)
        c = beta - mean * a
        return a, c  # y = x * a + c

    def fold(w, b, a, c):
        return w * a[None, :], b * a[None, :] + c[None, :]

    p = {}
    p['w_in'], p['b_in'] = lin(IN_DIM, EMB_DIM)
    p['w_hist'], p['b_hist'] = lin(EMB_DIM, EMB_DIM)
    p['w_g'], p['b_g'] = lin(EMB_DIM, GRAPH_OUT_DIM)
    p['w_n'], p['b_n'] = lin(EMB_DIM, NODE_OUT_DIM)

    w1a, w1b, w1c, b1, w2, b2 = [], [], [], [], [], []
    u1a, u1b, c1, u2, c2 = [], [], [], [], []
    for _ in range(NUM_LAYERS):
        # message MLP: Linear(2*emb+edge_dim, emb)->BN->ReLU->Linear(emb,emb)->BN->ReLU
        wm1, bm1 = lin(2 * EMB_DIM + EDGE_DIM, EMB_DIM)
        wm1, bm1 = fold(wm1, bm1, *bn(EMB_DIM))
        wm2, bm2 = lin(EMB_DIM, EMB_DIM)
        wm2, bm2 = fold(wm2, bm2, *bn(EMB_DIM))
        w1a.append(wm1[:EMB_DIM])                    # acts on h_i
        w1b.append(wm1[EMB_DIM:2 * EMB_DIM])         # acts on h_j
        w1c.append(wm1[2 * EMB_DIM:])                # acts on edge_attr
        b1.append(bm1)
        w2.append(wm2); b2.append(bm2)
        # update MLP: Linear(2*emb, emb)->BN->ReLU->Linear(emb,emb)->BN->ReLU
        wu1, bu1 = lin(2 * EMB_DIM, EMB_DIM)
        wu1, bu1 = fold(wu1, bu1, *bn(EMB_DIM))
        wu2, bu2 = lin(EMB_DIM, EMB_DIM)
        wu2, bu2 = fold(wu2, bu2, *bn(EMB_DIM))
        u1a.append(wu1[:EMB_DIM])                    # acts on h
        u1b.append(wu1[EMB_DIM:])                    # acts on aggr
        c1.append(bu1)
        u2.append(wu2); c2.append(bu2)

    for name, lst in [('w1a', w1a), ('w1b', w1b), ('w1c', w1c), ('b1', b1),
                      ('w2', w2), ('b2', b2), ('u1a', u1a), ('u1b', u1b),
                      ('c1', c1), ('u2', u2), ('c2', c2)]:
        p[name] = jnp.stack(lst, axis=0)
    return p


# ---------------------------------------------------------------------------
# pure-JAX reference (mirrors the PyTorch forward) for correctness checking
# ---------------------------------------------------------------------------
def rmpnn_ref(x, prev_h, edge_index, edge_attr, p):
    relu = lambda v: jnp.maximum(v, 0.0)
    h = x @ p['w_in'] + p['b_in'] + prev_h @ p['w_hist'] + p['b_hist']
    h = relu(h)
    src, tgt = edge_index[0], edge_index[1]
    n = x.shape[0]
    for l in range(NUM_LAYERS):
        h_i, h_j = h[tgt], h[src]
        m = relu(h_i @ p['w1a'][l] + h_j @ p['w1b'][l] + edge_attr @ p['w1c'][l] + p['b1'][l])
        m = relu(m @ p['w2'][l] + p['b2'][l])
        aggr = jnp.zeros((n, EMB_DIM), jnp.float32).at[tgt].add(m)
        u = relu(h @ p['u1a'][l] + aggr @ p['u1b'][l] + p['c1'][l])
        u = relu(u @ p['u2'][l] + p['c2'][l])
        h = h + u
    hg = jnp.mean(h, axis=0)
    graph_out = (hg @ p['w_g'] + p['b_g']).reshape(GRAPH_OUT_DIM)
    node_out = h @ p['w_n'] + p['b_n']
    return graph_out, node_out, h


if __name__ == "__main__":
    key = jax.random.PRNGKey(0)
    k_x, k_h, k_ei, k_ea, k_p = jax.random.split(key, 5)

    N, E = 16, 48  # small graph: 16 nodes, 48 directed edges
    x = jax.random.normal(k_x, (N, IN_DIM), jnp.float32)
    prev_h = jax.random.normal(k_h, (N, EMB_DIM), jnp.float32)
    edge_index = jax.random.randint(k_ei, (2, E), 0, N, dtype=jnp.int32)
    edge_attr = jax.random.normal(k_ea, (E, EDGE_DIM), jnp.float32)
    params = init_params(k_p)

    graph_out, node_out, h = rmpnn_forward(x, prev_h, edge_index, edge_attr, params)
    jax.block_until_ready((graph_out, node_out, h))

    g_ref, n_ref, h_ref = rmpnn_ref(x, prev_h, edge_index, edge_attr, params)
    np.testing.assert_allclose(np.asarray(graph_out), np.asarray(g_ref), rtol=2e-3, atol=2e-3)
    np.testing.assert_allclose(np.asarray(node_out), np.asarray(n_ref), rtol=2e-3, atol=2e-3)
    np.testing.assert_allclose(np.asarray(h), np.asarray(h_ref), rtol=2e-3, atol=2e-3)

    print("KERNEL_OK")
</pallas_src>

<mosaic_0001>
module attributes {stable_mosaic.version = 11 : i64} {
  func.func @rmpnn_kernel(%arg0: memref<48xi32, #tpu.memory_space<smem>>, %arg1: memref<48xi32, #tpu.memory_space<smem>>, %arg2: memref<16x75xf32, #tpu.memory_space<vmem>>, %arg3: memref<48x4xf32, #tpu.memory_space<vmem>>, %arg4: memref<75x64xf32, #tpu.memory_space<vmem>>, %arg5: memref<1x64xf32, #tpu.memory_space<vmem>>, %arg6: memref<4x132x64xf32, #tpu.memory_space<vmem>>, %arg7: memref<4x1x64xf32, #tpu.memory_space<vmem>>, %arg8: memref<4x64x64xf32, #tpu.memory_space<vmem>>, %arg9: memref<4x1x64xf32, #tpu.memory_space<vmem>>, %arg10: memref<4x128x64xf32, #tpu.memory_space<vmem>>, %arg11: memref<4x1x64xf32, #tpu.memory_space<vmem>>, %arg12: memref<4x64x64xf32, #tpu.memory_space<vmem>>, %arg13: memref<4x1x64xf32, #tpu.memory_space<vmem>>, %arg14: memref<16x64xf32, #tpu.memory_space<vmem>>, %arg15: memref<48x64xf32, #tpu.memory_space<vmem>>, %arg16: memref<48x64xf32, #tpu.memory_space<vmem>>, %arg17: memref<48x64xf32, #tpu.memory_space<vmem>>, %arg18: memref<16x64xf32, #tpu.memory_space<vmem>>) attributes {dimension_semantics = [], scalar_prefetch = 0 : i64, scratch_operands = 4 : i64, tpu.core_type = #tpu.core_type<tc>} {
    %c0 = arith.constant 0 : index
    %c0_0 = arith.constant 0 : index
    %0 = vector.load %arg2[%c0, %c0_0] : memref<16x75xf32, #tpu.memory_space<vmem>>, vector<16x75xf32>
    %c0_1 = arith.constant 0 : index
    %c0_2 = arith.constant 0 : index
    %1 = vector.load %arg4[%c0_1, %c0_2] : memref<75x64xf32, #tpu.memory_space<vmem>>, vector<75x64xf32>
    %cst = arith.constant dense<0.000000e+00> : vector<16x64xf32>
    %2 = tpu.matmul %0, %1, %cst {dimension_numbers = #tpu.dot_dimension_numbers<[1], [0], [0], [1], [0, 0, 1, 1], [], []>} : vector<16x75xf32>, vector<75x64xf32>, vector<16x64xf32> -> vector<16x64xf32>
    %c0_3 = arith.constant 0 : index
    %c0_4 = arith.constant 0 : index
    %3 = vector.load %arg5[%c0_3, %c0_4] : memref<1x64xf32, #tpu.memory_space<vmem>>, vector<1x64xf32>
    %4 = vector.broadcast %3 : vector<1x64xf32> to vector<16x64xf32>
    %5 = arith.addf %2, %4 : vector<16x64xf32>
    %cst_5 = arith.constant 0.000000e+00 : f32
    %6 = vector.broadcast %cst_5 : f32 to vector<16x64xf32>
    %7 = arith.maximumf %5, %6 : vector<16x64xf32>
    %c0_6 = arith.constant 0 : index
    %c0_7 = arith.constant 0 : index
    %8 = vector.load %arg14[%c0_6, %c0_7] : memref<16x64xf32, #tpu.memory_space<vmem>>, vector<16x64xf32>
    tpu.vector_store %arg14[%c0_6, %c0_7], %7 {strides = array<i32>} : memref<16x64xf32, #tpu.memory_space<vmem>>, vector<16x64xf32>,
    %c0_8 = arith.constant 0 : index
    %c0_9 = arith.constant 0 : index
    %9 = vector.load %arg3[%c0_8, %c0_9] : memref<48x4xf32, #tpu.memory_space<vmem>>, vector<48x4xf32>
    %c0_i32 = arith.constant 0 : i32
    %c48_i32 = arith.constant 48 : i32
    %10 = arith.addi %c0_i32, %c48_i32 : i32
    %c1_i32 = arith.constant 1 : i32
    scf.for %arg19 = %c0_i32 to %10 step %c1_i32  : i32 {
      %210 = arith.index_cast %arg19 : i32 to index
      %211 = memref.load %arg1[%210] : memref<48xi32, #tpu.memory_space<smem>>
      %212 = arith.index_cast %arg19 : i32 to index
      %213 = memref.load %arg0[%212] : memref<48xi32, #tpu.memory_space<smem>>
      %214 = arith.index_cast %211 : i32 to index
      %c0_232 = arith.constant 0 : index
      %215 = vector.load %arg14[%214, %c0_232] : memref<16x64xf32, #tpu.memory_space<vmem>>, vector<1x64xf32>
      %216 = arith.index_cast %arg19 : i32 to index
      %c0_233 = arith.constant 0 : index
      %217 = vector.load %arg15[%216, %c0_233] : memref<48x64xf32, #tpu.memory_space<vmem>>, vector<1x64xf32>
      tpu.vector_store %arg15[%216, %c0_233], %215 {strides = array<i32>} : memref<48x64xf32, #tpu.memory_space<vmem>>, vector<1x64xf32>,
      %218 = arith.index_cast %213 : i32 to index
      %c0_234 = arith.constant 0 : index
      %219 = vector.load %arg14[%218, %c0_234] : memref<16x64xf32, #tpu.memory_space<vmem>>, vector<1x64xf32>
      %220 = arith.index_cast %arg19 : i32 to index
      %c0_235 = arith.constant 0 : index
      %221 = vector.load %arg16[%220, %c0_235] : memref<48x64xf32, #tpu.memory_space<vmem>>, vector<1x64xf32>
      tpu.vector_store %arg16[%220, %c0_235], %219 {strides = array<i32>} : memref<48x64xf32, #tpu.memory_space<vmem>>, vector<1x64xf32>,
    }
    %c48_i32_10 = arith.constant 48 : i32
    %c0_11 = arith.constant 0 : index
    %c0_12 = arith.constant 0 : index
    %11 = vector.load %arg15[%c0_11, %c0_12] : memref<48x64xf32, #tpu.memory_space<vmem>>, vector<48x64xf32>
    %c0_13 = arith.constant 0 : index
    %c0_14 = arith.constant 0 : index
    %12 = vector.load %arg16[%c0_13, %c0_14] : memref<48x64xf32, #tpu.memory_space<vmem>>, vector<48x64xf32>
    %13 = tpu.concatenate %11, %12, %9 in 1 : vector<48x64xf32>, vector<48x64xf32>, vector<48x4xf32> -> vector<48x132xf32>
    %c0_15 = arith.constant 0 : index
    %c0_16 = arith.constant 0 : index
    %c0_17 = arith.constant 0 : index
    %14 = vector.load %arg6[%c0_15, %c0_16, %c0_17] : memref<4x132x64xf32, #tpu.memory_space<vmem>>, vector<1x132x64xf32>
    %15 = vector.shape_cast %14 : vector<1x132x64xf32> to vector<132x64xf32>
    %cst_18 = arith.constant dense<0.000000e+00> : vector<48x64xf32>
    %16 = tpu.matmul %13, %15, %cst_18 {dimension_numbers = #tpu.dot_dimension_numbers<[1], [0], [0], [1], [0, 0, 1, 1], [], []>} : vector<48x132xf32>, vector<132x64xf32>, vector<48x64xf32> -> vector<48x64xf32>
    %c0_19 = arith.constant 0 : index
    %c0_20 = arith.constant 0 : index
    %c0_21 = arith.constant 0 : index
    %17 = vector.load %arg7[%c0_19, %c0_20, %c0_21] : memref<4x1x64xf32, #tpu.memory_space<vmem>>, vector<1x1x64xf32>
    %18 = vector.shape_cast %17 : vector<1x1x64xf32> to vector<1x64xf32>
    %19 = vector.broadcast %18 : vector<1x64xf32> to vector<48x64xf32>
    %20 = arith.addf %16, %19 : vector<48x64xf32>
    %cst_22 = arith.constant 0.000000e+00 : f32
    %21 = vector.broadcast %cst_22 : f32 to vector<48x64xf32>
    %22 = arith.maximumf %20, %21 : vector<48x64xf32>
    %c0_23 = arith.constant 0 : index
    %c0_24 = arith.constant 0 : index
    %c0_25 = arith.constant 0 : index
    %23 = vector.load %arg8[%c0_23, %c0_24, %c0_25] : memref<4x64x64xf32, #tpu.memory_space<vmem>>, vector<1x64x64xf32>
    %24 = vector.shape_cast %23 : vector<1x64x64xf32> to vector<64x64xf32>
    %cst_26 = arith.constant dense<0.000000e+00> : vector<48x64xf32>
    %25 = tpu.matmul %22, %24, %cst_26 {dimension_numbers = #tpu.dot_dimension_numbers<[1], [0], [0], [1], [0, 0, 1, 1], [], []>} : vector<48x64xf32>, vector<64x64xf32>, vector<48x64xf32> -> vector<48x64xf32>
    %c0_27 = arith.constant 0 : index
    %c0_28 = arith.constant 0 : index
    %c0_29 = arith.constant 0 : index
    %26 = vector.load %arg9[%c0_27, %c0_28, %c0_29] : memref<4x1x64xf32, #tpu.memory_space<vmem>>, vector<1x1x64xf32>
    %27 = vector.shape_cast %26 : vector<1x1x64xf32> to vector<1x64xf32>
    %28 = vector.broadcast %27 : vector<1x64xf32> to vector<48x64xf32>
    %29 = arith.addf %25, %28 : vector<48x64xf32>
    %cst_30 = arith.constant 0.000000e+00 : f32
    %30 = vector.broadcast %cst_30 : f32 to vector<48x64xf32>
    %31 = arith.maximumf %29, %30 : vector<48x64xf32>
    %c0_31 = arith.constant 0 : index
    %c0_32 = arith.constant 0 : index
    %32 = vector.load %arg17[%c0_31, %c0_32] : memref<48x64xf32, #tpu.memory_space<vmem>>, vector<48x64xf32>
    tpu.vector_store %arg17[%c0_31, %c0_32], %31 {strides = array<i32>} : memref<48x64xf32, #tpu.memory_space<vmem>>, vector<48x64xf32>,
    %cst_33 = arith.constant 0.000000e+00 : f32
    %33 = vector.broadcast %cst_33 : f32 to vector<16x64xf32>
    %c0_34 = arith.constant 0 : index
    %c0_35 = arith.constant 0 : index
    %34 = vector.load %arg18[%c0_34, %c0_35] : memref<16x64xf32, #tpu.memory_space<vmem>>, vector<16x64xf32>
    tpu.vector_store %arg18[%c0_34, %c0_35], %33 {strides = array<i32>} : memref<16x64xf32, #tpu.memory_space<vmem>>, vector<16x64xf32>,
    %c0_i32_36 = arith.constant 0 : i32
    %c48_i32_37 = arith.constant 48 : i32
    %35 = arith.addi %c0_i32_36, %c48_i32_37 : i32
    %c1_i32_38 = arith.constant 1 : i32
    scf.for %arg19 = %c0_i32_36 to %35 step %c1_i32_38  : i32 {
      %210 = arith.index_cast %arg19 : i32 to index
      %211 = memref.load %arg1[%210] : memref<48xi32, #tpu.memory_space<smem>>
      %212 = arith.index_cast %211 : i32 to index
      %c0_232 = arith.constant 0 : index
      %213 = vector.load %arg18[%212, %c0_232] : memref<16x64xf32, #tpu.memory_space<vmem>>, vector<1x64xf32>
      %214 = arith.index_cast %arg19 : i32 to index
      %c0_233 = arith.constant 0 : index
      %215 = vector.load %arg17[%214, %c0_233] : memref<48x64xf32, #tpu.memory_space<vmem>>, vector<1x64xf32>
      %216 = arith.addf %213, %215 : vector<1x64xf32>
      %217 = arith.index_cast %211 : i32 to index
      %c0_234 = arith.constant 0 : index
      %218 = vector.load %arg18[%217, %c0_234] : memref<16x64xf32, #tpu.memory_space<vmem>>, vector<1x64xf32>
      tpu.vector_store %arg18[%217, %c0_234], %216 {strides = array<i32>} : memref<16x64xf32, #tpu.memory_space<vmem>>, vector<1x64xf32>,
    }
    %c48_i32_39 = arith.constant 48 : i32
    %c0_40 = arith.constant 0 : index
    %c0_41 = arith.constant 0 : index
    %36 = vector.load %arg14[%c0_40, %c0_41] : memref<16x64xf32, #tpu.memory_space<vmem>>, vector<16x64xf32>
    %c0_42 = arith.constant 0 : index
    %c0_43 = arith.constant 0 : index
    %37 = vector.load %arg18[%c0_42, %c0_43] : memref<16x64xf32, #tpu.memory_space<vmem>>, vector<16x64xf32>
    %38 = tpu.concatenate %36, %37 in 1 : vector<16x64xf32>, vector<16x64xf32> -> vector<16x128xf32>
    %c0_44 = arith.constant 0 : index
    %c0_45 = arith.constant 0 : index
    %c0_46 = arith.constant 0 : index
    %39 = vector.load %arg10[%c0_44, %c0_45, %c0_46] : memref<4x128x64xf32, #tpu.memory_space<vmem>>, vector<1x128x64xf32>
    %40 = vector.shape_cast %39 : vector<1x128x64xf32> to vector<128x64xf32>
    %cst_47 = arith.constant dense<0.000000e+00> : vector<16x64xf32>
    %41 = tpu.matmul %38, %40, %cst_47 {dimension_numbers = #tpu.dot_dimension_numbers<[1], [0], [0], [1], [0, 0, 1, 1], [], []>} : vector<16x128xf32>, vector<128x64xf32>, vector<16x64xf32> -> vector<16x64xf32>
    %c0_48 = arith.constant 0 : index
    %c0_49 = arith.constant 0 : index
    %c0_50 = arith.constant 0 : index
    %42 = vector.load %arg11[%c0_48, %c0_49, %c0_50] : memref<4x1x64xf32, #tpu.memory_space<vmem>>, vector<1x1x64xf32>
    %43 = vector.shape_cast %42 : vector<1x1x64xf32> to vector<1x64xf32>
    %44 = vector.broadcast %43 : vector<1x64xf32> to vector<16x64xf32>
    %45 = arith.addf %41, %44 : vector<16x64xf32>
    %cst_51 = arith.constant 0.000000e+00 : f32
    %46 = vector.broadcast %cst_51 : f32 to vector<16x64xf32>
    %47 = arith.maximumf %45, %46 : vector<16x64xf32>
    %c0_52 = arith.constant 0 : index
    %c0_53 = arith.constant 0 : index
    %c0_54 = arith.constant 0 : index
    %48 = vector.load %arg12[%c0_52, %c0_53, %c0_54] : memref<4x64x64xf32, #tpu.memory_space<vmem>>, vector<1x64x64xf32>
    %49 = vector.shape_cast %48 : vector<1x64x64xf32> to vector<64x64xf32>
    %cst_55 = arith.constant dense<0.000000e+00> : vector<16x64xf32>
    %50 = tpu.matmul %47, %49, %cst_55 {dimension_numbers = #tpu.dot_dimension_numbers<[1], [0], [0], [1], [0, 0, 1, 1], [], []>} : vector<16x64xf32>, vector<64x64xf32>, vector<16x64xf32> -> vector<16x64xf32>
    %c0_56 = arith.constant 0 : index
    %c0_57 = arith.constant 0 : index
    %c0_58 = arith.constant 0 : index
    %51 = vector.load %arg13[%c0_56, %c0_57, %c0_58] : memref<4x1x64xf32, #tpu.memory_space<vmem>>, vector<1x1x64xf32>
    %52 = vector.shape_cast %51 : vector<1x1x64xf32> to vector<1x64xf32>
    %53 = vector.broadcast %52 : vector<1x64xf32> to vector<16x64xf32>
    %54 = arith.addf %50, %53 : vector<16x64xf32>
    %cst_59 = arith.constant 0.000000e+00 : f32
    %55 = vector.broadcast %cst_59 : f32 to vector<16x64xf32>
    %56 = arith.maximumf %54, %55 : vector<16x64xf32>
    %c0_60 = arith.constant 0 : index
    %c0_61 = arith.constant 0 : index
    %57 = vector.load %arg14[%c0_60, %c0_61] : memref<16x64xf32, #tpu.memory_space<vmem>>, vector<16x64xf32>
    %58 = arith.addf %57, %56 : vector<16x64xf32>
    %c0_62 = arith.constant 0 : index
    %c0_63 = arith.constant 0 : index
    %59 = vector.load %arg14[%c0_62, %c0_63] : memref<16x64xf32, #tpu.memory_space<vmem>>, vector<16x64xf32>
    tpu.vector_store %arg14[%c0_62, %c0_63], %58 {strides = array<i32>} : memref<16x64xf32, #tpu.memory_space<vmem>>, vector<16x64xf32>,
    %c0_i32_64 = arith.constant 0 : i32
    %c48_i32_65 = arith.constant 48 : i32
    %60 = arith.addi %c0_i32_64, %c48_i32_65 : i32
    %c1_i32_66 = arith.constant 1 : i32
    scf.for %arg19 = %c0_i32_64 to %60 step %c1_i32_66  : i32 {
      %210 = arith.index_cast %arg19 : i32 to index
      %211 = memref.load %arg1[%210] : memref<48xi32, #tpu.memory_space<smem>>
      %212 = arith.index_cast %arg19 : i32 to index
      %213 = memref.load %arg0[%212] : memref<48xi32, #tpu.memory_space<smem>>
      %214 = arith.index_cast %211 : i32 to index
      %c0_232 = arith.constant 0 : index
      %215 = vector.load %arg14[%214, %c0_232] : memref<16x64xf32, #tpu.memory_space<vmem>>, vector<1x64xf32>
      %216 = arith.index_cast %arg19 : i32 to index
      %c0_233 = arith.constant 0 : index
      %217 = vector.load %arg15[%216, %c0_233] : memref<48x64xf32, #tpu.memory_space<vmem>>, vector<1x64xf32>
      tpu.vector_store %arg15[%216, %c0_233], %215 {strides = array<i32>} : memref<48x64xf32, #tpu.memory_space<vmem>>, vector<1x64xf32>,
      %218 = arith.index_cast %213 : i32 to index
      %c0_234 = arith.constant 0 : index
      %219 = vector.load %arg14[%218, %c0_234] : memref<16x64xf32, #tpu.memory_space<vmem>>, vector<1x64xf32>
      %220 = arith.index_cast %arg19 : i32 to index
      %c0_235 = arith.constant 0 : index
      %221 = vector.load %arg16[%220, %c0_235] : memref<48x64xf32, #tpu.memory_space<vmem>>, vector<1x64xf32>
      tpu.vector_store %arg16[%220, %c0_235], %219 {strides = array<i32>} : memref<48x64xf32, #tpu.memory_space<vmem>>, vector<1x64xf32>,
    }
    %c48_i32_67 = arith.constant 48 : i32
    %c0_68 = arith.constant 0 : index
    %c0_69 = arith.constant 0 : index
    %61 = vector.load %arg15[%c0_68, %c0_69] : memref<48x64xf32, #tpu.memory_space<vmem>>, vector<48x64xf32>
    %c0_70 = arith.constant 0 : index
    %c0_71 = arith.constant 0 : index
    %62 = vector.load %arg16[%c0_70, %c0_71] : memref<48x64xf32, #tpu.memory_space<vmem>>, vector<48x64xf32>
    %63 = tpu.concatenate %61, %62, %9 in 1 : vector<48x64xf32>, vector<48x64xf32>, vector<48x4xf32> -> vector<48x132xf32>
    %c1 = arith.constant 1 : index
    %c0_72 = arith.constant 0 : index
    %c0_73 = arith.constant 0 : index
    %64 = vector.load %arg6[%c1, %c0_72, %c0_73] : memref<4x132x64xf32, #tpu.memory_space<vmem>>, vector<1x132x64xf32>
    %65 = vector.shape_cast %64 : vector<1x132x64xf32> to vector<132x64xf32>
    %cst_74 = arith.constant dense<0.000000e+00> : vector<48x64xf32>
    %66 = tpu.matmul %63, %65, %cst_74 {dimension_numbers = #tpu.dot_dimension_numbers<[1], [0], [0], [1], [0, 0, 1, 1], [], []>} : vector<48x132xf32>, vector<132x64xf32>, vector<48x64xf32> -> vector<48x64xf32>
    %c1_75 = arith.constant 1 : index
    %c0_76 = arith.constant 0 : index
    %c0_77 = arith.constant 0 : index
    %67 = vector.load %arg7[%c1_75, %c0_76, %c0_77] : memref<4x1x64xf32, #tpu.memory_space<vmem>>, vector<1x1x64xf32>
    %68 = vector.shape_cast %67 : vector<1x1x64xf32> to vector<1x64xf32>
    %69 = vector.broadcast %68 : vector<1x64xf32> to vector<48x64xf32>
    %70 = arith.addf %66, %69 : vector<48x64xf32>
    %cst_78 = arith.constant 0.000000e+00 : f32
    %71 = vector.broadcast %cst_78 : f32 to vector<48x64xf32>
    %72 = arith.maximumf %70, %71 : vector<48x64xf32>
    %c1_79 = arith.constant 1 : index
    %c0_80 = arith.constant 0 : index
    %c0_81 = arith.constant 0 : index
    %73 = vector.load %arg8[%c1_79, %c0_80, %c0_81] : memref<4x64x64xf32, #tpu.memory_space<vmem>>, vector<1x64x64xf32>
    %74 = vector.shape_cast %73 : vector<1x64x64xf32> to vector<64x64xf32>
    %cst_82 = arith.constant dense<0.000000e+00> : vector<48x64xf32>
    %75 = tpu.matmul %72, %74, %cst_82 {dimension_numbers = #tpu.dot_dimension_numbers<[1], [0], [0], [1], [0, 0, 1, 1], [], []>} : vector<48x64xf32>, vector<64x64xf32>, vector<48x64xf32> -> vector<48x64xf32>
    %c1_83 = arith.constant 1 : index
    %c0_84 = arith.constant 0 : index
    %c0_85 = arith.constant 0 : index
    %76 = vector.load %arg9[%c1_83, %c0_84, %c0_85] : memref<4x1x64xf32, #tpu.memory_space<vmem>>, vector<1x1x64xf32>
    %77 = vector.shape_cast %76 : vector<1x1x64xf32> to vector<1x64xf32>
    %78 = vector.broadcast %77 : vector<1x64xf32> to vector<48x64xf32>
    %79 = arith.addf %75, %78 : vector<48x64xf32>
    %cst_86 = arith.constant 0.000000e+00 : f32
    %80 = vector.broadcast %cst_86 : f32 to vector<48x64xf32>
    %81 = arith.maximumf %79, %80 : vector<48x64xf32>
    %c0_87 = arith.constant 0 : index
    %c0_88 = arith.constant 0 : index
    %82 = vector.load %arg17[%c0_87, %c0_88] : memref<48x64xf32, #tpu.memory_space<vmem>>, vector<48x64xf32>
    tpu.vector_store %arg17[%c0_87, %c0_88], %81 {strides = array<i32>} : memref<48x64xf32, #tpu.memory_space<vmem>>, vector<48x64xf32>,
    %cst_89 = arith.constant 0.000000e+00 : f32
    %83 = vector.broadcast %cst_89 : f32 to vector<16x64xf32>
    %c0_90 = arith.constant 0 : index
    %c0_91 = arith.constant 0 : index
    %84 = vector.load %arg18[%c0_90, %c0_91] : memref<16x64xf32, #tpu.memory_space<vmem>>, vector<16x64xf32>
    tpu.vector_store %arg18[%c0_90, %c0_91], %83 {strides = array<i32>} : memref<16x64xf32, #tpu.memory_space<vmem>>, vector<16x64xf32>,
    %c0_i32_92 = arith.constant 0 : i32
    %c48_i32_93 = arith.constant 48 : i32
    %85 = arith.addi %c0_i32_92, %c48_i32_93 : i32
    %c1_i32_94 = arith.constant 1 : i32
    scf.for %arg19 = %c0_i32_92 to %85 step %c1_i32_94  : i32 {
      %210 = arith.index_cast %arg19 : i32 to index
      %211 = memref.load %arg1[%210] : memref<48xi32, #tpu.memory_space<smem>>
      %212 = arith.index_cast %211 : i32 to index
      %c0_232 = arith.constant 0 : index
      %213 = vector.load %arg18[%212, %c0_232] : memref<16x64xf32, #tpu.memory_space<vmem>>, vector<1x64xf32>
      %214 = arith.index_cast %arg19 : i32 to index
      %c0_233 = arith.constant 0 : index
      %215 = vector.load %arg17[%214, %c0_233] : memref<48x64xf32, #tpu.memory_space<vmem>>, vector<1x64xf32>
      %216 = arith.addf %213, %215 : vector<1x64xf32>
      %217 = arith.index_cast %211 : i32 to index
      %c0_234 = arith.constant 0 : index
      %218 = vector.load %arg18[%217, %c0_234] : memref<16x64xf32, #tpu.memory_space<vmem>>, vector<1x64xf32>
      tpu.vector_store %arg18[%217, %c0_234], %216 {strides = array<i32>} : memref<16x64xf32, #tpu.memory_space<vmem>>, vector<1x64xf32>,
    }
    %c48_i32_95 = arith.constant 48 : i32
    %c0_96 = arith.constant 0 : index
    %c0_97 = arith.constant 0 : index
    %86 = vector.load %arg14[%c0_96, %c0_97] : memref<16x64xf32, #tpu.memory_space<vmem>>, vector<16x64xf32>
    %c0_98 = arith.constant 0 : index
    %c0_99 = arith.constant 0 : index
    %87 = vector.load %arg18[%c0_98, %c0_99] : memref<16x64xf32, #tpu.memory_space<vmem>>, vector<16x64xf32>
    %88 = tpu.concatenate %86, %87 in 1 : vector<16x64xf32>, vector<16x64xf32> -> vector<16x128xf32>
    %c1_100 = arith.constant 1 : index
    %c0_101 = arith.constant 0 : index
    %c0_102 = arith.constant 0 : index
    %89 = vector.load %arg10[%c1_100, %c0_101, %c0_102] : memref<4x128x64xf32, #tpu.memory_space<vmem>>, vector<1x128x64xf32>
    %90 = vector.shape_cast %89 : vector<1x128x64xf32> to vector<128x64xf32>
    %cst_103 = arith.constant dense<0.000000e+00> : vector<16x64xf32>
    %91 = tpu.matmul %88, %90, %cst_103 {dimension_numbers = #tpu.dot_dimension_numbers<[1], [0], [0], [1], [0, 0, 1, 1], [], []>} : vector<16x128xf32>, vector<128x64xf32>, vector<16x64xf32> -> vector<16x64xf32>
    %c1_104 = arith.constant 1 : index
    %c0_105 = arith.constant 0 : index
    %c0_106 = arith.constant 0 : index
    %92 = vector.load %arg11[%c1_104, %c0_105, %c0_106] : memref<4x1x64xf32, #tpu.memory_space<vmem>>, vector<1x1x64xf32>
    %93 = vector.shape_cast %92 : vector<1x1x64xf32> to vector<1x64xf32>
    %94 = vector.broadcast %93 : vector<1x64xf32> to vector<16x64xf32>
    %95 = arith.addf %91, %94 : vector<16x64xf32>
    %cst_107 = arith.constant 0.000000e+00 : f32
    %96 = vector.broadcast %cst_107 : f32 to vector<16x64xf32>
    %97 = arith.maximumf %95, %96 : vector<16x64xf32>
    %c1_108 = arith.constant 1 : index
    %c0_109 = arith.constant 0 : index
    %c0_110 = arith.constant 0 : index
    %98 = vector.load %arg12[%c1_108, %c0_109, %c0_110] : memref<4x64x64xf32, #tpu.memory_space<vmem>>, vector<1x64x64xf32>
    %99 = vector.shape_cast %98 : vector<1x64x64xf32> to vector<64x64xf32>
    %cst_111 = arith.constant dense<0.000000e+00> : vector<16x64xf32>
    %100 = tpu.matmul %97, %99, %cst_111 {dimension_numbers = #tpu.dot_dimension_numbers<[1], [0], [0], [1], [0, 0, 1, 1], [], []>} : vector<16x64xf32>, vector<64x64xf32>, vector<16x64xf32> -> vector<16x64xf32>
    %c1_112 = arith.constant 1 : index
    %c0_113 = arith.constant 0 : index
    %c0_114 = arith.constant 0 : index
    %101 = vector.load %arg13[%c1_112, %c0_113, %c0_114] : memref<4x1x64xf32, #tpu.memory_space<vmem>>, vector<1x1x64xf32>
    %102 = vector.shape_cast %101 : vector<1x1x64xf32> to vector<1x64xf32>
    %103 = vector.broadcast %102 : vector<1x64xf32> to vector<16x64xf32>
    %104 = arith.addf %100, %103 : vector<16x64xf32>
    %cst_115 = arith.constant 0.000000e+00 : f32
    %105 = vector.broadcast %cst_115 : f32 to vector<16x64xf32>
    %106 = arith.maximumf %104, %105 : vector<16x64xf32>
    %c0_116 = arith.constant 0 : index
    %c0_117 = arith.constant 0 : index
    %107 = vector.load %arg14[%c0_116, %c0_117] : memref<16x64xf32, #tpu.memory_space<vmem>>, vector<16x64xf32>
    %108 = arith.addf %107, %106 : vector<16x64xf32>
    %c0_118 = arith.constant 0 : index
    %c0_119 = arith.constant 0 : index
    %109 = vector.load %arg14[%c0_118, %c0_119] : memref<16x64xf32, #tpu.memory_space<vmem>>, vector<16x64xf32>
    tpu.vector_store %arg14[%c0_118, %c0_119], %108 {strides = array<i32>} : memref<16x64xf32, #tpu.memory_space<vmem>>, vector<16x64xf32>,
    %c0_i32_120 = arith.constant 0 : i32
    %c48_i32_121 = arith.constant 48 : i32
    %110 = arith.addi %c0_i32_120, %c48_i32_121 : i32
    %c1_i32_122 = arith.constant 1 : i32
    scf.for %arg19 = %c0_i32_120 to %110 step %c1_i32_122  : i32 {
      %210 = arith.index_cast %arg19 : i32 to index
      %211 = memref.load %arg1[%210] : memref<48xi32, #tpu.memory_space<smem>>
      %212 = arith.index_cast %arg19 : i32 to index
      %213 = memref.load %arg0[%212] : memref<48xi32, #tpu.memory_space<smem>>
      %214 = arith.index_cast %211 : i32 to index
      %c0_232 = arith.constant 0 : index
      %215 = vector.load %arg14[%214, %c0_232] : memref<16x64xf32, #tpu.memory_space<vmem>>, vector<1x64xf32>
      %216 = arith.index_cast %arg19 : i32 to index
      %c0_233 = arith.constant 0 : index
      %217 = vector.load %arg15[%216, %c0_233] : memref<48x64xf32, #tpu.memory_space<vmem>>, vector<1x64xf32>
      tpu.vector_store %arg15[%216, %c0_233], %215 {strides = array<i32>} : memref<48x64xf32, #tpu.memory_space<vmem>>, vector<1x64xf32>,
      %218 = arith.index_cast %213 : i32 to index
      %c0_234 = arith.constant 0 : index
      %219 = vector.load %arg14[%218, %c0_234] : memref<16x64xf32, #tpu.memory_space<vmem>>, vector<1x64xf32>
      %220 = arith.index_cast %arg19 : i32 to index
      %c0_235 = arith.constant 0 : index
      %221 = vector.load %arg16[%220, %c0_235] : memref<48x64xf32, #tpu.memory_space<vmem>>, vector<1x64xf32>
      tpu.vector_store %arg16[%220, %c0_235], %219 {strides = array<i32>} : memref<48x64xf32, #tpu.memory_space<vmem>>, vector<1x64xf32>,
    }
    %c48_i32_123 = arith.constant 48 : i32
    %c0_124 = arith.constant 0 : index
    %c0_125 = arith.constant 0 : index
    %111 = vector.load %arg15[%c0_124, %c0_125] : memref<48x64xf32, #tpu.memory_space<vmem>>, vector<48x64xf32>
    %c0_126 = arith.constant 0 : index
    %c0_127 = arith.constant 0 : index
    %112 = vector.load %arg16[%c0_126, %c0_127] : memref<48x64xf32, #tpu.memory_space<vmem>>, vector<48x64xf32>
    %113 = tpu.concatenate %111, %112, %9 in 1 : vector<48x64xf32>, vector<48x64xf32>, vector<48x4xf32> -> vector<48x132xf32>
    %c2 = arith.constant 2 : index
    %c0_128 = arith.constant 0 : index
    %c0_129 = arith.constant 0 : index
    %114 = vector.load %arg6[%c2, %c0_128, %c0_129] : memref<4x132x64xf32, #tpu.memory_space<vmem>>, vector<1x132x64xf32>
    %115 = vector.shape_cast %114 : vector<1x132x64xf32> to vector<132x64xf32>
    %cst_130 = arith.constant dense<0.000000e+00> : vector<48x64xf32>
    %116 = tpu.matmul %113, %115, %cst_130 {dimension_numbers = #tpu.dot_dimension_numbers<[1], [0], [0], [1], [0, 0, 1, 1], [], []>} : vector<48x132xf32>, vector<132x64xf32>, vector<48x64xf32> -> vector<48x64xf32>
    %c2_131 = arith.constant 2 : index
    %c0_132 = arith.constant 0 : index
    %c0_133 = arith.constant 0 : index
    %117 = vector.load %arg7[%c2_131, %c0_132, %c0_133] : memref<4x1x64xf32, #tpu.memory_space<vmem>>, vector<1x1x64xf32>
    %118 = vector.shape_cast %117 : vector<1x1x64xf32> to vector<1x64xf32>
    %119 = vector.broadcast %118 : vector<1x64xf32> to vector<48x64xf32>
    %120 = arith.addf %116, %119 : vector<48x64xf32>
    %cst_134 = arith.constant 0.000000e+00 : f32
    %121 = vector.broadcast %cst_134 : f32 to vector<48x64xf32>
    %122 = arith.maximumf %120, %121 : vector<48x64xf32>
    %c2_135 = arith.constant 2 : index
    %c0_136 = arith.constant 0 : index
    %c0_137 = arith.constant 0 : index
    %123 = vector.load %arg8[%c2_135, %c0_136, %c0_137] : memref<4x64x64xf32, #tpu.memory_space<vmem>>, vector<1x64x64xf32>
    %124 = vector.shape_cast %123 : vector<1x64x64xf32> to vector<64x64xf32>
    %cst_138 = arith.constant dense<0.000000e+00> : vector<48x64xf32>
    %125 = tpu.matmul %122, %124, %cst_138 {dimension_numbers = #tpu.dot_dimension_numbers<[1], [0], [0], [1], [0, 0, 1, 1], [], []>} : vector<48x64xf32>, vector<64x64xf32>, vector<48x64xf32> -> vector<48x64xf32>
    %c2_139 = arith.constant 2 : index
    %c0_140 = arith.constant 0 : index
    %c0_141 = arith.constant 0 : index
    %126 = vector.load %arg9[%c2_139, %c0_140, %c0_141] : memref<4x1x64xf32, #tpu.memory_space<vmem>>, vector<1x1x64xf32>
    %127 = vector.shape_cast %126 : vector<1x1x64xf32> to vector<1x64xf32>
    %128 = vector.broadcast %127 : vector<1x64xf32> to vector<48x64xf32>
    %129 = arith.addf %125, %128 : vector<48x64xf32>
    %cst_142 = arith.constant 0.000000e+00 : f32
    %130 = vector.broadcast %cst_142 : f32 to vector<48x64xf32>
    %131 = arith.maximumf %129, %130 : vector<48x64xf32>
    %c0_143 = arith.constant 0 : index
    %c0_144 = arith.constant 0 : index
    %132 = vector.load %arg17[%c0_143, %c0_144] : memref<48x64xf32, #tpu.memory_space<vmem>>, vector<48x64xf32>
    tpu.vector_store %arg17[%c0_143, %c0_144], %131 {strides = array<i32>} : memref<48x64xf32, #tpu.memory_space<vmem>>, vector<48x64xf32>,
    %cst_145 = arith.constant 0.000000e+00 : f32
    %133 = vector.broadcast %cst_145 : f32 to vector<16x64xf32>
    %c0_146 = arith.constant 0 : index
    %c0_147 = arith.constant 0 : index
    %134 = vector.load %arg18[%c0_146, %c0_147] : memref<16x64xf32, #tpu.memory_space<vmem>>, vector<16x64xf32>
    tpu.vector_store %arg18[%c0_146, %c0_147], %133 {strides = array<i32>} : memref<16x64xf32, #tpu.memory_space<vmem>>, vector<16x64xf32>,
    %c0_i32_148 = arith.constant 0 : i32
    %c48_i32_149 = arith.constant 48 : i32
    %135 = arith.addi %c0_i32_148, %c48_i32_149 : i32
    %c1_i32_150 = arith.constant 1 : i32
    scf.for %arg19 = %c0_i32_148 to %135 step %c1_i32_150  : i32 {
      %210 = arith.index_cast %arg19 : i32 to index
      %211 = memref.load %arg1[%210] : memref<48xi32, #tpu.memory_space<smem>>
      %212 = arith.index_cast %211 : i32 to index
      %c0_232 = arith.constant 0 : index
      %213 = vector.load %arg18[%212, %c0_232] : memref<16x64xf32, #tpu.memory_space<vmem>>, vector<1x64xf32>
      %214 = arith.index_cast %arg19 : i32 to index
      %c0_233 = arith.constant 0 : index
      %215 = vector.load %arg17[%214, %c0_233] : memref<48x64xf32, #tpu.memory_space<vmem>>, vector<1x64xf32>
      %216 = arith.addf %213, %215 : vector<1x64xf32>
      %217 = arith.index_cast %211 : i32 to index
      %c0_234 = arith.constant 0 : index
      %218 = vector.load %arg18[%217, %c0_234] : memref<16x64xf32, #tpu.memory_space<vmem>>, vector<1x64xf32>
      tpu.vector_store %arg18[%217, %c0_234], %216 {strides = array<i32>} : memref<16x64xf32, #tpu.memory_space<vmem>>, vector<1x64xf32>,
    }
    %c48_i32_151 = arith.constant 48 : i32
    %c0_152 = arith.constant 0 : index
    %c0_153 = arith.constant 0 : index
    %136 = vector.load %arg14[%c0_152, %c0_153] : memref<16x64xf32, #tpu.memory_space<vmem>>, vector<16x64xf32>
    %c0_154 = arith.constant 0 : index
    %c0_155 = arith.constant 0 : index
    %137 = vector.load %arg18[%c0_154, %c0_155] : memref<16x64xf32, #tpu.memory_space<vmem>>, vector<16x64xf32>
    %138 = tpu.concatenate %136, %137 in 1 : vector<16x64xf32>, vector<16x64xf32> -> vector<16x128xf32>
    %c2_156 = arith.constant 2 : index
    %c0_157 = arith.constant 0 : index
    %c0_158 = arith.constant 0 : index
    %139 = vector.load %arg10[%c2_156, %c0_157, %c0_158] : memref<4x128x64xf32, #tpu.memory_space<vmem>>, vector<1x128x64xf32>
    %140 = vector.shape_cast %139 : vector<1x128x64xf32> to vector<128x64xf32>
    %cst_159 = arith.constant dense<0.000000e+00> : vector<16x64xf32>
    %141 = tpu.matmul %138, %140, %cst_159 {dimension_numbers = #tpu.dot_dimension_numbers<[1], [0], [0], [1], [0, 0, 1, 1], [], []>} : vector<16x128xf32>, vector<128x64xf32>, vector<16x64xf32> -> vector<16x64xf32>
    %c2_160 = arith.constant 2 : index
    %c0_161 = arith.constant 0 : index
    %c0_162 = arith.constant 0 : index
    %142 = vector.load %arg11[%c2_160, %c0_161, %c0_162] : memref<4x1x64xf32, #tpu.memory_space<vmem>>, vector<1x1x64xf32>
    %143 = vector.shape_cast %142 : vector<1x1x64xf32> to vector<1x64xf32>
    %144 = vector.broadcast %143 : vector<1x64xf32> to vector<16x64xf32>
    %145 = arith.addf %141, %144 : vector<16x64xf32>
    %cst_163 = arith.constant 0.000000e+00 : f32
    %146 = vector.broadcast %cst_163 : f32 to vector<16x64xf32>
    %147 = arith.maximumf %145, %146 : vector<16x64xf32>
    %c2_164 = arith.constant 2 : index
    %c0_165 = arith.constant 0 : index
    %c0_166 = arith.constant 0 : index
    %148 = vector.load %arg12[%c2_164, %c0_165, %c0_166] : memref<4x64x64xf32, #tpu.memory_space<vmem>>, vector<1x64x64xf32>
    %149 = vector.shape_cast %148 : vector<1x64x64xf32> to vector<64x64xf32>
    %cst_167 = arith.constant dense<0.000000e+00> : vector<16x64xf32>
    %150 = tpu.matmul %147, %149, %cst_167 {dimension_numbers = #tpu.dot_dimension_numbers<[1], [0], [0], [1], [0, 0, 1, 1], [], []>} : vector<16x64xf32>, vector<64x64xf32>, vector<16x64xf32> -> vector<16x64xf32>
    %c2_168 = arith.constant 2 : index
    %c0_169 = arith.constant 0 : index
    %c0_170 = arith.constant 0 : index
    %151 = vector.load %arg13[%c2_168, %c0_169, %c0_170] : memref<4x1x64xf32, #tpu.memory_space<vmem>>, vector<1x1x64xf32>
    %152 = vector.shape_cast %151 : vector<1x1x64xf32> to vector<1x64xf32>
    %153 = vector.broadcast %152 : vector<1x64xf32> to vector<16x64xf32>
    %154 = arith.addf %150, %153 : vector<16x64xf32>
    %cst_171 = arith.constant 0.000000e+00 : f32
    %155 = vector.broadcast %cst_171 : f32 to vector<16x64xf32>
    %156 = arith.maximumf %154, %155 : vector<16x64xf32>
    %c0_172 = arith.constant 0 : index
    %c0_173 = arith.constant 0 : index
    %157 = vector.load %arg14[%c0_172, %c0_173] : memref<16x64xf32, #tpu.memory_space<vmem>>, vector<16x64xf32>
    %158 = arith.addf %157, %156 : vector<16x64xf32>
    %c0_174 = arith.constant 0 : index
    %c0_175 = arith.constant 0 : index
    %159 = vector.load %arg14[%c0_174, %c0_175] : memref<16x64xf32, #tpu.memory_space<vmem>>, vector<16x64xf32>
    tpu.vector_store %arg14[%c0_174, %c0_175], %158 {strides = array<i32>} : memref<16x64xf32, #tpu.memory_space<vmem>>, vector<16x64xf32>,
    %c0_i32_176 = arith.constant 0 : i32
    %c48_i32_177 = arith.constant 48 : i32
    %160 = arith.addi %c0_i32_176, %c48_i32_177 : i32
    %c1_i32_178 = arith.constant 1 : i32
    scf.for %arg19 = %c0_i32_176 to %160 step %c1_i32_178  : i32 {
      %210 = arith.index_cast %arg19 : i32 to index
      %211 = memref.load %arg1[%210] : memref<48xi32, #tpu.memory_space<smem>>
      %212 = arith.index_cast %arg19 : i32 to index
      %213 = memref.load %arg0[%212] : memref<48xi32, #tpu.memory_space<smem>>
      %214 = arith.index_cast %211 : i32 to index
      %c0_232 = arith.constant 0 : index
      %215 = vector.load %arg14[%214, %c0_232] : memref<16x64xf32, #tpu.memory_space<vmem>>, vector<1x64xf32>
      %216 = arith.index_cast %arg19 : i32 to index
      %c0_233 = arith.constant 0 : index
      %217 = vector.load %arg15[%216, %c0_233] : memref<48x64xf32, #tpu.memory_space<vmem>>, vector<1x64xf32>
      tpu.vector_store %arg15[%216, %c0_233], %215 {strides = array<i32>} : memref<48x64xf32, #tpu.memory_space<vmem>>, vector<1x64xf32>,
      %218 = arith.index_cast %213 : i32 to index
      %c0_234 = arith.constant 0 : index
      %219 = vector.load %arg14[%218, %c0_234] : memref<16x64xf32, #tpu.memory_space<vmem>>, vector<1x64xf32>
      %220 = arith.index_cast %arg19 : i32 to index
      %c0_235 = arith.constant 0 : index
      %221 = vector.load %arg16[%220, %c0_235] : memref<48x64xf32, #tpu.memory_space<vmem>>, vector<1x64xf32>
      tpu.vector_store %arg16[%220, %c0_235], %219 {strides = array<i32>} : memref<48x64xf32, #tpu.memory_space<vmem>>, vector<1x64xf32>,
    }
    %c48_i32_179 = arith.constant 48 : i32
    %c0_180 = arith.constant 0 : index
    %c0_181 = arith.constant 0 : index
    %161 = vector.load %arg15[%c0_180, %c0_181] : memref<48x64xf32, #tpu.memory_space<vmem>>, vector<48x64xf32>
    %c0_182 = arith.constant 0 : index
    %c0_183 = arith.constant 0 : index
    %162 = vector.load %arg16[%c0_182, %c0_183] : memref<48x64xf32, #tpu.memory_space<vmem>>, vector<48x64xf32>
    %163 = tpu.concatenate %161, %162, %9 in 1 : vector<48x64xf32>, vector<48x64xf32>, vector<48x4xf32> -> vector<48x132xf32>
    %c3 = arith.constant 3 : index
    %c0_184 = arith.constant 0 : index
    %c0_185 = arith.constant 0 : index
    %164 = vector.load %arg6[%c3, %c0_184, %c0_185] : memref<4x132x64xf32, #tpu.memory_space<vmem>>, vector<1x132x64xf32>
    %165 = vector.shape_cast %164 : vector<1x132x64xf32> to vector<132x64xf32>
    %cst_186 = arith.constant dense<0.000000e+00> : vector<48x64xf32>
    %166 = tpu.matmul %163, %165, %cst_186 {dimension_numbers = #tpu.dot_dimension_numbers<[1], [0], [0], [1], [0, 0, 1, 1], [], []>} : vector<48x132xf32>, vector<132x64xf32>, vector<48x64xf32> -> vector<48x64xf32>
    %c3_187 = arith.constant 3 : index
    %c0_188 = arith.constant 0 : index
    %c0_189 = arith.constant 0 : index
    %167 = vector.load %arg7[%c3_187, %c0_188, %c0_189] : memref<4x1x64xf32, #tpu.memory_space<vmem>>, vector<1x1x64xf32>
    %168 = vector.shape_cast %167 : vector<1x1x64xf32> to vector<1x64xf32>
    %169 = vector.broadcast %168 : vector<1x64xf32> to vector<48x64xf32>
    %170 = arith.addf %166, %169 : vector<48x64xf32>
    %cst_190 = arith.constant 0.000000e+00 : f32
    %171 = vector.broadcast %cst_190 : f32 to vector<48x64xf32>
    %172 = arith.maximumf %170, %171 : vector<48x64xf32>
    %c3_191 = arith.constant 3 : index
    %c0_192 = arith.constant 0 : index
    %c0_193 = arith.constant 0 : index
    %173 = vector.load %arg8[%c3_191, %c0_192, %c0_193] : memref<4x64x64xf32, #tpu.memory_space<vmem>>, vector<1x64x64xf32>
    %174 = vector.shape_cast %173 : vector<1x64x64xf32> to vector<64x64xf32>
    %cst_194 = arith.constant dense<0.000000e+00> : vector<48x64xf32>
    %175 = tpu.matmul %172, %174, %cst_194 {dimension_numbers = #tpu.dot_dimension_numbers<[1], [0], [0], [1], [0, 0, 1, 1], [], []>} : vector<48x64xf32>, vector<64x64xf32>, vector<48x64xf32> -> vector<48x64xf32>
    %c3_195 = arith.constant 3 : index
    %c0_196 = arith.constant 0 : index
    %c0_197 = arith.constant 0 : index
    %176 = vector.load %arg9[%c3_195, %c0_196, %c0_197] : memref<4x1x64xf32, #tpu.memory_space<vmem>>, vector<1x1x64xf32>
    %177 = vector.shape_cast %176 : vector<1x1x64xf32> to vector<1x64xf32>
    %178 = vector.broadcast %177 : vector<1x64xf32> to vector<48x64xf32>
    %179 = arith.addf %175, %178 : vector<48x64xf32>
    %cst_198 = arith.constant 0.000000e+00 : f32
    %180 = vector.broadcast %cst_198 : f32 to vector<48x64xf32>
    %181 = arith.maximumf %179, %180 : vector<48x64xf32>
    %c0_199 = arith.constant 0 : index
    %c0_200 = arith.constant 0 : index
    %182 = vector.load %arg17[%c0_199, %c0_200] : memref<48x64xf32, #tpu.memory_space<vmem>>, vector<48x64xf32>
    tpu.vector_store %arg17[%c0_199, %c0_200], %181 {strides = array<i32>} : memref<48x64xf32, #tpu.memory_space<vmem>>, vector<48x64xf32>,
    %cst_201 = arith.constant 0.000000e+00 : f32
    %183 = vector.broadcast %cst_201 : f32 to vector<16x64xf32>
    %c0_202 = arith.constant 0 : index
    %c0_203 = arith.constant 0 : index
    %184 = vector.load %arg18[%c0_202, %c0_203] : memref<16x64xf32, #tpu.memory_space<vmem>>, vector<16x64xf32>
    tpu.vector_store %arg18[%c0_202, %c0_203], %183 {strides = array<i32>} : memref<16x64xf32, #tpu.memory_space<vmem>>, vector<16x64xf32>,
    %c0_i32_204 = arith.constant 0 : i32
    %c48_i32_205 = arith.constant 48 : i32
    %185 = arith.addi %c0_i32_204, %c48_i32_205 : i32
    %c1_i32_206 = arith.constant 1 : i32
    scf.for %arg19 = %c0_i32_204 to %185 step %c1_i32_206  : i32 {
      %210 = arith.index_cast %arg19 : i32 to index
      %211 = memref.load %arg1[%210] : memref<48xi32, #tpu.memory_space<smem>>
      %212 = arith.index_cast %211 : i32 to index
      %c0_232 = arith.constant 0 : index
      %213 = vector.load %arg18[%212, %c0_232] : memref<16x64xf32, #tpu.memory_space<vmem>>, vector<1x64xf32>
      %214 = arith.index_cast %arg19 : i32 to index
      %c0_233 = arith.constant 0 : index
      %215 = vector.load %arg17[%214, %c0_233] : memref<48x64xf32, #tpu.memory_space<vmem>>, vector<1x64xf32>
      %216 = arith.addf %213, %215 : vector<1x64xf32>
      %217 = arith.index_cast %211 : i32 to index
      %c0_234 = arith.constant 0 : index
      %218 = vector.load %arg18[%217, %c0_234] : memref<16x64xf32, #tpu.memory_space<vmem>>, vector<1x64xf32>
      tpu.vector_store %arg18[%217, %c0_234], %216 {strides = array<i32>} : memref<16x64xf32, #tpu.memory_space<vmem>>, vector<1x64xf32>,
    }
    %c48_i32_207 = arith.constant 48 : i32
    %c0_208 = arith.constant 0 : index
    %c0_209 = arith.constant 0 : index
    %186 = vector.load %arg14[%c0_208, %c0_209] : memref<16x64xf32, #tpu.memory_space<vmem>>, vector<16x64xf32>
    %c0_210 = arith.constant 0 : index
    %c0_211 = arith.constant 0 : index
    %187 = vector.load %arg18[%c0_210, %c0_211] : memref<16x64xf32, #tpu.memory_space<vmem>>, vector<16x64xf32>
    %188 = tpu.concatenate %186, %187 in 1 : vector<16x64xf32>, vector<16x64xf32> -> vector<16x128xf32>
    %c3_212 = arith.constant 3 : index
    %c0_213 = arith.constant 0 : index
    %c0_214 = arith.constant 0 : index
    %189 = vector.load %arg10[%c3_212, %c0_213, %c0_214] : memref<4x128x64xf32, #tpu.memory_space<vmem>>, vector<1x128x64xf32>
    %190 = vector.shape_cast %189 : vector<1x128x64xf32> to vector<128x64xf32>
    %cst_215 = arith.constant dense<0.000000e+00> : vector<16x64xf32>
    %191 = tpu.matmul %188, %190, %cst_215 {dimension_numbers = #tpu.dot_dimension_numbers<[1], [0], [0], [1], [0, 0, 1, 1], [], []>} : vector<16x128xf32>, vector<128x64xf32>, vector<16x64xf32> -> vector<16x64xf32>
    %c3_216 = arith.constant 3 : index
    %c0_217 = arith.constant 0 : index
    %c0_218 = arith.constant 0 : index
    %192 = vector.load %arg11[%c3_216, %c0_217, %c0_218] : memref<4x1x64xf32, #tpu.memory_space<vmem>>, vector<1x1x64xf32>
    %193 = vector.shape_cast %192 : vector<1x1x64xf32> to vector<1x64xf32>
    %194 = vector.broadcast %193 : vector<1x64xf32> to vector<16x64xf32>
    %195 = arith.addf %191, %194 : vector<16x64xf32>
    %cst_219 = arith.constant 0.000000e+00 : f32
    %196 = vector.broadcast %cst_219 : f32 to vector<16x64xf32>
    %197 = arith.maximumf %195, %196 : vector<16x64xf32>
    %c3_220 = arith.constant 3 : index
    %c0_221 = arith.constant 0 : index
    %c0_222 = arith.constant 0 : index
    %198 = vector.load %arg12[%c3_220, %c0_221, %c0_222] : memref<4x64x64xf32, #tpu.memory_space<vmem>>, vector<1x64x64xf32>
    %199 = vector.shape_cast %198 : vector<1x64x64xf32> to vector<64x64xf32>
    %cst_223 = arith.constant dense<0.000000e+00> : vector<16x64xf32>
    %200 = tpu.matmul %197, %199, %cst_223 {dimension_numbers = #tpu.dot_dimension_numbers<[1], [0], [0], [1], [0, 0, 1, 1], [], []>} : vector<16x64xf32>, vector<64x64xf32>, vector<16x64xf32> -> vector<16x64xf32>
    %c3_224 = arith.constant 3 : index
    %c0_225 = arith.constant 0 : index
    %c0_226 = arith.constant 0 : index
    %201 = vector.load %arg13[%c3_224, %c0_225, %c0_226] : memref<4x1x64xf32, #tpu.memory_space<vmem>>, vector<1x1x64xf32>
    %202 = vector.shape_cast %201 : vector<1x1x64xf32> to vector<1x64xf32>
    %203 = vector.broadcast %202 : vector<1x64xf32> to vector<16x64xf32>
    %204 = arith.addf %200, %203 : vector<16x64xf32>
    %cst_227 = arith.constant 0.000000e+00 : f32
    %205 = vector.broadcast %cst_227 : f32 to vector<16x64xf32>
    %206 = arith.maximumf %204, %205 : vector<16x64xf32>
    %c0_228 = arith.constant 0 : index
    %c0_229 = arith.constant 0 : index
    %207 = vector.load %arg14[%c0_228, %c0_229] : memref<16x64xf32, #tpu.memory_space<vmem>>, vector<16x64xf32>
    %208 = arith.addf %207, %206 : vector<16x64xf32>
    %c0_230 = arith.constant 0 : index
    %c0_231 = arith.constant 0 : index
    %209 = vector.load %arg14[%c0_230, %c0_231] : memref<16x64xf32, #tpu.memory_space<vmem>>, vector<16x64xf32>
    tpu.vector_store %arg14[%c0_230, %c0_231], %208 {strides = array<i32>} : memref<16x64xf32, #tpu.memory_space<vmem>>, vector<16x64xf32>,
    return
  }
}

</mosaic_0001>

<llo_original>
// kernel: rmpnn_forward.1
$region0: #{rmpnn_forward.1}
  #allocation0 [shape = 'u32[]', space=smem, size = 0x4, offset = 0x4, fixed_abs, tag = 'smem constant byte address 0x4 - core index']
  #allocation1 [shape = 'u32[144,128]{1,0:T(1,128)}', space=vmem, size = 0x12000, scoped, tag = 'internal scratch']
  #allocation2 [shape = 'f32[48,64]{1,0:T(8,128)}', space=vmem, size = 0x6000, scoped, tag = 'scratch operand']
  #allocation3 [shape = 'f32[48,64]{1,0:T(8,128)}', space=vmem, size = 0x6000, scoped, tag = 'scratch operand']
  #allocation4 [shape = 'f32[48,64]{1,0:T(8,128)}', space=vmem, size = 0x6000, scoped, tag = 'scratch operand']
  #allocation5 [shape = 'f32[16,64]{1,0:T(8,128)}', space=vmem, size = 0x2000, scoped, tag = 'scratch operand']
  %s0 = inlined_call_operand.vmem [shape: s32[48], index: 0, kind: input, shape index: {}]
  %s1 = inlined_call_operand.vmem [shape: s32[48], index: 1, kind: input, shape index: {}]
  %s2 = inlined_call_operand.vmem [shape: f32[16,75], index: 2, kind: input, shape index: {}]
  %s3 = inlined_call_operand.vmem [shape: f32[48,4], index: 3, kind: input, shape index: {}]
  %s4 = inlined_call_operand.vmem [shape: f32[75,64], index: 4, kind: input, shape index: {}]
  %s5 = inlined_call_operand.vmem [shape: f32[1,64], index: 5, kind: input, shape index: {}]
  %s6 = inlined_call_operand.vmem [shape: f32[4,132,64], index: 6, kind: input, shape index: {}]
  %s7 = inlined_call_operand.vmem [shape: f32[4,1,64], index: 7, kind: input, shape index: {}]
  %s8 = inlined_call_operand.vmem [shape: f32[4,64,64], index: 8, kind: input, shape index: {}]
  %s9 = inlined_call_operand.vmem [shape: f32[4,1,64], index: 9, kind: input, shape index: {}]
  %s10 = inlined_call_operand.vmem [shape: f32[4,128,64], index: 10, kind: input, shape index: {}]
  %s11 = inlined_call_operand.vmem [shape: f32[4,1,64], index: 11, kind: input, shape index: {}]
  %s12 = inlined_call_operand.vmem [shape: f32[4,64,64], index: 12, kind: input, shape index: {}]
  %s13 = inlined_call_operand.vmem [shape: f32[4,1,64], index: 13, kind: input, shape index: {}]
  %s14 = inlined_call_operand.vmem [shape: f32[16,64], index: 14, kind: output, shape index: {}]
  %s15 = sld [smem:[#allocation0]]
  $region130: #{rmpnn_forward.1} parent=0
    _
  %s17 = ssub.s32 1, %s15
  %s18 = scalar_select 0, %s17, %s15
  $region1: #{rmpnn_forward.1} parent=0
    #allocation6 [shape = 'u8[512]{0}', space=smem, size = 0x200, scoped, tag = 'input window, operand 0, single buffered']
    #allocation7 [shape = 's32[1]{0}', space=sflag, size = 0x4, scoped, tag = 'scoped memory for rmpnn_forward.1']
    #allocation8 [shape = 'u8[512]{0}', space=smem, size = 0x200, scoped, tag = 'input window, operand 1, single buffered']
    #allocation9 [shape = 's32[1]{0}', space=sflag, size = 0x4, scoped, tag = 'scoped memory for rmpnn_forward.1']
    %19 = vsyncpa [#allocation7], 0
    %20 = vsyncpa [#allocation9], 0
    // Predicated region
    $region2: #{rmpnn_forward.1} parent=1 // pred_check
      _
    $region3: #{rmpnn_forward.1} parent=1 // pred_check_branch
      %22 = sbr.rel (0) target = $region5
    $region4: #{rmpnn_forward.1} parent=1 // pred_region
      %s24 = ssub.s32 16, 16
      %25 = vsyncadd [#allocation7], %s24
      %s27 = sshll.u32 %s0, 4
      %s28 = int_to_ptr.vmem [resolvable:$true] %s27
      %30 = dma.vmem_to_smem %s28, 16, [#allocation6], [#allocation7]
    $region5: #{rmpnn_forward.1} parent=1 // pred_fallthru
      _
    // Predicated region
    $region6: #{rmpnn_forward.1} parent=1 // pred_check
      _
    $region7: #{rmpnn_forward.1} parent=1 // pred_check_branch
      %32 = sbr.rel (0) target = $region9
    $region8: #{rmpnn_forward.1} parent=1 // pred_region
      %s34 = ssub.s32 16, 16
      %35 = vsyncadd [#allocation9], %s34
      %s37 = sshll.u32 %s1, 4
      %s38 = int_to_ptr.vmem [resolvable:$true] %s37
      %40 = dma.vmem_to_smem %s38, 16, [#allocation8], [#allocation9]
    $region9: #{rmpnn_forward.1} parent=1 // pred_fallthru
      _
    // Predicated region
    $region10: #{rmpnn_forward.1} parent=1 // pred_check
      _
    $region11: #{rmpnn_forward.1} parent=1 // pred_check_branch
      %42 = sbr.rel (0) target = $region13
    $region12: #{rmpnn_forward.1} parent=1 // pred_region
      _
    $region13: #{rmpnn_forward.1} parent=1 // pred_fallthru
      _
    // Predicated region
    $region14: #{rmpnn_forward.1} parent=1 // pred_check
      _
    $region15: #{rmpnn_forward.1} parent=1 // pred_check_branch
      %44 = sbr.rel (0) target = $region17
    $region16: #{rmpnn_forward.1} parent=1 // pred_region
      _
    $region17: #{rmpnn_forward.1} parent=1 // pred_fallthru
      _
    // Predicated region
    $region18: #{rmpnn_forward.1} parent=1 // pred_check
      _
    $region19: #{rmpnn_forward.1} parent=1 // pred_check_branch
      %46 = sbr.rel (0) target = $region21
    $region20: #{rmpnn_forward.1} parent=1 // pred_region
      _
    $region21: #{rmpnn_forward.1} parent=1 // pred_fallthru
      _
    // Predicated region
    $region22: #{rmpnn_forward.1} parent=1 // pred_check
      _
    $region23: #{rmpnn_forward.1} parent=1 // pred_check_branch
      %48 = sbr.rel (0) target = $region25
    $region24: #{rmpnn_forward.1} parent=1 // pred_region
      _
    $region25: #{rmpnn_forward.1} parent=1 // pred_fallthru
      _
    // Predicated region
    $region26: #{rmpnn_forward.1} parent=1 // pred_check
      _
    $region27: #{rmpnn_forward.1} parent=1 // pred_check_branch
      %50 = sbr.rel (0) target = $region29
    $region28: #{rmpnn_forward.1} parent=1 // pred_region
      _
    $region29: #{rmpnn_forward.1} parent=1 // pred_fallthru
      _
    // Predicated region
    $region30: #{rmpnn_forward.1} parent=1 // pred_check
      _
    $region31: #{rmpnn_forward.1} parent=1 // pred_check_branch
      %52 = sbr.rel (0) target = $region33
    $region32: #{rmpnn_forward.1} parent=1 // pred_region
      _
    $region33: #{rmpnn_forward.1} parent=1 // pred_fallthru
      _
    // Predicated region
    $region34: #{rmpnn_forward.1} parent=1 // pred_check
      _
    $region35: #{rmpnn_forward.1} parent=1 // pred_check_branch
      %54 = sbr.rel (0) target = $region37
    $region36: #{rmpnn_forward.1} parent=1 // pred_region
      _
    $region37: #{rmpnn_forward.1} parent=1 // pred_fallthru
      _
    // Predicated region
    $region38: #{rmpnn_forward.1} parent=1 // pred_check
      _
    $region39: #{rmpnn_forward.1} parent=1 // pred_check_branch
      %56 = sbr.rel (0) target = $region41
    $region40: #{rmpnn_forward.1} parent=1 // pred_region
      _
    $region41: #{rmpnn_forward.1} parent=1 // pred_fallthru
      _
    // Predicated region
    $region42: #{rmpnn_forward.1} parent=1 // pred_check
      _
    $region43: #{rmpnn_forward.1} parent=1 // pred_check_branch
      %58 = sbr.rel (0) target = $region45
    $region44: #{rmpnn_forward.1} parent=1 // pred_region
      _
    $region45: #{rmpnn_forward.1} parent=1 // pred_fallthru
      _
    // Predicated region
    $region46: #{rmpnn_forward.1} parent=1 // pred_check
      _
    $region47: #{rmpnn_forward.1} parent=1 // pred_check_branch
      %60 = sbr.rel (0) target = $region49
    $region48: #{rmpnn_forward.1} parent=1 // pred_region
      _
    $region49: #{rmpnn_forward.1} parent=1 // pred_fallthru
      _
    // Predicated region
    $region50: #{rmpnn_forward.1} parent=1 // pred_check
      _
    $region51: #{rmpnn_forward.1} parent=1 // pred_check_branch
      %62 = sbr.rel (0) target = $region53
    $region52: #{rmpnn_forward.1} parent=1 // pred_region
      _
    $region53: #{rmpnn_forward.1} parent=1 // pred_fallthru
      _
    // Predicated region
    $region54: #{rmpnn_forward.1} parent=1 // pred_check
      _
    $region55: #{rmpnn_forward.1} parent=1 // pred_check_branch
      %64 = sbr.rel (0) target = $region57
    $region56: #{rmpnn_forward.1} parent=1 // pred_region
      _
    $region57: #{rmpnn_forward.1} parent=1 // pred_fallthru
      _
    // Predicated region
    $region58: #{rmpnn_forward.1} parent=1 // pred_check
      _
    $region59: #{rmpnn_forward.1} parent=1 // pred_check_branch
      %66 = sbr.rel (0) target = $region61
    $region60: #{rmpnn_forward.1} parent=1 // pred_region
      %67 = dma.done [#allocation7], 16
    $region61: #{rmpnn_forward.1} parent=1 // pred_fallthru
      _
    // Predicated region
    $region62: #{rmpnn_forward.1} parent=1 // pred_check
      _
    $region63: #{rmpnn_forward.1} parent=1 // pred_check_branch
      %69 = sbr.rel (0) target = $region65
    $region64: #{rmpnn_forward.1} parent=1 // pred_region
      %70 = dma.done [#allocation9], 16
    $region65: #{rmpnn_forward.1} parent=1 // pred_fallthru
      _
    %71 = sfence
    %v72 = vld [vmem:[%s2] sm:$0xff]
    %v73 = vld [vmem:[%s2 + $0x8] sm:$0xff]
    %v74 = vld [vmem:[%s4] sm:$0xff]
    %v75 = vld [vmem:[%s4 + $0x8] sm:$0xff]
    %v76 = vld [vmem:[%s4 + $0x10] sm:$0xff]
    %v77 = vld [vmem:[%s4 + $0x18] sm:$0xff]
    %v78 = vld [vmem:[%s4 + $0x20] sm:$0xff]
    %v79 = vld [vmem:[%s4 + $0x28] sm:$0xff]
    %v80 = vld [vmem:[%s4 + $0x30] sm:$0xff]
    %v81 = vld [vmem:[%s4 + $0x38] sm:$0xff]
    %v82 = vld [vmem:[%s4 + $0x40] sm:$0xff]
    %v83 = vld [vmem:[%s4 + $0x48] sm:$0x7]
    %v84 = vld [vmem:[%s5] sm:$0x1]
    %v86 = vlaneseq
    %v87 = vshrl.u32 %v86, 7
    %v88 = vsub.s32 0, %v87
    %v89 = vrot.slane %v84, %v88
    %vm91 = vcmask 613376
    %v93 = vsel %vm91, %v72, 0
    %v96 = vsel %vm91, %v73, 0
    %vm98 = vcmask 1042432
    %v100 = vsel %vm98, %v83, 0
    %102 = vmatprep.subr.mxu0 0.0
    %103 = vmatpush1.msra.mxu0 %v74
    %104 = vmatprep.subr.mxu0 0.0
    %105 = vmatpush1.msra.mxu0 %v75
    %106 = vmatprep.subr.mxu0 0.0
    %107 = vmatpush1.msra.mxu0 %v76
    %108 = vmatprep.subr.mxu0 0.0
    %109 = vmatpush1.msra.mxu0 %v77
    %110 = vmatprep.subr.mxu0 0.0
    %111 = vmatpush1.msra.mxu0 %v78
    %112 = vmatprep.subr.mxu0 0.0
    %113 = vmatpush1.msra.mxu0 %v79
    %114 = vmatprep.subr.mxu0 0.0
    %115 = vmatpush1.msra.mxu0 %v80
    %116 = vmatprep.subr.mxu0 0.0
    %117 = vmatpush1.msra.mxu0 %v81
    %118 = vmatprep.subr.mxu0 0.0
    %119 = vmatpush1.msra.mxu0 %v82
    %120 = vmatprep.subr.mxu0 0.0
    %121 = vmatpush1.msra.mxu0 %v100
    %122 = vmatprep.subr.mxu0 0.0
    %123 = vmatpush1.msra.mxu0 0.0
    %124 = vmatprep.subr.mxu0 0.0
    %125 = vmatpush1.msra.mxu0 0.0
    %126 = vmatprep.subr.mxu0 0.0
    %127 = vmatpush1.msra.mxu0 0.0
    %128 = vmatprep.subr.mxu0 0.0
    %129 = vmatpush1.msra.mxu0 0.0
    %130 = vmatprep.subr.mxu0 0.0
    %131 = vmatpush1.msra.mxu0 0.0
    %132 = vmatprep.subr.mxu0 0.0
    %133 = vmatpush1.msra.mxu0 0.0
    %134 = vmatprep.subr.mxu0 0.0
    %135 = vmatpush1.msra.mxu0 0.0
    %136 = vmatprep.subr.mxu0 0.0
    %137 = vmatpush1.msra.mxu0 0.0
    %138 = vmatprep.subr.mxu0 0.0
    %139 = vmatpush1.msra.mxu0 0.0
    %140 = vmatprep.subr.mxu0 0.0
    %141 = vmatpush1.msra.mxu0 0.0
    %142 = vmatprep.subr.mxu0 0.0
    %143 = vmatpush1.msra.mxu0 0.0
    %144 = vmatprep.subr.mxu0 0.0
    %145 = vmatpush1.msra.mxu0 0.0
    %146 = vmatprep.subr.mxu0 0.0
    %147 = vmatpush1.msra.mxu0 0.0
    %148 = vmatprep.subr.mxu0 0.0
    %149 = vmatpush1.msra.mxu0 0.0
    %150 = vmatprep.subr.mxu0 0.0
    %151 = vmatpush1.msra.mxu0 0.0
    %152 = vmatprep.subr.mxu0 0.0
    %153 = vmatpush1.msra.mxu0 0.0
    %154 = vmatprep.subr.mxu0 0.0
    %155 = vmatpush1.msra.mxu0 0.0
    %156 = vmatprep.subr.mxu0 0.0
    %157 = vmatpush1.msra.mxu0 0.0
    %158 = vmatprep.subr.mxu0 0.0
    %159 = vmatpush1.msra.mxu0 0.0
    %160 = vmatprep.subr.mxu0 0.0
    %161 = vmatpush1.msra.mxu0 0.0
    %162 = vmatprep.subr.mxu0 0.0
    %163 = vmatpush1.msra.mxu0 0.0
    %164 = vmatprep.subr.mxu0 0.0
    %165 = vmatpush1.msra.mxu0 0.0
    %166 = vmatprep.mubr.f32.mxu0 0.0
    %167 = vmatmul.mubr.f32.gmra.mrb[0].mxu0 %v93
    %v168 = vpop.f32.mrb[0].mxu0
    %v169 = vadd.f32 %v89, %v168
    %v170 = vpop.f32.mrb[0].mxu0
    %171 = vmatprep.mubr.f32.mxu0 0.0
    %172 = vmatmul.mubr.f32.gmra.mrb[0].mxu0 %v96
    %v173 = vpop.f32.mrb[0].mxu0
    %v174 = vadd.f32 %v89, %v173
    %v175 = vpop.f32.mrb[0].mxu0
    %176 = vdwg.mxu0
    %v177 = vmax.f32 %v169, 0.0
    %v178 = vmax.f32 %v174, 0.0
    %vm179 = vcmask 523264
    %180 = vst.msk [vmem:[%s14] sm:$0xff] %vm179, %v177
    %181 = vst.msk [vmem:[%s14 + $0x8] sm:$0xff] %vm179, %v178
    %v182 = vld [vmem:[%s3] sm:$0xff]
    %v183 = vld [vmem:[%s3 + $0x8] sm:$0xff]
    %v184 = vld [vmem:[%s3 + $0x10] sm:$0xff]
    %v185 = vld [vmem:[%s3 + $0x18] sm:$0xff]
    %v186 = vld [vmem:[%s3 + $0x20] sm:$0xff]
    %v187 = vld [vmem:[%s3 + $0x28] sm:$0xff]
    loop: start=0, step=1, limit=48
    $region66: #{rmpnn_forward.1} parent=1 // loop_pre_header
      _
    $region67: #{rmpnn_forward.1} parent=1 // loop_header
      %s189 = sphi 0, %s193
      %p190 = scmp.ge.s32.totalorder %s189, 48
    $region68: #{rmpnn_forward.1} parent=1 // loop_header_branch
      %192 = sbr.rel (%p190) target = $region72
    $region69: #{rmpnn_forward.1} parent=1 // loop_body
      %s194 = sld [smem:[#allocation8 + %s189]]
      %s195 = sld [smem:[#allocation6 + %s189]]
      %s196 = scalar_lea.vmem %s14, %s194
      %v197 = vld [vmem:[%s196] sm:$0x1]
      %s198 = scalar_lea.vmem [#allocation2], %s189
      %vm199 = vcmask 516096
      %200 = vst.msk [vmem:[%s198] sm:$0x1] %vm199, %v197
      %s201 = scalar_lea.vmem %s14, %s195
      %v202 = vld [vmem:[%s201] sm:$0x1]
      %s203 = scalar_lea.vmem [#allocation3], %s189
      %204 = vst.msk [vmem:[%s203] sm:$0x1] %vm199, %v202
    $region70: #{rmpnn_forward.1} parent=1 // loop_footer
      %s193 = sadd.s32 1, %s189
    $region71: #{rmpnn_forward.1} parent=1 // loop_footer_branch
      %188 = sbr.rel target = $region67
    $region72: #{rmpnn_forward.1} parent=1 // loop_exit
      _
    %v205 = vld [vmem:[#allocation2] sm:$0xff]
    %v206 = vld [vmem:[#allocation2 + $0x8] sm:$0xff]
    %v207 = vld [vmem:[#allocation2 + $0x10] sm:$0xff]
    %v208 = vld [vmem:[#allocation2 + $0x18] sm:$0xff]
    %v209 = vld [vmem:[#allocation2 + $0x20] sm:$0xff]
    %v210 = vld [vmem:[#allocation2 + $0x28] sm:$0xff]
    %v211 = vld [vmem:[#allocation3] sm:$0xff]
    %v212 = vld [vmem:[#allocation3 + $0x8] sm:$0xff]
    %v213 = vld [vmem:[#allocation3 + $0x10] sm:$0xff]
    %v214 = vld [vmem:[#allocation3 + $0x18] sm:$0xff]
    %v215 = vld [vmem:[#allocation3 + $0x20] sm:$0xff]
    %v216 = vld [vmem:[#allocation3 + $0x28] sm:$0xff]
    %223 = vrot.lane.b32.xlu0 %v211, 64
    %v224 = vpop.permute.xlu0 %223
    %225 = vrot.lane.b32.xlu0 %v212, 64
    %v226 = vpop.permute.xlu0 %225
    %227 = vrot.lane.b32.xlu0 %v213, 64
    %v228 = vpop.permute.xlu0 %227
    %229 = vrot.lane.b32.xlu0 %v214, 64
    %v230 = vpop.permute.xlu0 %229
    %231 = vrot.lane.b32.xlu0 %v215, 64
    %v232 = vpop.permute.xlu0 %231
    %233 = vrot.lane.b32.xlu0 %v216, 64
    %v234 = vpop.permute.xlu0 %233
    %v241 = vsel %vm179, %v205, %v224
    %v242 = vsel %vm179, %v206, %v226
    %v243 = vsel %vm179, %v207, %v228
    %v244 = vsel %vm179, %v208, %v230
    %v245 = vsel %vm179, %v209, %v232
    %v246 = vsel %vm179, %v210, %v234
    %v247 = vld [vmem:[%s6] sm:$0xff]
    %v248 = vld [vmem:[%s6 + $0x8] sm:$0xff]
    %v249 = vld [vmem:[%s6 + $0x10] sm:$0xff]
    %v250 = vld [vmem:[%s6 + $0x18] sm:$0xff]
    %v251 = vld [vmem:[%s6 + $0x20] sm:$0xff]
    %v252 = vld [vmem:[%s6 + $0x28] sm:$0xff]
    %v253 = vld [vmem:[%s6 + $0x30] sm:$0xff]
    %v254 = vld [vmem:[%s6 + $0x38] sm:$0xff]
    %v255 = vld [vmem:[%s6 + $0x40] sm:$0xff]
    %v256 = vld [vmem:[%s6 + $0x48] sm:$0xff]
    %v257 = vld [vmem:[%s6 + $0x50] sm:$0xff]
    %v258 = vld [vmem:[%s6 + $0x58] sm:$0xff]
    %v259 = vld [vmem:[%s6 + $0x60] sm:$0xff]
    %v260 = vld [vmem:[%s6 + $0x68] sm:$0xff]
    %v261 = vld [vmem:[%s6 + $0x70] sm:$0xff]
    %v262 = vld [vmem:[%s6 + $0x78] sm:$0xff]
    %v263 = vld [vmem:[%s6 + $0x80] sm:$0xf]
    %v264 = vld [vmem:[%s7] sm:$0x1]
    %v266 = vlaneseq
    %v267 = vshrl.u32 %v266, 7
    %v268 = vsub.s32 0, %v267
    %v269 = vrot.slane %v264, %v268
    %vm271 = vcmask 31744
    %v273 = vsel %vm271, %v182, 0
    %v276 = vsel %vm271, %v183, 0
    %v279 = vsel %vm271, %v184, 0
    %v282 = vsel %vm271, %v185, 0
    %v285 = vsel %vm271, %v186, 0
    %v288 = vsel %vm271, %v187, 0
    %vm290 = vcmask 1043456
    %v292 = vsel %vm290, %v263, 0
    %294 = vmatprep.subr.mxu0 0.0
    %295 = vmatpush1.msra.mxu0 %v247
    %296 = vmatprep.subr.mxu0 0.0
    %297 = vmatpush1.msra.mxu0 %v248
    %298 = vmatprep.subr.mxu0 0.0
    %299 = vmatpush1.msra.mxu0 %v249
    %300 = vmatprep.subr.mxu0 0.0
    %301 = vmatpush1.msra.mxu0 %v250
    %302 = vmatprep.subr.mxu0 0.0
    %303 = vmatpush1.msra.mxu0 %v251
    %304 = vmatprep.subr.mxu0 0.0
    %305 = vmatpush1.msra.mxu0 %v252
    %306 = vmatprep.subr.mxu0 0.0
    %307 = vmatpush1.msra.mxu0 %v253
    %308 = vmatprep.subr.mxu0 0.0
    %309 = vmatpush1.msra.mxu0 %v254
    %310 = vmatprep.subr.mxu0 0.0
    %311 = vmatpush1.msra.mxu0 %v255
    %312 = vmatprep.subr.mxu0 0.0
    %313 = vmatpush1.msra.mxu0 %v256
    %314 = vmatprep.subr.mxu0 0.0
    %315 = vmatpush1.msra.mxu0 %v257
    %316 = vmatprep.subr.mxu0 0.0
    %317 = vmatpush1.msra.mxu0 %v258
    %318 = vmatprep.subr.mxu0 0.0
    %319 = vmatpush1.msra.mxu0 %v259
    %320 = vmatprep.subr.mxu0 0.0
    %321 = vmatpush1.msra.mxu0 %v260
    %322 = vmatprep.subr.mxu0 0.0
    %323 = vmatpush1.msra.mxu0 %v261
    %324 = vmatprep.subr.mxu0 0.0
    %325 = vmatpush1.msra.mxu0 %v262
    %326 = vmatprep.subr.mxu0 0.0
    %327 = vmatpush1.msra.mxu0 %v292
    %328 = vmatprep.subr.mxu0 0.0
    %329 = vmatpush1.msra.mxu0 0.0
    %330 = vmatprep.subr.mxu0 0.0
    %331 = vmatpush1.msra.mxu0 0.0
    %332 = vmatprep.subr.mxu0 0.0
    %333 = vmatpush1.msra.mxu0 0.0
    %334 = vmatprep.subr.mxu0 0.0
    %335 = vmatpush1.msra.mxu0 0.0
    %336 = vmatprep.subr.mxu0 0.0
    %337 = vmatpush1.msra.mxu0 0.0
    %338 = vmatprep.subr.mxu0 0.0
    %339 = vmatpush1.msra.mxu0 0.0
    %340 = vmatprep.subr.mxu0 0.0
    %341 = vmatpush1.msra.mxu0 0.0
    %342 = vmatprep.subr.mxu0 0.0
    %343 = vmatpush1.msra.mxu0 0.0
    %344 = vmatprep.subr.mxu0 0.0
    %345 = vmatpush1.msra.mxu0 0.0
    %346 = vmatprep.subr.mxu0 0.0
    %347 = vmatpush1.msra.mxu0 0.0
    %348 = vmatprep.subr.mxu0 0.0
    %349 = vmatpush1.msra.mxu0 0.0
    %350 = vmatprep.subr.mxu0 0.0
    %351 = vmatpush1.msra.mxu0 0.0
    %352 = vmatprep.subr.mxu0 0.0
    %353 = vmatpush1.msra.mxu0 0.0
    %354 = vmatprep.subr.mxu0 0.0
    %355 = vmatpush1.msra.mxu0 0.0
    %356 = vmatprep.subr.mxu0 0.0
    %357 = vmatpush1.msra.mxu0 0.0
    %358 = vmatprep.mubr.f32.mxu0 %v273
    %359 = vmatmul.mubr.f32.gmra.mrb[0].mxu0 %v241
    %v360 = vpop.f32.mrb[0].mxu0
    %v361 = vadd.f32 %v269, %v360
    %v362 = vpop.f32.mrb[0].mxu0
    %363 = vmatprep.mubr.f32.mxu0 %v276
    %364 = vmatmul.mubr.f32.gmra.mrb[0].mxu0 %v242
    %v365 = vpop.f32.mrb[0].mxu0
    %v366 = vadd.f32 %v269, %v365
    %v367 = vpop.f32.mrb[0].mxu0
    %368 = vmatprep.mubr.f32.mxu0 %v279
    %369 = vmatmul.mubr.f32.gmra.mrb[0].mxu0 %v243
    %v370 = vpop.f32.mrb[0].mxu0
    %v371 = vadd.f32 %v269, %v370
    %v372 = vpop.f32.mrb[0].mxu0
    %373 = vmatprep.mubr.f32.mxu0 %v282
    %374 = vmatmul.mubr.f32.gmra.mrb[0].mxu0 %v244
    %v375 = vpop.f32.mrb[0].mxu0
    %v376 = vadd.f32 %v269, %v375
    %v377 = vpop.f32.mrb[0].mxu0
    %378 = vmatprep.mubr.f32.mxu0 %v285
    %379 = vmatmul.mubr.f32.gmra.mrb[0].mxu0 %v245
    %v380 = vpop.f32.mrb[0].mxu0
    %v381 = vadd.f32 %v269, %v380
    %v382 = vpop.f32.mrb[0].mxu0
    %383 = vmatprep.mubr.f32.mxu0 %v288
    %384 = vmatmul.mubr.f32.gmra.mrb[0].mxu0 %v246
    %v385 = vpop.f32.mrb[0].mxu0
    %v386 = vadd.f32 %v269, %v385
    %v387 = vpop.f32.mrb[0].mxu0
    %388 = vdwg.mxu0
    %v389 = vmax.f32 %v361, 0.0
    %v390 = vmax.f32 %v366, 0.0
    %v391 = vmax.f32 %v371, 0.0
    %v392 = vmax.f32 %v376, 0.0
    %v393 = vmax.f32 %v381, 0.0
    %v394 = vmax.f32 %v386, 0.0
    %v395 = vld [vmem:[%s8] sm:$0xff]
    %v396 = vld [vmem:[%s8 + $0x8] sm:$0xff]
    %v397 = vld [vmem:[%s8 + $0x10] sm:$0xff]
    %v398 = vld [vmem:[%s8 + $0x18] sm:$0xff]
    %v399 = vld [vmem:[%s8 + $0x20] sm:$0xff]
    %v400 = vld [vmem:[%s8 + $0x28] sm:$0xff]
    %v401 = vld [vmem:[%s8 + $0x30] sm:$0xff]
    %v402 = vld [vmem:[%s8 + $0x38] sm:$0xff]
    %v403 = vld [vmem:[%s9] sm:$0x1]
    %v405 = vlaneseq
    %v406 = vshrl.u32 %v405, 7
    %v407 = vsub.s32 0, %v406
    %v408 = vrot.slane %v403, %v407
    %v411 = vsel %vm179, %v389, 0
    %v414 = vsel %vm179, %v390, 0
    %v417 = vsel %vm179, %v391, 0
    %v420 = vsel %vm179, %v392, 0
    %v423 = vsel %vm179, %v393, 0
    %v426 = vsel %vm179, %v394, 0
    %428 = vmatprep.subr.mxu0 0.0
    %429 = vmatpush1.msra.mxu0 %v395
    %430 = vmatprep.subr.mxu0 0.0
    %431 = vmatpush1.msra.mxu0 %v396
    %432 = vmatprep.subr.mxu0 0.0
    %433 = vmatpush1.msra.mxu0 %v397
    %434 = vmatprep.subr.mxu0 0.0
    %435 = vmatpush1.msra.mxu0 %v398
    %436 = vmatprep.subr.mxu0 0.0
    %437 = vmatpush1.msra.mxu0 %v399
    %438 = vmatprep.subr.mxu0 0.0
    %439 = vmatpush1.msra.mxu0 %v400
    %440 = vmatprep.subr.mxu0 0.0
    %441 = vmatpush1.msra.mxu0 %v401
    %442 = vmatprep.subr.mxu0 0.0
    %443 = vmatpush1.msra.mxu0 %v402
    %444 = vmatprep.subr.mxu0 0.0
    %445 = vmatpush1.msra.mxu0 0.0
    %446 = vmatprep.subr.mxu0 0.0
    %447 = vmatpush1.msra.mxu0 0.0
    %448 = vmatprep.subr.mxu0 0.0
    %449 = vmatpush1.msra.mxu0 0.0
    %450 = vmatprep.subr.mxu0 0.0
    %451 = vmatpush1.msra.mxu0 0.0
    %452 = vmatprep.subr.mxu0 0.0
    %453 = vmatpush1.msra.mxu0 0.0
    %454 = vmatprep.subr.mxu0 0.0
    %455 = vmatpush1.msra.mxu0 0.0
    %456 = vmatprep.subr.mxu0 0.0
    %457 = vmatpush1.msra.mxu0 0.0
    %458 = vmatprep.subr.mxu0 0.0
    %459 = vmatpush1.msra.mxu0 0.0
    %460 = vmatprep.subr.mxu0 0.0
    %461 = vmatpush1.msra.mxu0 0.0
    %462 = vmatprep.subr.mxu0 0.0
    %463 = vmatpush1.msra.mxu0 0.0
    %464 = vmatprep.subr.mxu0 0.0
    %465 = vmatpush1.msra.mxu0 0.0
    %466 = vmatprep.subr.mxu0 0.0
    %467 = vmatpush1.msra.mxu0 0.0
    %468 = vmatprep.subr.mxu0 0.0
    %469 = vmatpush1.msra.mxu0 0.0
    %470 = vmatprep.subr.mxu0 0.0
    %471 = vmatpush1.msra.mxu0 0.0
    %472 = vmatprep.subr.mxu0 0.0
    %473 = vmatpush1.msra.mxu0 0.0
    %474 = vmatprep.subr.mxu0 0.0
    %475 = vmatpush1.msra.mxu0 0.0
    %476 = vmatprep.subr.mxu0 0.0
    %477 = vmatpush1.msra.mxu0 0.0
    %478 = vmatprep.subr.mxu0 0.0
    %479 = vmatpush1.msra.mxu0 0.0
    %480 = vmatprep.subr.mxu0 0.0
    %481 = vmatpush1.msra.mxu0 0.0
    %482 = vmatprep.subr.mxu0 0.0
    %483 = vmatpush1.msra.mxu0 0.0
    %484 = vmatprep.subr.mxu0 0.0
    %485 = vmatpush1.msra.mxu0 0.0
    %486 = vmatprep.subr.mxu0 0.0
    %487 = vmatpush1.msra.mxu0 0.0
    %488 = vmatprep.subr.mxu0 0.0
    %489 = vmatpush1.msra.mxu0 0.0
    %490 = vmatprep.subr.mxu0 0.0
    %491 = vmatpush1.msra.mxu0 0.0
    %492 = vmatprep.mubr.f32.mxu0 0.0
    %493 = vmatmul.mubr.f32.gmra.mrb[0].mxu0 %v411
    %v494 = vpop.f32.mrb[0].mxu0
    %v495 = vadd.f32 %v408, %v494
    %v496 = vpop.f32.mrb[0].mxu0
    %497 = vmatprep.mubr.f32.mxu0 0.0
    %498 = vmatmul.mubr.f32.gmra.mrb[0].mxu0 %v414
    %v499 = vpop.f32.mrb[0].mxu0
    %v500 = vadd.f32 %v408, %v499
    %v501 = vpop.f32.mrb[0].mxu0
    %502 = vmatprep.mubr.f32.mxu0 0.0
    %503 = vmatmul.mubr.f32.gmra.mrb[0].mxu0 %v417
    %v504 = vpop.f32.mrb[0].mxu0
    %v505 = vadd.f32 %v408, %v504
    %v506 = vpop.f32.mrb[0].mxu0
    %507 = vmatprep.mubr.f32.mxu0 0.0
    %508 = vmatmul.mubr.f32.gmra.mrb[0].mxu0 %v420
    %v509 = vpop.f32.mrb[0].mxu0
    %v510 = vadd.f32 %v408, %v509
    %v511 = vpop.f32.mrb[0].mxu0
    %512 = vmatprep.mubr.f32.mxu0 0.0
    %513 = vmatmul.mubr.f32.gmra.mrb[0].mxu0 %v423
    %v514 = vpop.f32.mrb[0].mxu0
    %v515 = vadd.f32 %v408, %v514
    %v516 = vpop.f32.mrb[0].mxu0
    %517 = vmatprep.mubr.f32.mxu0 0.0
    %518 = vmatmul.mubr.f32.gmra.mrb[0].mxu0 %v426
    %v519 = vpop.f32.mrb[0].mxu0
    %v520 = vadd.f32 %v408, %v519
    %v521 = vpop.f32.mrb[0].mxu0
    %522 = vdwg.mxu0
    %v523 = vmax.f32 %v495, 0.0
    %v524 = vmax.f32 %v500, 0.0
    %v525 = vmax.f32 %v505, 0.0
    %v526 = vmax.f32 %v510, 0.0
    %v527 = vmax.f32 %v515, 0.0
    %v528 = vmax.f32 %v520, 0.0
    %529 = vst.msk [vmem:[#allocation4] sm:$0xff] %vm179, %v523
    %530 = vst.msk [vmem:[#allocation4 + $0x8] sm:$0xff] %vm179, %v524
    %531 = vst.msk [vmem:[#allocation4 + $0x10] sm:$0xff] %vm179, %v525
    %532 = vst.msk [vmem:[#allocation4 + $0x18] sm:$0xff] %vm179, %v526
    %533 = vst.msk [vmem:[#allocation4 + $0x20] sm:$0xff] %vm179, %v527
    %534 = vst.msk [vmem:[#allocation4 + $0x28] sm:$0xff] %vm179, %v528
    %535 = vst.msk [vmem:[#allocation5] sm:$0xff] %vm179, 0.0
    %536 = vst.msk [vmem:[#allocation5 + $0x8] sm:$0xff] %vm179, 0.0
    loop: start=0, step=1, limit=48
    $region73: #{rmpnn_forward.1} parent=1 // loop_pre_header
      _
    $region74: #{rmpnn_forward.1} parent=1 // loop_header
      %s538 = sphi 0, %s542
      %p539 = scmp.ge.s32.totalorder %s538, 48
    $region75: #{rmpnn_forward.1} parent=1 // loop_header_branch
      %541 = sbr.rel (%p539) target = $region79
    $region76: #{rmpnn_forward.1} parent=1 // loop_body
      %s543 = sld [smem:[#allocation8 + %s538]]
      %s544 = scalar_lea.vmem [#allocation5], %s543
      %v545 = vld [vmem:[%s544] sm:$0x1]
      %s546 = scalar_lea.vmem [#allocation4], %s538
      %v547 = vld [vmem:[%s546] sm:$0x1]
      %v548 = vadd.f32 %v545, %v547
      %vm549 = vcmask 516096
      %550 = vst.msk [vmem:[%s544] sm:$0x1] %vm549, %v548
    $region77: #{rmpnn_forward.1} parent=1 // loop_footer
      %s542 = sadd.s32 1, %s538
    $region78: #{rmpnn_forward.1} parent=1 // loop_footer_branch
      %537 = sbr.rel target = $region74
    $region79: #{rmpnn_forward.1} parent=1 // loop_exit
      _
    %v551 = vld [vmem:[%s14] sm:$0xff]
    %v552 = vld [vmem:[%s14 + $0x8] sm:$0xff]
    %v553 = vld [vmem:[#allocation5] sm:$0xff]
    %v554 = vld [vmem:[#allocation5 + $0x8] sm:$0xff]
    %557 = vrot.lane.b32.xlu0 %v553, 64
    %v558 = vpop.permute.xlu0 %557
    %559 = vrot.lane.b32.xlu0 %v554, 64
    %v560 = vpop.permute.xlu0 %559
    %v563 = vsel %vm179, %v551, %v558
    %v564 = vsel %vm179, %v552, %v560
    %v565 = vld [vmem:[%s10] sm:$0xff]
    %v566 = vld [vmem:[%s10 + $0x8] sm:$0xff]
    %v567 = vld [vmem:[%s10 + $0x10] sm:$0xff]
    %v568 = vld [vmem:[%s10 + $0x18] sm:$0xff]
    %v569 = vld [vmem:[%s10 + $0x20] sm:$0xff]
    %v570 = vld [vmem:[%s10 + $0x28] sm:$0xff]
    %v571 = vld [vmem:[%s10 + $0x30] sm:$0xff]
    %v572 = vld [vmem:[%s10 + $0x38] sm:$0xff]
    %v573 = vld [vmem:[%s10 + $0x40] sm:$0xff]
    %v574 = vld [vmem:[%s10 + $0x48] sm:$0xff]
    %v575 = vld [vmem:[%s10 + $0x50] sm:$0xff]
    %v576 = vld [vmem:[%s10 + $0x58] sm:$0xff]
    %v577 = vld [vmem:[%s10 + $0x60] sm:$0xff]
    %v578 = vld [vmem:[%s10 + $0x68] sm:$0xff]
    %v579 = vld [vmem:[%s10 + $0x70] sm:$0xff]
    %v580 = vld [vmem:[%s10 + $0x78] sm:$0xff]
    %v581 = vld [vmem:[%s11] sm:$0x1]
    %v583 = vlaneseq
    %v584 = vshrl.u32 %v583, 7
    %v585 = vsub.s32 0, %v584
    %v586 = vrot.slane %v581, %v585
    %588 = vmatprep.subr.mxu0 0.0
    %589 = vmatpush1.msra.mxu0 %v565
    %590 = vmatprep.subr.mxu0 0.0
    %591 = vmatpush1.msra.mxu0 %v566
    %592 = vmatprep.subr.mxu0 0.0
    %593 = vmatpush1.msra.mxu0 %v567
    %594 = vmatprep.subr.mxu0 0.0
    %595 = vmatpush1.msra.mxu0 %v568
    %596 = vmatprep.subr.mxu0 0.0
    %597 = vmatpush1.msra.mxu0 %v569
    %598 = vmatprep.subr.mxu0 0.0
    %599 = vmatpush1.msra.mxu0 %v570
    %600 = vmatprep.subr.mxu0 0.0
    %601 = vmatpush1.msra.mxu0 %v571
    %602 = vmatprep.subr.mxu0 0.0
    %603 = vmatpush1.msra.mxu0 %v572
    %604 = vmatprep.subr.mxu0 0.0
    %605 = vmatpush1.msra.mxu0 %v573
    %606 = vmatprep.subr.mxu0 0.0
    %607 = vmatpush1.msra.mxu0 %v574
    %608 = vmatprep.subr.mxu0 0.0
    %609 = vmatpush1.msra.mxu0 %v575
    %610 = vmatprep.subr.mxu0 0.0
    %611 = vmatpush1.msra.mxu0 %v576
    %612 = vmatprep.subr.mxu0 0.0
    %613 = vmatpush1.msra.mxu0 %v577
    %614 = vmatprep.subr.mxu0 0.0
    %615 = vmatpush1.msra.mxu0 %v578
    %616 = vmatprep.subr.mxu0 0.0
    %617 = vmatpush1.msra.mxu0 %v579
    %618 = vmatprep.subr.mxu0 0.0
    %619 = vmatpush1.msra.mxu0 %v580
    %620 = vmatprep.subr.mxu0 0.0
    %621 = vmatpush1.msra.mxu0 0.0
    %622 = vmatprep.subr.mxu0 0.0
    %623 = vmatpush1.msra.mxu0 0.0
    %624 = vmatprep.subr.mxu0 0.0
    %625 = vmatpush1.msra.mxu0 0.0
    %626 = vmatprep.subr.mxu0 0.0
    %627 = vmatpush1.msra.mxu0 0.0
    %628 = vmatprep.subr.mxu0 0.0
    %629 = vmatpush1.msra.mxu0 0.0
    %630 = vmatprep.subr.mxu0 0.0
    %631 = vmatpush1.msra.mxu0 0.0
    %632 = vmatprep.subr.mxu0 0.0
    %633 = vmatpush1.msra.mxu0 0.0
    %634 = vmatprep.subr.mxu0 0.0
    %635 = vmatpush1.msra.mxu0 0.0
    %636 = vmatprep.subr.mxu0 0.0
    %637 = vmatpush1.msra.mxu0 0.0
    %638 = vmatprep.subr.mxu0 0.0
    %639 = vmatpush1.msra.mxu0 0.0
    %640 = vmatprep.subr.mxu0 0.0
    %641 = vmatpush1.msra.mxu0 0.0
    %642 = vmatprep.subr.mxu0 0.0
    %643 = vmatpush1.msra.mxu0 0.0
    %644 = vmatprep.subr.mxu0 0.0
    %645 = vmatpush1.msra.mxu0 0.0
    %646 = vmatprep.subr.mxu0 0.0
    %647 = vmatpush1.msra.mxu0 0.0
    %648 = vmatprep.subr.mxu0 0.0
    %649 = vmatpush1.msra.mxu0 0.0
    %650 = vmatprep.subr.mxu0 0.0
    %651 = vmatpush1.msra.mxu0 0.0
    %652 = vmatprep.mubr.f32.mxu0 0.0
    %653 = vmatmul.mubr.f32.gmra.mrb[0].mxu0 %v563
    %v654 = vpop.f32.mrb[0].mxu0
    %v655 = vadd.f32 %v586, %v654
    %v656 = vpop.f32.mrb[0].mxu0
    %657 = vmatprep.mubr.f32.mxu0 0.0
    %658 = vmatmul.mubr.f32.gmra.mrb[0].mxu0 %v564
    %v659 = vpop.f32.mrb[0].mxu0
    %v660 = vadd.f32 %v586, %v659
    %v661 = vpop.f32.mrb[0].mxu0
    %662 = vdwg.mxu0
    %v663 = vmax.f32 %v655, 0.0
    %v664 = vmax.f32 %v660, 0.0
    %v665 = vld [vmem:[%s12] sm:$0xff]
    %v666 = vld [vmem:[%s12 + $0x8] sm:$0xff]
    %v667 = vld [vmem:[%s12 + $0x10] sm:$0xff]
    %v668 = vld [vmem:[%s12 + $0x18] sm:$0xff]
    %v669 = vld [vmem:[%s12 + $0x20] sm:$0xff]
    %v670 = vld [vmem:[%s12 + $0x28] sm:$0xff]
    %v671 = vld [vmem:[%s12 + $0x30] sm:$0xff]
    %v672 = vld [vmem:[%s12 + $0x38] sm:$0xff]
    %v673 = vld [vmem:[%s13] sm:$0x1]
    %v675 = vlaneseq
    %v676 = vshrl.u32 %v675, 7
    %v677 = vsub.s32 0, %v676
    %v678 = vrot.slane %v673, %v677
    %v681 = vsel %vm179, %v663, 0
    %v684 = vsel %vm179, %v664, 0
    %686 = vmatprep.subr.mxu0 0.0
    %687 = vmatpush1.msra.mxu0 %v665
    %688 = vmatprep.subr.mxu0 0.0
    %689 = vmatpush1.msra.mxu0 %v666
    %690 = vmatprep.subr.mxu0 0.0
    %691 = vmatpush1.msra.mxu0 %v667
    %692 = vmatprep.subr.mxu0 0.0
    %693 = vmatpush1.msra.mxu0 %v668
    %694 = vmatprep.subr.mxu0 0.0
    %695 = vmatpush1.msra.mxu0 %v669
    %696 = vmatprep.subr.mxu0 0.0
    %697 = vmatpush1.msra.mxu0 %v670
    %698 = vmatprep.subr.mxu0 0.0
    %699 = vmatpush1.msra.mxu0 %v671
    %700 = vmatprep.subr.mxu0 0.0
    %701 = vmatpush1.msra.mxu0 %v672
    %702 = vmatprep.subr.mxu0 0.0
    %703 = vmatpush1.msra.mxu0 0.0
    %704 = vmatprep.subr.mxu0 0.0
    %705 = vmatpush1.msra.mxu0 0.0
    %706 = vmatprep.subr.mxu0 0.0
    %707 = vmatpush1.msra.mxu0 0.0
    %708 = vmatprep.subr.mxu0 0.0
    %709 = vmatpush1.msra.mxu0 0.0
    %710 = vmatprep.subr.mxu0 0.0
    %711 = vmatpush1.msra.mxu0 0.0
    %712 = vmatprep.subr.mxu0 0.0
    %713 = vmatpush1.msra.mxu0 0.0
    %714 = vmatprep.subr.mxu0 0.0
    %715 = vmatpush1.msra.mxu0 0.0
    %716 = vmatprep.subr.mxu0 0.0
    %717 = vmatpush1.msra.mxu0 0.0
    %718 = vmatprep.subr.mxu0 0.0
    %719 = vmatpush1.msra.mxu0 0.0
    %720 = vmatprep.subr.mxu0 0.0
    %721 = vmatpush1.msra.mxu0 0.0
    %722 = vmatprep.subr.mxu0 0.0
    %723 = vmatpush1.msra.mxu0 0.0
    %724 = vmatprep.subr.mxu0 0.0
    %725 = vmatpush1.msra.mxu0 0.0
    %726 = vmatprep.subr.mxu0 0.0
    %727 = vmatpush1.msra.mxu0 0.0
    %728 = vmatprep.subr.mxu0 0.0
    %729 = vmatpush1.msra.mxu0 0.0
    %730 = vmatprep.subr.mxu0 0.0
    %731 = vmatpush1.msra.mxu0 0.0
    %732 = vmatprep.subr.mxu0 0.0
    %733 = vmatpush1.msra.mxu0 0.0
    %734 = vmatprep.subr.mxu0 0.0
    %735 = vmatpush1.msra.mxu0 0.0
    %736 = vmatprep.subr.mxu0 0.0
    %737 = vmatpush1.msra.mxu0 0.0
    %738 = vmatprep.subr.mxu0 0.0
    %739 = vmatpush1.msra.mxu0 0.0
    %740 = vmatprep.subr.mxu0 0.0
    %741 = vmatpush1.msra.mxu0 0.0
    %742 = vmatprep.subr.mxu0 0.0
    %743 = vmatpush1.msra.mxu0 0.0
    %744 = vmatprep.subr.mxu0 0.0
    %745 = vmatpush1.msra.mxu0 0.0
    %746 = vmatprep.subr.mxu0 0.0
    %747 = vmatpush1.msra.mxu0 0.0
    %748 = vmatprep.subr.mxu0 0.0
    %749 = vmatpush1.msra.mxu0 0.0
    %750 = vmatprep.mubr.f32.mxu0 0.0
    %751 = vmatmul.mubr.f32.gmra.mrb[0].mxu0 %v681
    %v752 = vpop.f32.mrb[0].mxu0
    %v753 = vadd.f32 %v678, %v752
    %v754 = vpop.f32.mrb[0].mxu0
    %755 = vmatprep.mubr.f32.mxu0 0.0
    %756 = vmatmul.mubr.f32.gmra.mrb[0].mxu0 %v684
    %v757 = vpop.f32.mrb[0].mxu0
    %v758 = vadd.f32 %v678, %v757
    %v759 = vpop.f32.mrb[0].mxu0
    %760 = vdwg.mxu0
    %v761 = vmax.f32 %v753, 0.0
    %v762 = vmax.f32 %v758, 0.0
    %v763 = vadd.f32 %v551, %v761
    %v764 = vadd.f32 %v552, %v762
    %765 = vst.msk [vmem:[%s14] sm:$0xff] %vm179, %v763
    %766 = vst.msk [vmem:[%s14 + $0x8] sm:$0xff] %vm179, %v764
    loop: start=0, step=1, limit=48
    $region80: #{rmpnn_forward.1} parent=1 // loop_pre_header
      _
    $region81: #{rmpnn_forward.1} parent=1 // loop_header
      %s768 = sphi 0, %s772
      %p769 = scmp.ge.s32.totalorder %s768, 48
    $region82: #{rmpnn_forward.1} parent=1 // loop_header_branch
      %771 = sbr.rel (%p769) target = $region86
    $region83: #{rmpnn_forward.1} parent=1 // loop_body
      %s773 = sld [smem:[#allocation8 + %s768]]
      %s774 = sld [smem:[#allocation6 + %s768]]
      %s775 = scalar_lea.vmem %s14, %s773
      %v776 = vld [vmem:[%s775] sm:$0x1]
      %s777 = scalar_lea.vmem [#allocation2], %s768
      %vm778 = vcmask 516096
      %779 = vst.msk [vmem:[%s777] sm:$0x1] %vm778, %v776
      %s780 = scalar_lea.vmem %s14, %s774
      %v781 = vld [vmem:[%s780] sm:$0x1]
      %s782 = scalar_lea.vmem [#allocation3], %s768
      %783 = vst.msk [vmem:[%s782] sm:$0x1] %vm778, %v781
    $region84: #{rmpnn_forward.1} parent=1 // loop_footer
      %s772 = sadd.s32 1, %s768
    $region85: #{rmpnn_forward.1} parent=1 // loop_footer_branch
      %767 = sbr.rel target = $region81
    $region86: #{rmpnn_forward.1} parent=1 // loop_exit
      _
    %v784 = vld [vmem:[#allocation2] sm:$0xff]
    %v785 = vld [vmem:[#allocation2 + $0x8] sm:$0xff]
    %v786 = vld [vmem:[#allocation2 + $0x10] sm:$0xff]
    %v787 = vld [vmem:[#allocation2 + $0x18] sm:$0xff]
    %v788 = vld [vmem:[#allocation2 + $0x20] sm:$0xff]
    %v789 = vld [vmem:[#allocation2 + $0x28] sm:$0xff]
    %v790 = vld [vmem:[#allocation3] sm:$0xff]
    %v791 = vld [vmem:[#allocation3 + $0x8] sm:$0xff]
    %v792 = vld [vmem:[#allocation3 + $0x10] sm:$0xff]
    %v793 = vld [vmem:[#allocation3 + $0x18] sm:$0xff]
    %v794 = vld [vmem:[#allocation3 + $0x20] sm:$0xff]
    %v795 = vld [vmem:[#allocation3 + $0x28] sm:$0xff]
    %802 = vrot.lane.b32.xlu0 %v790, 64
    %v803 = vpop.permute.xlu0 %802
    %804 = vrot.lane.b32.xlu0 %v791, 64
    %v805 = vpop.permute.xlu0 %804
    %806 = vrot.lane.b32.xlu0 %v792, 64
    %v807 = vpop.permute.xlu0 %806
    %808 = vrot.lane.b32.xlu0 %v793, 64
    %v809 = vpop.permute.xlu0 %808
    %810 = vrot.lane.b32.xlu0 %v794, 64
    %v811 = vpop.permute.xlu0 %810
    %812 = vrot.lane.b32.xlu0 %v795, 64
    %v813 = vpop.permute.xlu0 %812
    %v820 = vsel %vm179, %v784, %v803
    %v821 = vsel %vm179, %v785, %v805
    %v822 = vsel %vm179, %v786, %v807
    %v823 = vsel %vm179, %v787, %v809
    %v824 = vsel %vm179, %v788, %v811
    %v825 = vsel %vm179, %v789, %v813
    %s826 = scalar_lea.vmem %s6, 136
    %v827 = vld [vmem:[%s826] sm:$0xff]
    %v828 = vld [vmem:[%s826 + $0x8] sm:$0xff]
    %v829 = vld [vmem:[%s826 + $0x10] sm:$0xff]
    %v830 = vld [vmem:[%s826 + $0x18] sm:$0xff]
    %v831 = vld [vmem:[%s826 + $0x20] sm:$0xff]
    %v832 = vld [vmem:[%s826 + $0x28] sm:$0xff]
    %v833 = vld [vmem:[%s826 + $0x30] sm:$0xff]
    %v834 = vld [vmem:[%s826 + $0x38] sm:$0xff]
    %v835 = vld [vmem:[%s826 + $0x40] sm:$0xff]
    %v836 = vld [vmem:[%s826 + $0x48] sm:$0xff]
    %v837 = vld [vmem:[%s826 + $0x50] sm:$0xff]
    %v838 = vld [vmem:[%s826 + $0x58] sm:$0xff]
    %v839 = vld [vmem:[%s826 + $0x60] sm:$0xff]
    %v840 = vld [vmem:[%s826 + $0x68] sm:$0xff]
    %v841 = vld [vmem:[%s826 + $0x70] sm:$0xff]
    %v842 = vld [vmem:[%s826 + $0x78] sm:$0xff]
    %v843 = vld [vmem:[%s826 + $0x80] sm:$0xf]
    %s844 = scalar_lea.vmem %s7, 1
    %v845 = vld [vmem:[%s844] sm:$0x1]
    %v847 = vlaneseq
    %v848 = vshrl.u32 %v847, 7
    %v849 = vsub.s32 0, %v848
    %v850 = vrot.slane %v845, %v849
    %v853 = vsel %vm290, %v843, 0
    %855 = vmatprep.subr.mxu0 0.0
    %856 = vmatpush1.msra.mxu0 %v827
    %857 = vmatprep.subr.mxu0 0.0
    %858 = vmatpush1.msra.mxu0 %v828
    %859 = vmatprep.subr.mxu0 0.0
    %860 = vmatpush1.msra.mxu0 %v829
    %861 = vmatprep.subr.mxu0 0.0
    %862 = vmatpush1.msra.mxu0 %v830
    %863 = vmatprep.subr.mxu0 0.0
    %864 = vmatpush1.msra.mxu0 %v831
    %865 = vmatprep.subr.mxu0 0.0
    %866 = vmatpush1.msra.mxu0 %v832
    %867 = vmatprep.subr.mxu0 0.0
    %868 = vmatpush1.msra.mxu0 %v833
    %869 = vmatprep.subr.mxu0 0.0
    %870 = vmatpush1.msra.mxu0 %v834
    %871 = vmatprep.subr.mxu0 0.0
    %872 = vmatpush1.msra.mxu0 %v835
    %873 = vmatprep.subr.mxu0 0.0
    %874 = vmatpush1.msra.mxu0 %v836
    %875 = vmatprep.subr.mxu0 0.0
    %876 = vmatpush1.msra.mxu0 %v837
    %877 = vmatprep.subr.mxu0 0.0
    %878 = vmatpush1.msra.mxu0 %v838
    %879 = vmatprep.subr.mxu0 0.0
    %880 = vmatpush1.msra.mxu0 %v839
    %881 = vmatprep.subr.mxu0 0.0
    %882 = vmatpush1.msra.mxu0 %v840
    %883 = vmatprep.subr.mxu0 0.0
    %884 = vmatpush1.msra.mxu0 %v841
    %885 = vmatprep.subr.mxu0 0.0
    %886 = vmatpush1.msra.mxu0 %v842
    %887 = vmatprep.subr.mxu0 0.0
    %888 = vmatpush1.msra.mxu0 %v853
    %889 = vmatprep.subr.mxu0 0.0
    %890 = vmatpush1.msra.mxu0 0.0
    %891 = vmatprep.subr.mxu0 0.0
    %892 = vmatpush1.msra.mxu0 0.0
    %893 = vmatprep.subr.mxu0 0.0
    %894 = vmatpush1.msra.mxu0 0.0
    %895 = vmatprep.subr.mxu0 0.0
    %896 = vmatpush1.msra.mxu0 0.0
    %897 = vmatprep.subr.mxu0 0.0
    %898 = vmatpush1.msra.mxu0 0.0
    %899 = vmatprep.subr.mxu0 0.0
    %900 = vmatpush1.msra.mxu0 0.0
    %901 = vmatprep.subr.mxu0 0.0
    %902 = vmatpush1.msra.mxu0 0.0
    %903 = vmatprep.subr.mxu0 0.0
    %904 = vmatpush1.msra.mxu0 0.0
    %905 = vmatprep.subr.mxu0 0.0
    %906 = vmatpush1.msra.mxu0 0.0
    %907 = vmatprep.subr.mxu0 0.0
    %908 = vmatpush1.msra.mxu0 0.0
    %909 = vmatprep.subr.mxu0 0.0
    %910 = vmatpush1.msra.mxu0 0.0
    %911 = vmatprep.subr.mxu0 0.0
    %912 = vmatpush1.msra.mxu0 0.0
    %913 = vmatprep.subr.mxu0 0.0
    %914 = vmatpush1.msra.mxu0 0.0
    %915 = vmatprep.subr.mxu0 0.0
    %916 = vmatpush1.msra.mxu0 0.0
    %917 = vmatprep.subr.mxu0 0.0
    %918 = vmatpush1.msra.mxu0 0.0
    %919 = vmatprep.mubr.f32.mxu0 %v273
    %920 = vmatmul.mubr.f32.gmra.mrb[0].mxu0 %v820
    %v921 = vpop.f32.mrb[0].mxu0
    %v922 = vadd.f32 %v850, %v921
    %v923 = vpop.f32.mrb[0].mxu0
    %924 = vmatprep.mubr.f32.mxu0 %v276
    %925 = vmatmul.mubr.f32.gmra.mrb[0].mxu0 %v821
    %v926 = vpop.f32.mrb[0].mxu0
    %v927 = vadd.f32 %v850, %v926
    %v928 = vpop.f32.mrb[0].mxu0
    %929 = vmatprep.mubr.f32.mxu0 %v279
    %930 = vmatmul.mubr.f32.gmra.mrb[0].mxu0 %v822
    %v931 = vpop.f32.mrb[0].mxu0
    %v932 = vadd.f32 %v850, %v931
    %v933 = vpop.f32.mrb[0].mxu0
    %934 = vmatprep.mubr.f32.mxu0 %v282
    %935 = vmatmul.mubr.f32.gmra.mrb[0].mxu0 %v823
    %v936 = vpop.f32.mrb[0].mxu0
    %v937 = vadd.f32 %v850, %v936
    %v938 = vpop.f32.mrb[0].mxu0
    %939 = vmatprep.mubr.f32.mxu0 %v285
    %940 = vmatmul.mubr.f32.gmra.mrb[0].mxu0 %v824
    %v941 = vpop.f32.mrb[0].mxu0
    %v942 = vadd.f32 %v850, %v941
    %v943 = vpop.f32.mrb[0].mxu0
    %944 = vmatprep.mubr.f32.mxu0 %v288
    %945 = vmatmul.mubr.f32.gmra.mrb[0].mxu0 %v825
    %v946 = vpop.f32.mrb[0].mxu0
    %v947 = vadd.f32 %v850, %v946
    %v948 = vpop.f32.mrb[0].mxu0
    %949 = vdwg.mxu0
    %v950 = vmax.f32 %v922, 0.0
    %v951 = vmax.f32 %v927, 0.0
    %v952 = vmax.f32 %v932, 0.0
    %v953 = vmax.f32 %v937, 0.0
    %v954 = vmax.f32 %v942, 0.0
    %v955 = vmax.f32 %v947, 0.0
    %s956 = scalar_lea.vmem %s8, 64
    %v957 = vld [vmem:[%s956] sm:$0xff]
    %v958 = vld [vmem:[%s956 + $0x8] sm:$0xff]
    %v959 = vld [vmem:[%s956 + $0x10] sm:$0xff]
    %v960 = vld [vmem:[%s956 + $0x18] sm:$0xff]
    %v961 = vld [vmem:[%s956 + $0x20] sm:$0xff]
    %v962 = vld [vmem:[%s956 + $0x28] sm:$0xff]
    %v963 = vld [vmem:[%s956 + $0x30] sm:$0xff]
    %v964 = vld [vmem:[%s956 + $0x38] sm:$0xff]
    %s965 = scalar_lea.vmem %s9, 1
    %v966 = vld [vmem:[%s965] sm:$0x1]
    %v968 = vlaneseq
    %v969 = vshrl.u32 %v968, 7
    %v970 = vsub.s32 0, %v969
    %v971 = vrot.slane %v966, %v970
    %v974 = vsel %vm179, %v950, 0
    %v977 = vsel %vm179, %v951, 0
    %v980 = vsel %vm179, %v952, 0
    %v983 = vsel %vm179, %v953, 0
    %v986 = vsel %vm179, %v954, 0
    %v989 = vsel %vm179, %v955, 0
    %991 = vmatprep.subr.mxu0 0.0
    %992 = vmatpush1.msra.mxu0 %v957
    %993 = vmatprep.subr.mxu0 0.0
    %994 = vmatpush1.msra.mxu0 %v958
    %995 = vmatprep.subr.mxu0 0.0
    %996 = vmatpush1.msra.mxu0 %v959
    %997 = vmatprep.subr.mxu0 0.0
    %998 = vmatpush1.msra.mxu0 %v960
    %999 = vmatprep.subr.mxu0 0.0
    %1000 = vmatpush1.msra.mxu0 %v961
    %1001 = vmatprep.subr.mxu0 0.0
    %1002 = vmatpush1.msra.mxu0 %v962
    %1003 = vmatprep.subr.mxu0 0.0
    %1004 = vmatpush1.msra.mxu0 %v963
    %1005 = vmatprep.subr.mxu0 0.0
    %1006 = vmatpush1.msra.mxu0 %v964
    %1007 = vmatprep.subr.mxu0 0.0
    %1008 = vmatpush1.msra.mxu0 0.0
    %1009 = vmatprep.subr.mxu0 0.0
    %1010 = vmatpush1.msra.mxu0 0.0
    %1011 = vmatprep.subr.mxu0 0.0
    %1012 = vmatpush1.msra.mxu0 0.0
    %1013 = vmatprep.subr.mxu0 0.0
    %1014 = vmatpush1.msra.mxu0 0.0
    %1015 = vmatprep.subr.mxu0 0.0
    %1016 = vmatpush1.msra.mxu0 0.0
    %1017 = vmatprep.subr.mxu0 0.0
    %1018 = vmatpush1.msra.mxu0 0.0
    %1019 = vmatprep.subr.mxu0 0.0
    %1020 = vmatpush1.msra.mxu0 0.0
    %1021 = vmatprep.subr.mxu0 0.0
    %1022 = vmatpush1.msra.mxu0 0.0
    %1023 = vmatprep.subr.mxu0 0.0
    %1024 = vmatpush1.msra.mxu0 0.0
    %1025 = vmatprep.subr.mxu0 0.0
    %1026 = vmatpush1.msra.mxu0 0.0
    %1027 = vmatprep.subr.mxu0 0.0
    %1028 = vmatpush1.msra.mxu0 0.0
    %1029 = vmatprep.subr.mxu0 0.0
    %1030 = vmatpush1.msra.mxu0 0.0
    %1031 = vmatprep.subr.mxu0 0.0
    %1032 = vmatpush1.msra.mxu0 0.0
    %1033 = vmatprep.subr.mxu0 0.0
    %1034 = vmatpush1.msra.mxu0 0.0
    %1035 = vmatprep.subr.mxu0 0.0
    %1036 = vmatpush1.msra.mxu0 0.0
    %1037 = vmatprep.subr.mxu0 0.0
    %1038 = vmatpush1.msra.mxu0 0.0
    %1039 = vmatprep.subr.mxu0 0.0
    %1040 = vmatpush1.msra.mxu0 0.0
    %1041 = vmatprep.subr.mxu0 0.0
    %1042 = vmatpush1.msra.mxu0 0.0
    %1043 = vmatprep.subr.mxu0 0.0
    %1044 = vmatpush1.msra.mxu0 0.0
    %1045 = vmatprep.subr.mxu0 0.0
    %1046 = vmatpush1.msra.mxu0 0.0
    %1047 = vmatprep.subr.mxu0 0.0
    %1048 = vmatpush1.msra.mxu0 0.0
    %1049 = vmatprep.subr.mxu0 0.0
    %1050 = vmatpush1.msra.mxu0 0.0
    %1051 = vmatprep.subr.mxu0 0.0
    %1052 = vmatpush1.msra.mxu0 0.0
    %1053 = vmatprep.subr.mxu0 0.0
    %1054 = vmatpush1.msra.mxu0 0.0
    %1055 = vmatprep.mubr.f32.mxu0 0.0
    %1056 = vmatmul.mubr.f32.gmra.mrb[0].mxu0 %v974
    %v1057 = vpop.f32.mrb[0].mxu0
    %v1058 = vadd.f32 %v971, %v1057
    %v1059 = vpop.f32.mrb[0].mxu0
    %1060 = vmatprep.mubr.f32.mxu0 0.0
    %1061 = vmatmul.mubr.f32.gmra.mrb[0].mxu0 %v977
    %v1062 = vpop.f32.mrb[0].mxu0
    %v1063 = vadd.f32 %v971, %v1062
    %v1064 = vpop.f32.mrb[0].mxu0
    %1065 = vmatprep.mubr.f32.mxu0 0.0
    %1066 = vmatmul.mubr.f32.gmra.mrb[0].mxu0 %v980
    %v1067 = vpop.f32.mrb[0].mxu0
    %v1068 = vadd.f32 %v971, %v1067
    %v1069 = vpop.f32.mrb[0].mxu0
    %1070 = vmatprep.mubr.f32.mxu0 0.0
    %1071 = vmatmul.mubr.f32.gmra.mrb[0].mxu0 %v983
    %v1072 = vpop.f32.mrb[0].mxu0
    %v1073 = vadd.f32 %v971, %v1072
    %v1074 = vpop.f32.mrb[0].mxu0
    %1075 = vmatprep.mubr.f32.mxu0 0.0
    %1076 = vmatmul.mubr.f32.gmra.mrb[0].mxu0 %v986
    %v1077 = vpop.f32.mrb[0].mxu0
    %v1078 = vadd.f32 %v971, %v1077
    %v1079 = vpop.f32.mrb[0].mxu0
    %1080 = vmatprep.mubr.f32.mxu0 0.0
    %1081 = vmatmul.mubr.f32.gmra.mrb[0].mxu0 %v989
    %v1082 = vpop.f32.mrb[0].mxu0
    %v1083 = vadd.f32 %v971, %v1082
    %v1084 = vpop.f32.mrb[0].mxu0
    %1085 = vdwg.mxu0
    %v1086 = vmax.f32 %v1058, 0.0
    %v1087 = vmax.f32 %v1063, 0.0
    %v1088 = vmax.f32 %v1068, 0.0
    %v1089 = vmax.f32 %v1073, 0.0
    %v1090 = vmax.f32 %v1078, 0.0
    %v1091 = vmax.f32 %v1083, 0.0
    %1092 = vst.msk [vmem:[#allocation4] sm:$0xff] %vm179, %v1086
    %1093 = vst.msk [vmem:[#allocation4 + $0x8] sm:$0xff] %vm179, %v1087
    %1094 = vst.msk [vmem:[#allocation4 + $0x10] sm:$0xff] %vm179, %v1088
    %1095 = vst.msk [vmem:[#allocation4 + $0x18] sm:$0xff] %vm179, %v1089
    %1096 = vst.msk [vmem:[#allocation4 + $0x20] sm:$0xff] %vm179, %v1090
    %1097 = vst.msk [vmem:[#allocation4 + $0x28] sm:$0xff] %vm179, %v1091
    %1098 = vst.msk [vmem:[#allocation5] sm:$0xff] %vm179, 0.0
    %1099 = vst.msk [vmem:[#allocation5 + $0x8] sm:$0xff] %vm179, 0.0
    loop: start=0, step=1, limit=48
    $region87: #{rmpnn_forward.1} parent=1 // loop_pre_header
      _
    $region88: #{rmpnn_forward.1} parent=1 // loop_header
      %s1101 = sphi 0, %s1105
      %p1102 = scmp.ge.s32.totalorder %s1101, 48
    $region89: #{rmpnn_forward.1} parent=1 // loop_header_branch
      %1104 = sbr.rel (%p1102) target = $region93
    $region90: #{rmpnn_forward.1} parent=1 // loop_body
      %s1106 = sld [smem:[#allocation8 + %s1101]]
      %s1107 = scalar_lea.vmem [#allocation5], %s1106
      %v1108 = vld [vmem:[%s1107] sm:$0x1]
      %s1109 = scalar_lea.vmem [#allocation4], %s1101
      %v1110 = vld [vmem:[%s1109] sm:$0x1]
      %v1111 = vadd.f32 %v1108, %v1110
      %vm1112 = vcmask 516096
      %1113 = vst.msk [vmem:[%s1107] sm:$0x1] %vm1112, %v1111
    $region91: #{rmpnn_forward.1} parent=1 // loop_footer
      %s1105 = sadd.s32 1, %s1101
    $region92: #{rmpnn_forward.1} parent=1 // loop_footer_branch
      %1100 = sbr.rel target = $region88
    $region93: #{rmpnn_forward.1} parent=1 // loop_exit
      _
    %v1114 = vld [vmem:[%s14] sm:$0xff]
    %v1115 = vld [vmem:[%s14 + $0x8] sm:$0xff]
    %v1116 = vld [vmem:[#allocation5] sm:$0xff]
    %v1117 = vld [vmem:[#allocation5 + $0x8] sm:$0xff]
    %1120 = vrot.lane.b32.xlu0 %v1116, 64
    %v1121 = vpop.permute.xlu0 %1120
    %1122 = vrot.lane.b32.xlu0 %v1117, 64
    %v1123 = vpop.permute.xlu0 %1122
    %v1126 = vsel %vm179, %v1114, %v1121
    %v1127 = vsel %vm179, %v1115, %v1123
    %s1128 = scalar_lea.vmem %s10, 128
    %v1129 = vld [vmem:[%s1128] sm:$0xff]
    %v1130 = vld [vmem:[%s1128 + $0x8] sm:$0xff]
    %v1131 = vld [vmem:[%s1128 + $0x10] sm:$0xff]
    %v1132 = vld [vmem:[%s1128 + $0x18] sm:$0xff]
    %v1133 = vld [vmem:[%s1128 + $0x20] sm:$0xff]
    %v1134 = vld [vmem:[%s1128 + $0x28] sm:$0xff]
    %v1135 = vld [vmem:[%s1128 + $0x30] sm:$0xff]
    %v1136 = vld [vmem:[%s1128 + $0x38] sm:$0xff]
    %v1137 = vld [vmem:[%s1128 + $0x40] sm:$0xff]
    %v1138 = vld [vmem:[%s1128 + $0x48] sm:$0xff]
    %v1139 = vld [vmem:[%s1128 + $0x50] sm:$0xff]
    %v1140 = vld [vmem:[%s1128 + $0x58] sm:$0xff]
    %v1141 = vld [vmem:[%s1128 + $0x60] sm:$0xff]
    %v1142 = vld [vmem:[%s1128 + $0x68] sm:$0xff]
    %v1143 = vld [vmem:[%s1128 + $0x70] sm:$0xff]
    %v1144 = vld [vmem:[%s1128 + $0x78] sm:$0xff]
    %s1145 = scalar_lea.vmem %s11, 1
    %v1146 = vld [vmem:[%s1145] sm:$0x1]
    %v1148 = vlaneseq
    %v1149 = vshrl.u32 %v1148, 7
    %v1150 = vsub.s32 0, %v1149
    %v1151 = vrot.slane %v1146, %v1150
    %1153 = vmatprep.subr.mxu0 0.0
    %1154 = vmatpush1.msra.mxu0 %v1129
    %1155 = vmatprep.subr.mxu0 0.0
    %1156 = vmatpush1.msra.mxu0 %v1130
    %1157 = vmatprep.subr.mxu0 0.0
    %1158 = vmatpush1.msra.mxu0 %v1131
    %1159 = vmatprep.subr.mxu0 0.0
    %1160 = vmatpush1.msra.mxu0 %v1132
    %1161 = vmatprep.subr.mxu0 0.0
    %1162 = vmatpush1.msra.mxu0 %v1133
    %1163 = vmatprep.subr.mxu0 0.0
    %1164 = vmatpush1.msra.mxu0 %v1134
    %1165 = vmatprep.subr.mxu0 0.0
    %1166 = vmatpush1.msra.mxu0 %v1135
    %1167 = vmatprep.subr.mxu0 0.0
    %1168 = vmatpush1.msra.mxu0 %v1136
    %1169 = vmatprep.subr.mxu0 0.0
    %1170 = vmatpush1.msra.mxu0 %v1137
    %1171 = vmatprep.subr.mxu0 0.0
    %1172 = vmatpush1.msra.mxu0 %v1138
    %1173 = vmatprep.subr.mxu0 0.0
    %1174 = vmatpush1.msra.mxu0 %v1139
    %1175 = vmatprep.subr.mxu0 0.0
    %1176 = vmatpush1.msra.mxu0 %v1140
    %1177 = vmatprep.subr.mxu0 0.0
    %1178 = vmatpush1.msra.mxu0 %v1141
    %1179 = vmatprep.subr.mxu0 0.0
    %1180 = vmatpush1.msra.mxu0 %v1142
    %1181 = vmatprep.subr.mxu0 0.0
    %1182 = vmatpush1.msra.mxu0 %v1143
    %1183 = vmatprep.subr.mxu0 0.0
    %1184 = vmatpush1.msra.mxu0 %v1144
    %1185 = vmatprep.subr.mxu0 0.0
    %1186 = vmatpush1.msra.mxu0 0.0
    %1187 = vmatprep.subr.mxu0 0.0
    %1188 = vmatpush1.msra.mxu0 0.0
    %1189 = vmatprep.subr.mxu0 0.0
    %1190 = vmatpush1.msra.mxu0 0.0
    %1191 = vmatprep.subr.mxu0 0.0
    %1192 = vmatpush1.msra.mxu0 0.0
    %1193 = vmatprep.subr.mxu0 0.0
    %1194 = vmatpush1.msra.mxu0 0.0
    %1195 = vmatprep.subr.mxu0 0.0
    %1196 = vmatpush1.msra.mxu0 0.0
    %1197 = vmatprep.subr.mxu0 0.0
    %1198 = vmatpush1.msra.mxu0 0.0
    %1199 = vmatprep.subr.mxu0 0.0
    %1200 = vmatpush1.msra.mxu0 0.0
    %1201 = vmatprep.subr.mxu0 0.0
    %1202 = vmatpush1.msra.mxu0 0.0
    %1203 = vmatprep.subr.mxu0 0.0
    %1204 = vmatpush1.msra.mxu0 0.0
    %1205 = vmatprep.subr.mxu0 0.0
    %1206 = vmatpush1.msra.mxu0 0.0
    %1207 = vmatprep.subr.mxu0 0.0
    %1208 = vmatpush1.msra.mxu0 0.0
    %1209 = vmatprep.subr.mxu0 0.0
    %1210 = vmatpush1.msra.mxu0 0.0
    %1211 = vmatprep.subr.mxu0 0.0
    %1212 = vmatpush1.msra.mxu0 0.0
    %1213 = vmatprep.subr.mxu0 0.0
    %1214 = vmatpush1.msra.mxu0 0.0
    %1215 = vmatprep.subr.mxu0 0.0
    %1216 = vmatpush1.msra.mxu0 0.0
    %1217 = vmatprep.mubr.f32.mxu0 0.0
    %1218 = vmatmul.mubr.f32.gmra.mrb[0].mxu0 %v1126
    %v1219 = vpop.f32.mrb[0].mxu0
    %v1220 = vadd.f32 %v1151, %v1219
    %v1221 = vpop.f32.mrb[0].mxu0
    %1222 = vmatprep.mubr.f32.mxu0 0.0
    %1223 = vmatmul.mubr.f32.gmra.mrb[0].mxu0 %v1127
    %v1224 = vpop.f32.mrb[0].mxu0
    %v1225 = vadd.f32 %v1151, %v1224
    %v1226 = vpop.f32.mrb[0].mxu0
    %1227 = vdwg.mxu0
    %v1228 = vmax.f32 %v1220, 0.0
    %v1229 = vmax.f32 %v1225, 0.0
    %s1230 = scalar_lea.vmem %s12, 64
    %v1231 = vld [vmem:[%s1230] sm:$0xff]
    %v1232 = vld [vmem:[%s1230 + $0x8] sm:$0xff]
    %v1233 = vld [vmem:[%s1230 + $0x10] sm:$0xff]
    %v1234 = vld [vmem:[%s1230 + $0x18] sm:$0xff]
    %v1235 = vld [vmem:[%s1230 + $0x20] sm:$0xff]
    %v1236 = vld [vmem:[%s1230 + $0x28] sm:$0xff]
    %v1237 = vld [vmem:[%s1230 + $0x30] sm:$0xff]
    %v1238 = vld [vmem:[%s1230 + $0x38] sm:$0xff]
    %s1239 = scalar_lea.vmem %s13, 1
    %v1240 = vld [vmem:[%s1239] sm:$0x1]
    %v1242 = vlaneseq
    %v1243 = vshrl.u32 %v1242, 7
    %v1244 = vsub.s32 0, %v1243
    %v1245 = vrot.slane %v1240, %v1244
    %v1248 = vsel %vm179, %v1228, 0
    %v1251 = vsel %vm179, %v1229, 0
    %1253 = vmatprep.subr.mxu0 0.0
    %1254 = vmatpush1.msra.mxu0 %v1231
    %1255 = vmatprep.subr.mxu0 0.0
    %1256 = vmatpush1.msra.mxu0 %v1232
    %1257 = vmatprep.subr.mxu0 0.0
    %1258 = vmatpush1.msra.mxu0 %v1233
    %1259 = vmatprep.subr.mxu0 0.0
    %1260 = vmatpush1.msra.mxu0 %v1234
    %1261 = vmatprep.subr.mxu0 0.0
    %1262 = vmatpush1.msra.mxu0 %v1235
    %1263 = vmatprep.subr.mxu0 0.0
    %1264 = vmatpush1.msra.mxu0 %v1236
    %1265 = vmatprep.subr.mxu0 0.0
    %1266 = vmatpush1.msra.mxu0 %v1237
    %1267 = vmatprep.subr.mxu0 0.0
    %1268 = vmatpush1.msra.mxu0 %v1238
    %1269 = vmatprep.subr.mxu0 0.0
    %1270 = vmatpush1.msra.mxu0 0.0
    %1271 = vmatprep.subr.mxu0 0.0
    %1272 = vmatpush1.msra.mxu0 0.0
    %1273 = vmatprep.subr.mxu0 0.0
    %1274 = vmatpush1.msra.mxu0 0.0
    %1275 = vmatprep.subr.mxu0 0.0
    %1276 = vmatpush1.msra.mxu0 0.0
    %1277 = vmatprep.subr.mxu0 0.0
    %1278 = vmatpush1.msra.mxu0 0.0
    %1279 = vmatprep.subr.mxu0 0.0
    %1280 = vmatpush1.msra.mxu0 0.0
    %1281 = vmatprep.subr.mxu0 0.0
    %1282 = vmatpush1.msra.mxu0 0.0
    %1283 = vmatprep.subr.mxu0 0.0
    %1284 = vmatpush1.msra.mxu0 0.0
    %1285 = vmatprep.subr.mxu0 0.0
    %1286 = vmatpush1.msra.mxu0 0.0
    %1287 = vmatprep.subr.mxu0 0.0
    %1288 = vmatpush1.msra.mxu0 0.0
    %1289 = vmatprep.subr.mxu0 0.0
    %1290 = vmatpush1.msra.mxu0 0.0
    %1291 = vmatprep.subr.mxu0 0.0
    %1292 = vmatpush1.msra.mxu0 0.0
    %1293 = vmatprep.subr.mxu0 0.0
    %1294 = vmatpush1.msra.mxu0 0.0
    %1295 = vmatprep.subr.mxu0 0.0
    %1296 = vmatpush1.msra.mxu0 0.0
    %1297 = vmatprep.subr.mxu0 0.0
    %1298 = vmatpush1.msra.mxu0 0.0
    %1299 = vmatprep.subr.mxu0 0.0
    %1300 = vmatpush1.msra.mxu0 0.0
    %1301 = vmatprep.subr.mxu0 0.0
    %1302 = vmatpush1.msra.mxu0 0.0
    %1303 = vmatprep.subr.mxu0 0.0
    %1304 = vmatpush1.msra.mxu0 0.0
    %1305 = vmatprep.subr.mxu0 0.0
    %1306 = vmatpush1.msra.mxu0 0.0
    %1307 = vmatprep.subr.mxu0 0.0
    %1308 = vmatpush1.msra.mxu0 0.0
    %1309 = vmatprep.subr.mxu0 0.0
    %1310 = vmatpush1.msra.mxu0 0.0
    %1311 = vmatprep.subr.mxu0 0.0
    %1312 = vmatpush1.msra.mxu0 0.0
    %1313 = vmatprep.subr.mxu0 0.0
    %1314 = vmatpush1.msra.mxu0 0.0
    %1315 = vmatprep.subr.mxu0 0.0
    %1316 = vmatpush1.msra.mxu0 0.0
    %1317 = vmatprep.mubr.f32.mxu0 0.0
    %1318 = vmatmul.mubr.f32.gmra.mrb[0].mxu0 %v1248
    %v1319 = vpop.f32.mrb[0].mxu0
    %v1320 = vadd.f32 %v1245, %v1319
    %v1321 = vpop.f32.mrb[0].mxu0
    %1322 = vmatprep.mubr.f32.mxu0 0.0
    %1323 = vmatmul.mubr.f32.gmra.mrb[0].mxu0 %v1251
    %v1324 = vpop.f32.mrb[0].mxu0
    %v1325 = vadd.f32 %v1245, %v1324
    %v1326 = vpop.f32.mrb[0].mxu0
    %1327 = vdwg.mxu0
    %v1328 = vmax.f32 %v1320, 0.0
    %v1329 = vmax.f32 %v1325, 0.0
    %v1330 = vadd.f32 %v1114, %v1328
    %v1331 = vadd.f32 %v1115, %v1329
    %1332 = vst.msk [vmem:[%s14] sm:$0xff] %vm179, %v1330
    %1333 = vst.msk [vmem:[%s14 + $0x8] sm:$0xff] %vm179, %v1331
    loop: start=0, step=1, limit=48
    $region94: #{rmpnn_forward.1} parent=1 // loop_pre_header
      _
    $region95: #{rmpnn_forward.1} parent=1 // loop_header
      %s1335 = sphi 0, %s1339
      %p1336 = scmp.ge.s32.totalorder %s1335, 48
    $region96: #{rmpnn_forward.1} parent=1 // loop_header_branch
      %1338 = sbr.rel (%p1336) target = $region100
    $region97: #{rmpnn_forward.1} parent=1 // loop_body
      %s1340 = sld [smem:[#allocation8 + %s1335]]
      %s1341 = sld [smem:[#allocation6 + %s1335]]
      %s1342 = scalar_lea.vmem %s14, %s1340
      %v1343 = vld [vmem:[%s1342] sm:$0x1]
      %s1344 = scalar_lea.vmem [#allocation2], %s1335
      %vm1345 = vcmask 516096
      %1346 = vst.msk [vmem:[%s1344] sm:$0x1] %vm1345, %v1343
      %s1347 = scalar_lea.vmem %s14, %s1341
      %v1348 = vld [vmem:[%s1347] sm:$0x1]
      %s1349 = scalar_lea.vmem [#allocation3], %s1335
      %1350 = vst.msk [vmem:[%s1349] sm:$0x1] %vm1345, %v1348
    $region98: #{rmpnn_forward.1} parent=1 // loop_footer
      %s1339 = sadd.s32 1, %s1335
    $region99: #{rmpnn_forward.1} parent=1 // loop_footer_branch
      %1334 = sbr.rel target = $region95
    $region100: #{rmpnn_forward.1} parent=1 // loop_exit
      _
    %v1351 = vld [vmem:[#allocation2] sm:$0xff]
    %v1352 = vld [vmem:[#allocation2 + $0x8] sm:$0xff]
    %v1353 = vld [vmem:[#allocation2 + $0x10] sm:$0xff]
    %v1354 = vld [vmem:[#allocation2 + $0x18] sm:$0xff]
    %v1355 = vld [vmem:[#allocation2 + $0x20] sm:$0xff]
    %v1356 = vld [vmem:[#allocation2 + $0x28] sm:$0xff]
    %v1357 = vld [vmem:[#allocation3] sm:$0xff]
    %v1358 = vld [vmem:[#allocation3 + $0x8] sm:$0xff]
    %v1359 = vld [vmem:[#allocation3 + $0x10] sm:$0xff]
    %v1360 = vld [vmem:[#allocation3 + $0x18] sm:$0xff]
    %v1361 = vld [vmem:[#allocation3 + $0x20] sm:$0xff]
    %v1362 = vld [vmem:[#allocation3 + $0x28] sm:$0xff]
    %1369 = vrot.lane.b32.xlu0 %v1357, 64
    %v1370 = vpop.permute.xlu0 %1369
    %1371 = vrot.lane.b32.xlu0 %v1358, 64
    %v1372 = vpop.permute.xlu0 %1371
    %1373 = vrot.lane.b32.xlu0 %v1359, 64
    %v1374 = vpop.permute.xlu0 %1373
    %1375 = vrot.lane.b32.xlu0 %v1360, 64
    %v1376 = vpop.permute.xlu0 %1375
    %1377 = vrot.lane.b32.xlu0 %v1361, 64
    %v1378 = vpop.permute.xlu0 %1377
    %1379 = vrot.lane.b32.xlu0 %v1362, 64
    %v1380 = vpop.permute.xlu0 %1379
    %v1387 = vsel %vm179, %v1351, %v1370
    %v1388 = vsel %vm179, %v1352, %v1372
    %v1389 = vsel %vm179, %v1353, %v1374
    %v1390 = vsel %vm179, %v1354, %v1376
    %v1391 = vsel %vm179, %v1355, %v1378
    %v1392 = vsel %vm179, %v1356, %v1380
    %s1393 = scalar_lea.vmem %s6, 272
    %v1394 = vld [vmem:[%s1393] sm:$0xff]
    %v1395 = vld [vmem:[%s1393 + $0x8] sm:$0xff]
    %v1396 = vld [vmem:[%s1393 + $0x10] sm:$0xff]
    %v1397 = vld [vmem:[%s1393 + $0x18] sm:$0xff]
    %v1398 = vld [vmem:[%s1393 + $0x20] sm:$0xff]
    %v1399 = vld [vmem:[%s1393 + $0x28] sm:$0xff]
    %v1400 = vld [vmem:[%s1393 + $0x30] sm:$0xff]
    %v1401 = vld [vmem:[%s1393 + $0x38] sm:$0xff]
    %v1402 = vld [vmem:[%s1393 + $0x40] sm:$0xff]
    %v1403 = vld [vmem:[%s1393 + $0x48] sm:$0xff]
    %v1404 = vld [vmem:[%s1393 + $0x50] sm:$0xff]
    %v1405 = vld [vmem:[%s1393 + $0x58] sm:$0xff]
    %v1406 = vld [vmem:[%s1393 + $0x60] sm:$0xff]
    %v1407 = vld [vmem:[%s1393 + $0x68] sm:$0xff]
    %v1408 = vld [vmem:[%s1393 + $0x70] sm:$0xff]
    %v1409 = vld [vmem:[%s1393 + $0x78] sm:$0xff]
    %v1410 = vld [vmem:[%s1393 + $0x80] sm:$0xf]
    %s1411 = scalar_lea.vmem %s7, 2
    %v1412 = vld [vmem:[%s1411] sm:$0x1]
    %v1414 = vlaneseq
    %v1415 = vshrl.u32 %v1414, 7
    %v1416 = vsub.s32 0, %v1415
    %v1417 = vrot.slane %v1412, %v1416
    %v1420 = vsel %vm290, %v1410, 0
    %1422 = vmatprep.subr.mxu0 0.0
    %1423 = vmatpush1.msra.mxu0 %v1394
    %1424 = vmatprep.subr.mxu0 0.0
    %1425 = vmatpush1.msra.mxu0 %v1395
    %1426 = vmatprep.subr.mxu0 0.0
    %1427 = vmatpush1.msra.mxu0 %v1396
    %1428 = vmatprep.subr.mxu0 0.0
    %1429 = vmatpush1.msra.mxu0 %v1397
    %1430 = vmatprep.subr.mxu0 0.0
    %1431 = vmatpush1.msra.mxu0 %v1398
    %1432 = vmatprep.subr.mxu0 0.0
    %1433 = vmatpush1.msra.mxu0 %v1399
    %1434 = vmatprep.subr.mxu0 0.0
    %1435 = vmatpush1.msra.mxu0 %v1400
    %1436 = vmatprep.subr.mxu0 0.0
    %1437 = vmatpush1.msra.mxu0 %v1401
    %1438 = vmatprep.subr.mxu0 0.0
    %1439 = vmatpush1.msra.mxu0 %v1402
    %1440 = vmatprep.subr.mxu0 0.0
    %1441 = vmatpush1.msra.mxu0 %v1403
    %1442 = vmatprep.subr.mxu0 0.0
    %1443 = vmatpush1.msra.mxu0 %v1404
    %1444 = vmatprep.subr.mxu0 0.0
    %1445 = vmatpush1.msra.mxu0 %v1405
    %1446 = vmatprep.subr.mxu0 0.0
    %1447 = vmatpush1.msra.mxu0 %v1406
    %1448 = vmatprep.subr.mxu0 0.0
    %1449 = vmatpush1.msra.mxu0 %v1407
    %1450 = vmatprep.subr.mxu0 0.0
    %1451 = vmatpush1.msra.mxu0 %v1408
    %1452 = vmatprep.subr.mxu0 0.0
    %1453 = vmatpush1.msra.mxu0 %v1409
    %1454 = vmatprep.subr.mxu0 0.0
    %1455 = vmatpush1.msra.mxu0 %v1420
    %1456 = vmatprep.subr.mxu0 0.0
    %1457 = vmatpush1.msra.mxu0 0.0
    %1458 = vmatprep.subr.mxu0 0.0
    %1459 = vmatpush1.msra.mxu0 0.0
    %1460 = vmatprep.subr.mxu0 0.0
    %1461 = vmatpush1.msra.mxu0 0.0
    %1462 = vmatprep.subr.mxu0 0.0
    %1463 = vmatpush1.msra.mxu0 0.0
    %1464 = vmatprep.subr.mxu0 0.0
    %1465 = vmatpush1.msra.mxu0 0.0
    %1466 = vmatprep.subr.mxu0 0.0
    %1467 = vmatpush1.msra.mxu0 0.0
    %1468 = vmatprep.subr.mxu0 0.0
    %1469 = vmatpush1.msra.mxu0 0.0
    %1470 = vmatprep.subr.mxu0 0.0
    %1471 = vmatpush1.msra.mxu0 0.0
    %1472 = vmatprep.subr.mxu0 0.0
    %1473 = vmatpush1.msra.mxu0 0.0
    %1474 = vmatprep.subr.mxu0 0.0
    %1475 = vmatpush1.msra.mxu0 0.0
    %1476 = vmatprep.subr.mxu0 0.0
    %1477 = vmatpush1.msra.mxu0 0.0
    %1478 = vmatprep.subr.mxu0 0.0
    %1479 = vmatpush1.msra.mxu0 0.0
    %1480 = vmatprep.subr.mxu0 0.0
    %1481 = vmatpush1.msra.mxu0 0.0
    %1482 = vmatprep.subr.mxu0 0.0
    %1483 = vmatpush1.msra.mxu0 0.0
    %1484 = vmatprep.subr.mxu0 0.0
    %1485 = vmatpush1.msra.mxu0 0.0
    %1486 = vmatprep.mubr.f32.mxu0 %v273
    %1487 = vmatmul.mubr.f32.gmra.mrb[0].mxu0 %v1387
    %v1488 = vpop.f32.mrb[0].mxu0
    %v1489 = vadd.f32 %v1417, %v1488
    %v1490 = vpop.f32.mrb[0].mxu0
    %1491 = vmatprep.mubr.f32.mxu0 %v276
    %1492 = vmatmul.mubr.f32.gmra.mrb[0].mxu0 %v1388
    %v1493 = vpop.f32.mrb[0].mxu0
    %v1494 = vadd.f32 %v1417, %v1493
    %v1495 = vpop.f32.mrb[0].mxu0
    %1496 = vmatprep.mubr.f32.mxu0 %v279
    %1497 = vmatmul.mubr.f32.gmra.mrb[0].mxu0 %v1389
    %v1498 = vpop.f32.mrb[0].mxu0
    %v1499 = vadd.f32 %v1417, %v1498
    %v1500 = vpop.f32.mrb[0].mxu0
    %1501 = vmatprep.mubr.f32.mxu0 %v282
    %1502 = vmatmul.mubr.f32.gmra.mrb[0].mxu0 %v1390
    %v1503 = vpop.f32.mrb[0].mxu0
    %v1504 = vadd.f32 %v1417, %v1503
    %v1505 = vpop.f32.mrb[0].mxu0
    %1506 = vmatprep.mubr.f32.mxu0 %v285
    %1507 = vmatmul.mubr.f32.gmra.mrb[0].mxu0 %v1391
    %v1508 = vpop.f32.mrb[0].mxu0
    %v1509 = vadd.f32 %v1417, %v1508
    %v1510 = vpop.f32.mrb[0].mxu0
    %1511 = vmatprep.mubr.f32.mxu0 %v288
    %1512 = vmatmul.mubr.f32.gmra.mrb[0].mxu0 %v1392
    %v1513 = vpop.f32.mrb[0].mxu0
    %v1514 = vadd.f32 %v1417, %v1513
    %v1515 = vpop.f32.mrb[0].mxu0
    %1516 = vdwg.mxu0
    %v1517 = vmax.f32 %v1489, 0.0
    %v1518 = vmax.f32 %v1494, 0.0
    %v1519 = vmax.f32 %v1499, 0.0
    %v1520 = vmax.f32 %v1504, 0.0
    %v1521 = vmax.f32 %v1509, 0.0
    %v1522 = vmax.f32 %v1514, 0.0
    %s1523 = scalar_lea.vmem %s8, 128
    %v1524 = vld [vmem:[%s1523] sm:$0xff]
    %v1525 = vld [vmem:[%s1523 + $0x8] sm:$0xff]
    %v1526 = vld [vmem:[%s1523 + $0x10] sm:$0xff]
    %v1527 = vld [vmem:[%s1523 + $0x18] sm:$0xff]
    %v1528 = vld [vmem:[%s1523 + $0x20] sm:$0xff]
    %v1529 = vld [vmem:[%s1523 + $0x28] sm:$0xff]
    %v1530 = vld [vmem:[%s1523 + $0x30] sm:$0xff]
    %v1531 = vld [vmem:[%s1523 + $0x38] sm:$0xff]
    %s1532 = scalar_lea.vmem %s9, 2
    %v1533 = vld [vmem:[%s1532] sm:$0x1]
    %v1535 = vlaneseq
    %v1536 = vshrl.u32 %v1535, 7
    %v1537 = vsub.s32 0, %v1536
    %v1538 = vrot.slane %v1533, %v1537
    %v1541 = vsel %vm179, %v1517, 0
    %v1544 = vsel %vm179, %v1518, 0
    %v1547 = vsel %vm179, %v1519, 0
    %v1550 = vsel %vm179, %v1520, 0
    %v1553 = vsel %vm179, %v1521, 0
    %v1556 = vsel %vm179, %v1522, 0
    %1558 = vmatprep.subr.mxu0 0.0
    %1559 = vmatpush1.msra.mxu0 %v1524
    %1560 = vmatprep.subr.mxu0 0.0
    %1561 = vmatpush1.msra.mxu0 %v1525
    %1562 = vmatprep.subr.mxu0 0.0
    %1563 = vmatpush1.msra.mxu0 %v1526
    %1564 = vmatprep.subr.mxu0 0.0
    %1565 = vmatpush1.msra.mxu0 %v1527
    %1566 = vmatprep.subr.mxu0 0.0
    %1567 = vmatpush1.msra.mxu0 %v1528
    %1568 = vmatprep.subr.mxu0 0.0
    %1569 = vmatpush1.msra.mxu0 %v1529
    %1570 = vmatprep.subr.mxu0 0.0
    %1571 = vmatpush1.msra.mxu0 %v1530
    %1572 = vmatprep.subr.mxu0 0.0
    %1573 = vmatpush1.msra.mxu0 %v1531
    %1574 = vmatprep.subr.mxu0 0.0
    %1575 = vmatpush1.msra.mxu0 0.0
    %1576 = vmatprep.subr.mxu0 0.0
    %1577 = vmatpush1.msra.mxu0 0.0
    %1578 = vmatprep.subr.mxu0 0.0
    %1579 = vmatpush1.msra.mxu0 0.0
    %1580 = vmatprep.subr.mxu0 0.0
    %1581 = vmatpush1.msra.mxu0 0.0
    %1582 = vmatprep.subr.mxu0 0.0
    %1583 = vmatpush1.msra.mxu0 0.0
    %1584 = vmatprep.subr.mxu0 0.0
    %1585 = vmatpush1.msra.mxu0 0.0
    %1586 = vmatprep.subr.mxu0 0.0
    %1587 = vmatpush1.msra.mxu0 0.0
    %1588 = vmatprep.subr.mxu0 0.0
    %1589 = vmatpush1.msra.mxu0 0.0
    %1590 = vmatprep.subr.mxu0 0.0
    %1591 = vmatpush1.msra.mxu0 0.0
    %1592 = vmatprep.subr.mxu0 0.0
    %1593 = vmatpush1.msra.mxu0 0.0
    %1594 = vmatprep.subr.mxu0 0.0
    %1595 = vmatpush1.msra.mxu0 0.0
    %1596 = vmatprep.subr.mxu0 0.0
    %1597 = vmatpush1.msra.mxu0 0.0
    %1598 = vmatprep.subr.mxu0 0.0
    %1599 = vmatpush1.msra.mxu0 0.0
    %1600 = vmatprep.subr.mxu0 0.0
    %1601 = vmatpush1.msra.mxu0 0.0
    %1602 = vmatprep.subr.mxu0 0.0
    %1603 = vmatpush1.msra.mxu0 0.0
    %1604 = vmatprep.subr.mxu0 0.0
    %1605 = vmatpush1.msra.mxu0 0.0
    %1606 = vmatprep.subr.mxu0 0.0
    %1607 = vmatpush1.msra.mxu0 0.0
    %1608 = vmatprep.subr.mxu0 0.0
    %1609 = vmatpush1.msra.mxu0 0.0
    %1610 = vmatprep.subr.mxu0 0.0
    %1611 = vmatpush1.msra.mxu0 0.0
    %1612 = vmatprep.subr.mxu0 0.0
    %1613 = vmatpush1.msra.mxu0 0.0
    %1614 = vmatprep.subr.mxu0 0.0
    %1615 = vmatpush1.msra.mxu0 0.0
    %1616 = vmatprep.subr.mxu0 0.0
    %1617 = vmatpush1.msra.mxu0 0.0
    %1618 = vmatprep.subr.mxu0 0.0
    %1619 = vmatpush1.msra.mxu0 0.0
    %1620 = vmatprep.subr.mxu0 0.0
    %1621 = vmatpush1.msra.mxu0 0.0
    %1622 = vmatprep.mubr.f32.mxu0 0.0
    %1623 = vmatmul.mubr.f32.gmra.mrb[0].mxu0 %v1541
    %v1624 = vpop.f32.mrb[0].mxu0
    %v1625 = vadd.f32 %v1538, %v1624
    %v1626 = vpop.f32.mrb[0].mxu0
    %1627 = vmatprep.mubr.f32.mxu0 0.0
    %1628 = vmatmul.mubr.f32.gmra.mrb[0].mxu0 %v1544
    %v1629 = vpop.f32.mrb[0].mxu0
    %v1630 = vadd.f32 %v1538, %v1629
    %v1631 = vpop.f32.mrb[0].mxu0
    %1632 = vmatprep.mubr.f32.mxu0 0.0
    %1633 = vmatmul.mubr.f32.gmra.mrb[0].mxu0 %v1547
    %v1634 = vpop.f32.mrb[0].mxu0
    %v1635 = vadd.f32 %v1538, %v1634
    %v1636 = vpop.f32.mrb[0].mxu0
    %1637 = vmatprep.mubr.f32.mxu0 0.0
    %1638 = vmatmul.mubr.f32.gmra.mrb[0].mxu0 %v1550
    %v1639 = vpop.f32.mrb[0].mxu0
    %v1640 = vadd.f32 %v1538, %v1639
    %v1641 = vpop.f32.mrb[0].mxu0
    %1642 = vmatprep.mubr.f32.mxu0 0.0
    %1643 = vmatmul.mubr.f32.gmra.mrb[0].mxu0 %v1553
    %v1644 = vpop.f32.mrb[0].mxu0
    %v1645 = vadd.f32 %v1538, %v1644
    %v1646 = vpop.f32.mrb[0].mxu0
    %1647 = vmatprep.mubr.f32.mxu0 0.0
    %1648 = vmatmul.mubr.f32.gmra.mrb[0].mxu0 %v1556
    %v1649 = vpop.f32.mrb[0].mxu0
    %v1650 = vadd.f32 %v1538, %v1649
    %v1651 = vpop.f32.mrb[0].mxu0
    %1652 = vdwg.mxu0
    %v1653 = vmax.f32 %v1625, 0.0
    %v1654 = vmax.f32 %v1630, 0.0
    %v1655 = vmax.f32 %v1635, 0.0
    %v1656 = vmax.f32 %v1640, 0.0
    %v1657 = vmax.f32 %v1645, 0.0
    %v1658 = vmax.f32 %v1650, 0.0
    %1659 = vst.msk [vmem:[#allocation4] sm:$0xff] %vm179, %v1653
    %1660 = vst.msk [vmem:[#allocation4 + $0x8] sm:$0xff] %vm179, %v1654
    %1661 = vst.msk [vmem:[#allocation4 + $0x10] sm:$0xff] %vm179, %v1655
    %1662 = vst.msk [vmem:[#allocation4 + $0x18] sm:$0xff] %vm179, %v1656
    %1663 = vst.msk [vmem:[#allocation4 + $0x20] sm:$0xff] %vm179, %v1657
    %1664 = vst.msk [vmem:[#allocation4 + $0x28] sm:$0xff] %vm179, %v1658
    %1665 = vst.msk [vmem:[#allocation5] sm:$0xff] %vm179, 0.0
    %1666 = vst.msk [vmem:[#allocation5 + $0x8] sm:$0xff] %vm179, 0.0
    loop: start=0, step=1, limit=48
    $region101: #{rmpnn_forward.1} parent=1 // loop_pre_header
      _
    $region102: #{rmpnn_forward.1} parent=1 // loop_header
      %s1668 = sphi 0, %s1672
      %p1669 = scmp.ge.s32.totalorder %s1668, 48
    $region103: #{rmpnn_forward.1} parent=1 // loop_header_branch
      %1671 = sbr.rel (%p1669) target = $region107
    $region104: #{rmpnn_forward.1} parent=1 // loop_body
      %s1673 = sld [smem:[#allocation8 + %s1668]]
      %s1674 = scalar_lea.vmem [#allocation5], %s1673
      %v1675 = vld [vmem:[%s1674] sm:$0x1]
      %s1676 = scalar_lea.vmem [#allocation4], %s1668
      %v1677 = vld [vmem:[%s1676] sm:$0x1]
      %v1678 = vadd.f32 %v1675, %v1677
      %vm1679 = vcmask 516096
      %1680 = vst.msk [vmem:[%s1674] sm:$0x1] %vm1679, %v1678
    $region105: #{rmpnn_forward.1} parent=1 // loop_footer
      %s1672 = sadd.s32 1, %s1668
    $region106: #{rmpnn_forward.1} parent=1 // loop_footer_branch
      %1667 = sbr.rel target = $region102
    $region107: #{rmpnn_forward.1} parent=1 // loop_exit
      _
    %v1681 = vld [vmem:[%s14] sm:$0xff]
    %v1682 = vld [vmem:[%s14 + $0x8] sm:$0xff]
    %v1683 = vld [vmem:[#allocation5] sm:$0xff]
    %v1684 = vld [vmem:[#allocation5 + $0x8] sm:$0xff]
    %1687 = vrot.lane.b32.xlu0 %v1683, 64
    %v1688 = vpop.permute.xlu0 %1687
    %1689 = vrot.lane.b32.xlu0 %v1684, 64
    %v1690 = vpop.permute.xlu0 %1689
    %v1693 = vsel %vm179, %v1681, %v1688
    %v1694 = vsel %vm179, %v1682, %v1690
    %s1695 = scalar_lea.vmem %s10, 256
    %v1696 = vld [vmem:[%s1695] sm:$0xff]
    %v1697 = vld [vmem:[%s1695 + $0x8] sm:$0xff]
    %v1698 = vld [vmem:[%s1695 + $0x10] sm:$0xff]
    %v1699 = vld [vmem:[%s1695 + $0x18] sm:$0xff]
    %v1700 = vld [vmem:[%s1695 + $0x20] sm:$0xff]
    %v1701 = vld [vmem:[%s1695 + $0x28] sm:$0xff]
    %v1702 = vld [vmem:[%s1695 + $0x30] sm:$0xff]
    %v1703 = vld [vmem:[%s1695 + $0x38] sm:$0xff]
    %v1704 = vld [vmem:[%s1695 + $0x40] sm:$0xff]
    %v1705 = vld [vmem:[%s1695 + $0x48] sm:$0xff]
    %v1706 = vld [vmem:[%s1695 + $0x50] sm:$0xff]
    %v1707 = vld [vmem:[%s1695 + $0x58] sm:$0xff]
    %v1708 = vld [vmem:[%s1695 + $0x60] sm:$0xff]
    %v1709 = vld [vmem:[%s1695 + $0x68] sm:$0xff]
    %v1710 = vld [vmem:[%s1695 + $0x70] sm:$0xff]
    %v1711 = vld [vmem:[%s1695 + $0x78] sm:$0xff]
    %s1712 = scalar_lea.vmem %s11, 2
    %v1713 = vld [vmem:[%s1712] sm:$0x1]
    %v1715 = vlaneseq
    %v1716 = vshrl.u32 %v1715, 7
    %v1717 = vsub.s32 0, %v1716
    %v1718 = vrot.slane %v1713, %v1717
    %1720 = vmatprep.subr.mxu0 0.0
    %1721 = vmatpush1.msra.mxu0 %v1696
    %1722 = vmatprep.subr.mxu0 0.0
    %1723 = vmatpush1.msra.mxu0 %v1697
    %1724 = vmatprep.subr.mxu0 0.0
    %1725 = vmatpush1.msra.mxu0 %v1698
    %1726 = vmatprep.subr.mxu0 0.0
    %1727 = vmatpush1.msra.mxu0 %v1699
    %1728 = vmatprep.subr.mxu0 0.0
    %1729 = vmatpush1.msra.mxu0 %v1700
    %1730 = vmatprep.subr.mxu0 0.0
    %1731 = vmatpush1.msra.mxu0 %v1701
    %1732 = vmatprep.subr.mxu0 0.0
    %1733 = vmatpush1.msra.mxu0 %v1702
    %1734 = vmatprep.subr.mxu0 0.0
    %1735 = vmatpush1.msra.mxu0 %v1703
    %1736 = vmatprep.subr.mxu0 0.0
    %1737 = vmatpush1.msra.mxu0 %v1704
    %1738 = vmatprep.subr.mxu0 0.0
    %1739 = vmatpush1.msra.mxu0 %v1705
    %1740 = vmatprep.subr.mxu0 0.0
    %1741 = vmatpush1.msra.mxu0 %v1706
    %1742 = vmatprep.subr.mxu0 0.0
    %1743 = vmatpush1.msra.mxu0 %v1707
    %1744 = vmatprep.subr.mxu0 0.0
    %1745 = vmatpush1.msra.mxu0 %v1708
    %1746 = vmatprep.subr.mxu0 0.0
    %1747 = vmatpush1.msra.mxu0 %v1709
    %1748 = vmatprep.subr.mxu0 0.0
    %1749 = vmatpush1.msra.mxu0 %v1710
    %1750 = vmatprep.subr.mxu0 0.0
    %1751 = vmatpush1.msra.mxu0 %v1711
    %1752 = vmatprep.subr.mxu0 0.0
    %1753 = vmatpush1.msra.mxu0 0.0
    %1754 = vmatprep.subr.mxu0 0.0
    %1755 = vmatpush1.msra.mxu0 0.0
    %1756 = vmatprep.subr.mxu0 0.0
    %1757 = vmatpush1.msra.mxu0 0.0
    %1758 = vmatprep.subr.mxu0 0.0
    %1759 = vmatpush1.msra.mxu0 0.0
    %1760 = vmatprep.subr.mxu0 0.0
    %1761 = vmatpush1.msra.mxu0 0.0
    %1762 = vmatprep.subr.mxu0 0.0
    %1763 = vmatpush1.msra.mxu0 0.0
    %1764 = vmatprep.subr.mxu0 0.0
    %1765 = vmatpush1.msra.mxu0 0.0
    %1766 = vmatprep.subr.mxu0 0.0
    %1767 = vmatpush1.msra.mxu0 0.0
    %1768 = vmatprep.subr.mxu0 0.0
    %1769 = vmatpush1.msra.mxu0 0.0
    %1770 = vmatprep.subr.mxu0 0.0
    %1771 = vmatpush1.msra.mxu0 0.0
    %1772 = vmatprep.subr.mxu0 0.0
    %1773 = vmatpush1.msra.mxu0 0.0
    %1774 = vmatprep.subr.mxu0 0.0
    %1775 = vmatpush1.msra.mxu0 0.0
    %1776 = vmatprep.subr.mxu0 0.0
    %1777 = vmatpush1.msra.mxu0 0.0
    %1778 = vmatprep.subr.mxu0 0.0
    %1779 = vmatpush1.msra.mxu0 0.0
    %1780 = vmatprep.subr.mxu0 0.0
    %1781 = vmatpush1.msra.mxu0 0.0
    %1782 = vmatprep.subr.mxu0 0.0
    %1783 = vmatpush1.msra.mxu0 0.0
    %1784 = vmatprep.mubr.f32.mxu0 0.0
    %1785 = vmatmul.mubr.f32.gmra.mrb[0].mxu0 %v1693
    %v1786 = vpop.f32.mrb[0].mxu0
    %v1787 = vadd.f32 %v1718, %v1786
    %v1788 = vpop.f32.mrb[0].mxu0
    %1789 = vmatprep.mubr.f32.mxu0 0.0
    %1790 = vmatmul.mubr.f32.gmra.mrb[0].mxu0 %v1694
    %v1791 = vpop.f32.mrb[0].mxu0
    %v1792 = vadd.f32 %v1718, %v1791
    %v1793 = vpop.f32.mrb[0].mxu0
    %1794 = vdwg.mxu0
    %v1795 = vmax.f32 %v1787, 0.0
    %v1796 = vmax.f32 %v1792, 0.0
    %s1797 = scalar_lea.vmem %s12, 128
    %v1798 = vld [vmem:[%s1797] sm:$0xff]
    %v1799 = vld [vmem:[%s1797 + $0x8] sm:$0xff]
    %v1800 = vld [vmem:[%s1797 + $0x10] sm:$0xff]
    %v1801 = vld [vmem:[%s1797 + $0x18] sm:$0xff]
    %v1802 = vld [vmem:[%s1797 + $0x20] sm:$0xff]
    %v1803 = vld [vmem:[%s1797 + $0x28] sm:$0xff]
    %v1804 = vld [vmem:[%s1797 + $0x30] sm:$0xff]
    %v1805 = vld [vmem:[%s1797 + $0x38] sm:$0xff]
    %s1806 = scalar_lea.vmem %s13, 2
    %v1807 = vld [vmem:[%s1806] sm:$0x1]
    %v1809 = vlaneseq
    %v1810 = vshrl.u32 %v1809, 7
    %v1811 = vsub.s32 0, %v1810
    %v1812 = vrot.slane %v1807, %v1811
    %v1815 = vsel %vm179, %v1795, 0
    %v1818 = vsel %vm179, %v1796, 0
    %1820 = vmatprep.subr.mxu0 0.0
    %1821 = vmatpush1.msra.mxu0 %v1798
    %1822 = vmatprep.subr.mxu0 0.0
    %1823 = vmatpush1.msra.mxu0 %v1799
    %1824 = vmatprep.subr.mxu0 0.0
    %1825 = vmatpush1.msra.mxu0 %v1800
    %1826 = vmatprep.subr.mxu0 0.0
    %1827 = vmatpush1.msra.mxu0 %v1801
    %1828 = vmatprep.subr.mxu0 0.0
    %1829 = vmatpush1.msra.mxu0 %v1802
    %1830 = vmatprep.subr.mxu0 0.0
    %1831 = vmatpush1.msra.mxu0 %v1803
    %1832 = vmatprep.subr.mxu0 0.0
    %1833 = vmatpush1.msra.mxu0 %v1804
    %1834 = vmatprep.subr.mxu0 0.0
    %1835 = vmatpush1.msra.mxu0 %v1805
    %1836 = vmatprep.subr.mxu0 0.0
    %1837 = vmatpush1.msra.mxu0 0.0
    %1838 = vmatprep.subr.mxu0 0.0
    %1839 = vmatpush1.msra.mxu0 0.0
    %1840 = vmatprep.subr.mxu0 0.0
    %1841 = vmatpush1.msra.mxu0 0.0
    %1842 = vmatprep.subr.mxu0 0.0
    %1843 = vmatpush1.msra.mxu0 0.0
    %1844 = vmatprep.subr.mxu0 0.0
    %1845 = vmatpush1.msra.mxu0 0.0
    %1846 = vmatprep.subr.mxu0 0.0
    %1847 = vmatpush1.msra.mxu0 0.0
    %1848 = vmatprep.subr.mxu0 0.0
    %1849 = vmatpush1.msra.mxu0 0.0
    %1850 = vmatprep.subr.mxu0 0.0
    %1851 = vmatpush1.msra.mxu0 0.0
    %1852 = vmatprep.subr.mxu0 0.0
    %1853 = vmatpush1.msra.mxu0 0.0
    %1854 = vmatprep.subr.mxu0 0.0
    %1855 = vmatpush1.msra.mxu0 0.0
    %1856 = vmatprep.subr.mxu0 0.0
    %1857 = vmatpush1.msra.mxu0 0.0
    %1858 = vmatprep.subr.mxu0 0.0
    %1859 = vmatpush1.msra.mxu0 0.0
    %1860 = vmatprep.subr.mxu0 0.0
    %1861 = vmatpush1.msra.mxu0 0.0
    %1862 = vmatprep.subr.mxu0 0.0
    %1863 = vmatpush1.msra.mxu0 0.0
    %1864 = vmatprep.subr.mxu0 0.0
    %1865 = vmatpush1.msra.mxu0 0.0
    %1866 = vmatprep.subr.mxu0 0.0
    %1867 = vmatpush1.msra.mxu0 0.0
    %1868 = vmatprep.subr.mxu0 0.0
    %1869 = vmatpush1.msra.mxu0 0.0
    %1870 = vmatprep.subr.mxu0 0.0
    %1871 = vmatpush1.msra.mxu0 0.0
    %1872 = vmatprep.subr.mxu0 0.0
    %1873 = vmatpush1.msra.mxu0 0.0
    %1874 = vmatprep.subr.mxu0 0.0
    %1875 = vmatpush1.msra.mxu0 0.0
    %1876 = vmatprep.subr.mxu0 0.0
    %1877 = vmatpush1.msra.mxu0 0.0
    %1878 = vmatprep.subr.mxu0 0.0
    %1879 = vmatpush1.msra.mxu0 0.0
    %1880 = vmatprep.subr.mxu0 0.0
    %1881 = vmatpush1.msra.mxu0 0.0
    %1882 = vmatprep.subr.mxu0 0.0
    %1883 = vmatpush1.msra.mxu0 0.0
    %1884 = vmatprep.mubr.f32.mxu0 0.0
    %1885 = vmatmul.mubr.f32.gmra.mrb[0].mxu0 %v1815
    %v1886 = vpop.f32.mrb[0].mxu0
    %v1887 = vadd.f32 %v1812, %v1886
    %v1888 = vpop.f32.mrb[0].mxu0
    %1889 = vmatprep.mubr.f32.mxu0 0.0
    %1890 = vmatmul.mubr.f32.gmra.mrb[0].mxu0 %v1818
    %v1891 = vpop.f32.mrb[0].mxu0
    %v1892 = vadd.f32 %v1812, %v1891
    %v1893 = vpop.f32.mrb[0].mxu0
    %1894 = vdwg.mxu0
    %v1895 = vmax.f32 %v1887, 0.0
    %v1896 = vmax.f32 %v1892, 0.0
    %v1897 = vadd.f32 %v1681, %v1895
    %v1898 = vadd.f32 %v1682, %v1896
    %1899 = vst.msk [vmem:[%s14] sm:$0xff] %vm179, %v1897
    %1900 = vst.msk [vmem:[%s14 + $0x8] sm:$0xff] %vm179, %v1898
    loop: start=0, step=1, limit=48
    $region108: #{rmpnn_forward.1} parent=1 // loop_pre_header
      _
    $region109: #{rmpnn_forward.1} parent=1 // loop_header
      %s1902 = sphi 0, %s1906
      %p1903 = scmp.ge.s32.totalorder %s1902, 48
    $region110: #{rmpnn_forward.1} parent=1 // loop_header_branch
      %1905 = sbr.rel (%p1903) target = $region114
    $region111: #{rmpnn_forward.1} parent=1 // loop_body
      %s1907 = sld [smem:[#allocation8 + %s1902]]
      %s1908 = sld [smem:[#allocation6 + %s1902]]
      %s1909 = scalar_lea.vmem %s14, %s1907
      %v1910 = vld [vmem:[%s1909] sm:$0x1]
      %s1911 = scalar_lea.vmem [#allocation2], %s1902
      %vm1912 = vcmask 516096
      %1913 = vst.msk [vmem:[%s1911] sm:$0x1] %vm1912, %v1910
      %s1914 = scalar_lea.vmem %s14, %s1908
      %v1915 = vld [vmem:[%s1914] sm:$0x1]
      %s1916 = scalar_lea.vmem [#allocation3], %s1902
      %1917 = vst.msk [vmem:[%s1916] sm:$0x1] %vm1912, %v1915
    $region112: #{rmpnn_forward.1} parent=1 // loop_footer
      %s1906 = sadd.s32 1, %s1902
    $region113: #{rmpnn_forward.1} parent=1 // loop_footer_branch
      %1901 = sbr.rel target = $region109
    $region114: #{rmpnn_forward.1} parent=1 // loop_exit
      _
    %v1918 = vld [vmem:[#allocation2] sm:$0xff]
    %v1919 = vld [vmem:[#allocation2 + $0x8] sm:$0xff]
    %v1920 = vld [vmem:[#allocation2 + $0x10] sm:$0xff]
    %v1921 = vld [vmem:[#allocation2 + $0x18] sm:$0xff]
    %v1922 = vld [vmem:[#allocation2 + $0x20] sm:$0xff]
    %v1923 = vld [vmem:[#allocation2 + $0x28] sm:$0xff]
    %v1924 = vld [vmem:[#allocation3] sm:$0xff]
    %v1925 = vld [vmem:[#allocation3 + $0x8] sm:$0xff]
    %v1926 = vld [vmem:[#allocation3 + $0x10] sm:$0xff]
    %v1927 = vld [vmem:[#allocation3 + $0x18] sm:$0xff]
    %v1928 = vld [vmem:[#allocation3 + $0x20] sm:$0xff]
    %v1929 = vld [vmem:[#allocation3 + $0x28] sm:$0xff]
    %1936 = vrot.lane.b32.xlu0 %v1924, 64
    %v1937 = vpop.permute.xlu0 %1936
    %1938 = vrot.lane.b32.xlu0 %v1925, 64
    %v1939 = vpop.permute.xlu0 %1938
    %1940 = vrot.lane.b32.xlu0 %v1926, 64
    %v1941 = vpop.permute.xlu0 %1940
    %1942 = vrot.lane.b32.xlu0 %v1927, 64
    %v1943 = vpop.permute.xlu0 %1942
    %1944 = vrot.lane.b32.xlu0 %v1928, 64
    %v1945 = vpop.permute.xlu0 %1944
    %1946 = vrot.lane.b32.xlu0 %v1929, 64
    %v1947 = vpop.permute.xlu0 %1946
    %v1954 = vsel %vm179, %v1918, %v1937
    %v1955 = vsel %vm179, %v1919, %v1939
    %v1956 = vsel %vm179, %v1920, %v1941
    %v1957 = vsel %vm179, %v1921, %v1943
    %v1958 = vsel %vm179, %v1922, %v1945
    %v1959 = vsel %vm179, %v1923, %v1947
    %s1960 = scalar_lea.vmem %s6, 408
    %v1961 = vld [vmem:[%s1960] sm:$0xff]
    %v1962 = vld [vmem:[%s1960 + $0x8] sm:$0xff]
    %v1963 = vld [vmem:[%s1960 + $0x10] sm:$0xff]
    %v1964 = vld [vmem:[%s1960 + $0x18] sm:$0xff]
    %v1965 = vld [vmem:[%s1960 + $0x20] sm:$0xff]
    %v1966 = vld [vmem:[%s1960 + $0x28] sm:$0xff]
    %v1967 = vld [vmem:[%s1960 + $0x30] sm:$0xff]
    %v1968 = vld [vmem:[%s1960 + $0x38] sm:$0xff]
    %v1969 = vld [vmem:[%s1960 + $0x40] sm:$0xff]
    %v1970 = vld [vmem:[%s1960 + $0x48] sm:$0xff]
    %v1971 = vld [vmem:[%s1960 + $0x50] sm:$0xff]
    %v1972 = vld [vmem:[%s1960 + $0x58] sm:$0xff]
    %v1973 = vld [vmem:[%s1960 + $0x60] sm:$0xff]
    %v1974 = vld [vmem:[%s1960 + $0x68] sm:$0xff]
    %v1975 = vld [vmem:[%s1960 + $0x70] sm:$0xff]
    %v1976 = vld [vmem:[%s1960 + $0x78] sm:$0xff]
    %v1977 = vld [vmem:[%s1960 + $0x80] sm:$0xf]
    %s1978 = scalar_lea.vmem %s7, 3
    %v1979 = vld [vmem:[%s1978] sm:$0x1]
    %v1981 = vlaneseq
    %v1982 = vshrl.u32 %v1981, 7
    %v1983 = vsub.s32 0, %v1982
    %v1984 = vrot.slane %v1979, %v1983
    %v1987 = vsel %vm290, %v1977, 0
    %1989 = vmatprep.subr.mxu0 0.0
    %1990 = vmatpush1.msra.mxu0 %v1961
    %1991 = vmatprep.subr.mxu0 0.0
    %1992 = vmatpush1.msra.mxu0 %v1962
    %1993 = vmatprep.subr.mxu0 0.0
    %1994 = vmatpush1.msra.mxu0 %v1963
    %1995 = vmatprep.subr.mxu0 0.0
    %1996 = vmatpush1.msra.mxu0 %v1964
    %1997 = vmatprep.subr.mxu0 0.0
    %1998 = vmatpush1.msra.mxu0 %v1965
    %1999 = vmatprep.subr.mxu0 0.0
    %2000 = vmatpush1.msra.mxu0 %v1966
    %2001 = vmatprep.subr.mxu0 0.0
    %2002 = vmatpush1.msra.mxu0 %v1967
    %2003 = vmatprep.subr.mxu0 0.0
    %2004 = vmatpush1.msra.mxu0 %v1968
    %2005 = vmatprep.subr.mxu0 0.0
    %2006 = vmatpush1.msra.mxu0 %v1969
    %2007 = vmatprep.subr.mxu0 0.0
    %2008 = vmatpush1.msra.mxu0 %v1970
    %2009 = vmatprep.subr.mxu0 0.0
    %2010 = vmatpush1.msra.mxu0 %v1971
    %2011 = vmatprep.subr.mxu0 0.0
    %2012 = vmatpush1.msra.mxu0 %v1972
    %2013 = vmatprep.subr.mxu0 0.0
    %2014 = vmatpush1.msra.mxu0 %v1973
    %2015 = vmatprep.subr.mxu0 0.0
    %2016 = vmatpush1.msra.mxu0 %v1974
    %2017 = vmatprep.subr.mxu0 0.0
    %2018 = vmatpush1.msra.mxu0 %v1975
    %2019 = vmatprep.subr.mxu0 0.0
    %2020 = vmatpush1.msra.mxu0 %v1976
    %2021 = vmatprep.subr.mxu0 0.0
    %2022 = vmatpush1.msra.mxu0 %v1987
    %2023 = vmatprep.subr.mxu0 0.0
    %2024 = vmatpush1.msra.mxu0 0.0
    %2025 = vmatprep.subr.mxu0 0.0
    %2026 = vmatpush1.msra.mxu0 0.0
    %2027 = vmatprep.subr.mxu0 0.0
    %2028 = vmatpush1.msra.mxu0 0.0
    %2029 = vmatprep.subr.mxu0 0.0
    %2030 = vmatpush1.msra.mxu0 0.0
    %2031 = vmatprep.subr.mxu0 0.0
    %2032 = vmatpush1.msra.mxu0 0.0
    %2033 = vmatprep.subr.mxu0 0.0
    %2034 = vmatpush1.msra.mxu0 0.0
    %2035 = vmatprep.subr.mxu0 0.0
    %2036 = vmatpush1.msra.mxu0 0.0
    %2037 = vmatprep.subr.mxu0 0.0
    %2038 = vmatpush1.msra.mxu0 0.0
    %2039 = vmatprep.subr.mxu0 0.0
    %2040 = vmatpush1.msra.mxu0 0.0
    %2041 = vmatprep.subr.mxu0 0.0
    %2042 = vmatpush1.msra.mxu0 0.0
    %2043 = vmatprep.subr.mxu0 0.0
    %2044 = vmatpush1.msra.mxu0 0.0
    %2045 = vmatprep.subr.mxu0 0.0
    %2046 = vmatpush1.msra.mxu0 0.0
    %2047 = vmatprep.subr.mxu0 0.0
    %2048 = vmatpush1.msra.mxu0 0.0
    %2049 = vmatprep.subr.mxu0 0.0
    %2050 = vmatpush1.msra.mxu0 0.0
    %2051 = vmatprep.subr.mxu0 0.0
    %2052 = vmatpush1.msra.mxu0 0.0
    %2053 = vmatprep.mubr.f32.mxu0 %v273
    %2054 = vmatmul.mubr.f32.gmra.mrb[0].mxu0 %v1954
    %v2055 = vpop.f32.mrb[0].mxu0
    %v2056 = vadd.f32 %v1984, %v2055
    %v2057 = vpop.f32.mrb[0].mxu0
    %2058 = vmatprep.mubr.f32.mxu0 %v276
    %2059 = vmatmul.mubr.f32.gmra.mrb[0].mxu0 %v1955
    %v2060 = vpop.f32.mrb[0].mxu0
    %v2061 = vadd.f32 %v1984, %v2060
    %v2062 = vpop.f32.mrb[0].mxu0
    %2063 = vmatprep.mubr.f32.mxu0 %v279
    %2064 = vmatmul.mubr.f32.gmra.mrb[0].mxu0 %v1956
    %v2065 = vpop.f32.mrb[0].mxu0
    %v2066 = vadd.f32 %v1984, %v2065
    %v2067 = vpop.f32.mrb[0].mxu0
    %2068 = vmatprep.mubr.f32.mxu0 %v282
    %2069 = vmatmul.mubr.f32.gmra.mrb[0].mxu0 %v1957
    %v2070 = vpop.f32.mrb[0].mxu0
    %v2071 = vadd.f32 %v1984, %v2070
    %v2072 = vpop.f32.mrb[0].mxu0
    %2073 = vmatprep.mubr.f32.mxu0 %v285
    %2074 = vmatmul.mubr.f32.gmra.mrb[0].mxu0 %v1958
    %v2075 = vpop.f32.mrb[0].mxu0
    %v2076 = vadd.f32 %v1984, %v2075
    %v2077 = vpop.f32.mrb[0].mxu0
    %2078 = vmatprep.mubr.f32.mxu0 %v288
    %2079 = vmatmul.mubr.f32.gmra.mrb[0].mxu0 %v1959
    %v2080 = vpop.f32.mrb[0].mxu0
    %v2081 = vadd.f32 %v1984, %v2080
    %v2082 = vpop.f32.mrb[0].mxu0
    %2083 = vdwg.mxu0
    %v2084 = vmax.f32 %v2056, 0.0
    %v2085 = vmax.f32 %v2061, 0.0
    %v2086 = vmax.f32 %v2066, 0.0
    %v2087 = vmax.f32 %v2071, 0.0
    %v2088 = vmax.f32 %v2076, 0.0
    %v2089 = vmax.f32 %v2081, 0.0
    %s2090 = scalar_lea.vmem %s8, 192
    %v2091 = vld [vmem:[%s2090] sm:$0xff]
    %v2092 = vld [vmem:[%s2090 + $0x8] sm:$0xff]
    %v2093 = vld [vmem:[%s2090 + $0x10] sm:$0xff]
    %v2094 = vld [vmem:[%s2090 + $0x18] sm:$0xff]
    %v2095 = vld [vmem:[%s2090 + $0x20] sm:$0xff]
    %v2096 = vld [vmem:[%s2090 + $0x28] sm:$0xff]
    %v2097 = vld [vmem:[%s2090 + $0x30] sm:$0xff]
    %v2098 = vld [vmem:[%s2090 + $0x38] sm:$0xff]
    %s2099 = scalar_lea.vmem %s9, 3
    %v2100 = vld [vmem:[%s2099] sm:$0x1]
    %v2102 = vlaneseq
    %v2103 = vshrl.u32 %v2102, 7
    %v2104 = vsub.s32 0, %v2103
    %v2105 = vrot.slane %v2100, %v2104
    %v2108 = vsel %vm179, %v2084, 0
    %v2111 = vsel %vm179, %v2085, 0
    %v2114 = vsel %vm179, %v2086, 0
    %v2117 = vsel %vm179, %v2087, 0
    %v2120 = vsel %vm179, %v2088, 0
    %v2123 = vsel %vm179, %v2089, 0
    %2125 = vmatprep.subr.mxu0 0.0
    %2126 = vmatpush1.msra.mxu0 %v2091
    %2127 = vmatprep.subr.mxu0 0.0
    %2128 = vmatpush1.msra.mxu0 %v2092
    %2129 = vmatprep.subr.mxu0 0.0
    %2130 = vmatpush1.msra.mxu0 %v2093
    %2131 = vmatprep.subr.mxu0 0.0
    %2132 = vmatpush1.msra.mxu0 %v2094
    %2133 = vmatprep.subr.mxu0 0.0
    %2134 = vmatpush1.msra.mxu0 %v2095
    %2135 = vmatprep.subr.mxu0 0.0
    %2136 = vmatpush1.msra.mxu0 %v2096
    %2137 = vmatprep.subr.mxu0 0.0
    %2138 = vmatpush1.msra.mxu0 %v2097
    %2139 = vmatprep.subr.mxu0 0.0
    %2140 = vmatpush1.msra.mxu0 %v2098
    %2141 = vmatprep.subr.mxu0 0.0
    %2142 = vmatpush1.msra.mxu0 0.0
    %2143 = vmatprep.subr.mxu0 0.0
    %2144 = vmatpush1.msra.mxu0 0.0
    %2145 = vmatprep.subr.mxu0 0.0
    %2146 = vmatpush1.msra.mxu0 0.0
    %2147 = vmatprep.subr.mxu0 0.0
    %2148 = vmatpush1.msra.mxu0 0.0
    %2149 = vmatprep.subr.mxu0 0.0
    %2150 = vmatpush1.msra.mxu0 0.0
    %2151 = vmatprep.subr.mxu0 0.0
    %2152 = vmatpush1.msra.mxu0 0.0
    %2153 = vmatprep.subr.mxu0 0.0
    %2154 = vmatpush1.msra.mxu0 0.0
    %2155 = vmatprep.subr.mxu0 0.0
    %2156 = vmatpush1.msra.mxu0 0.0
    %2157 = vmatprep.subr.mxu0 0.0
    %2158 = vmatpush1.msra.mxu0 0.0
    %2159 = vmatprep.subr.mxu0 0.0
    %2160 = vmatpush1.msra.mxu0 0.0
    %2161 = vmatprep.subr.mxu0 0.0
    %2162 = vmatpush1.msra.mxu0 0.0
    %2163 = vmatprep.subr.mxu0 0.0
    %2164 = vmatpush1.msra.mxu0 0.0
    %2165 = vmatprep.subr.mxu0 0.0
    %2166 = vmatpush1.msra.mxu0 0.0
    %2167 = vmatprep.subr.mxu0 0.0
    %2168 = vmatpush1.msra.mxu0 0.0
    %2169 = vmatprep.subr.mxu0 0.0
    %2170 = vmatpush1.msra.mxu0 0.0
    %2171 = vmatprep.subr.mxu0 0.0
    %2172 = vmatpush1.msra.mxu0 0.0
    %2173 = vmatprep.subr.mxu0 0.0
    %2174 = vmatpush1.msra.mxu0 0.0
    %2175 = vmatprep.subr.mxu0 0.0
    %2176 = vmatpush1.msra.mxu0 0.0
    %2177 = vmatprep.subr.mxu0 0.0
    %2178 = vmatpush1.msra.mxu0 0.0
    %2179 = vmatprep.subr.mxu0 0.0
    %2180 = vmatpush1.msra.mxu0 0.0
    %2181 = vmatprep.subr.mxu0 0.0
    %2182 = vmatpush1.msra.mxu0 0.0
    %2183 = vmatprep.subr.mxu0 0.0
    %2184 = vmatpush1.msra.mxu0 0.0
    %2185 = vmatprep.subr.mxu0 0.0
    %2186 = vmatpush1.msra.mxu0 0.0
    %2187 = vmatprep.subr.mxu0 0.0
    %2188 = vmatpush1.msra.mxu0 0.0
    %2189 = vmatprep.mubr.f32.mxu0 0.0
    %2190 = vmatmul.mubr.f32.gmra.mrb[0].mxu0 %v2108
    %v2191 = vpop.f32.mrb[0].mxu0
    %v2192 = vadd.f32 %v2105, %v2191
    %v2193 = vpop.f32.mrb[0].mxu0
    %2194 = vmatprep.mubr.f32.mxu0 0.0
    %2195 = vmatmul.mubr.f32.gmra.mrb[0].mxu0 %v2111
    %v2196 = vpop.f32.mrb[0].mxu0
    %v2197 = vadd.f32 %v2105, %v2196
    %v2198 = vpop.f32.mrb[0].mxu0
    %2199 = vmatprep.mubr.f32.mxu0 0.0
    %2200 = vmatmul.mubr.f32.gmra.mrb[0].mxu0 %v2114
    %v2201 = vpop.f32.mrb[0].mxu0
    %v2202 = vadd.f32 %v2105, %v2201
    %v2203 = vpop.f32.mrb[0].mxu0
    %2204 = vmatprep.mubr.f32.mxu0 0.0
    %2205 = vmatmul.mubr.f32.gmra.mrb[0].mxu0 %v2117
    %v2206 = vpop.f32.mrb[0].mxu0
    %v2207 = vadd.f32 %v2105, %v2206
    %v2208 = vpop.f32.mrb[0].mxu0
    %2209 = vmatprep.mubr.f32.mxu0 0.0
    %2210 = vmatmul.mubr.f32.gmra.mrb[0].mxu0 %v2120
    %v2211 = vpop.f32.mrb[0].mxu0
    %v2212 = vadd.f32 %v2105, %v2211
    %v2213 = vpop.f32.mrb[0].mxu0
    %2214 = vmatprep.mubr.f32.mxu0 0.0
    %2215 = vmatmul.mubr.f32.gmra.mrb[0].mxu0 %v2123
    %v2216 = vpop.f32.mrb[0].mxu0
    %v2217 = vadd.f32 %v2105, %v2216
    %v2218 = vpop.f32.mrb[0].mxu0
    %2219 = vdwg.mxu0
    %v2220 = vmax.f32 %v2192, 0.0
    %v2221 = vmax.f32 %v2197, 0.0
    %v2222 = vmax.f32 %v2202, 0.0
    %v2223 = vmax.f32 %v2207, 0.0
    %v2224 = vmax.f32 %v2212, 0.0
    %v2225 = vmax.f32 %v2217, 0.0
    %2226 = vst.msk [vmem:[#allocation4] sm:$0xff] %vm179, %v2220
    %2227 = vst.msk [vmem:[#allocation4 + $0x8] sm:$0xff] %vm179, %v2221
    %2228 = vst.msk [vmem:[#allocation4 + $0x10] sm:$0xff] %vm179, %v2222
    %2229 = vst.msk [vmem:[#allocation4 + $0x18] sm:$0xff] %vm179, %v2223
    %2230 = vst.msk [vmem:[#allocation4 + $0x20] sm:$0xff] %vm179, %v2224
    %2231 = vst.msk [vmem:[#allocation4 + $0x28] sm:$0xff] %vm179, %v2225
    %2232 = vst.msk [vmem:[#allocation5] sm:$0xff] %vm179, 0.0
    %2233 = vst.msk [vmem:[#allocation5 + $0x8] sm:$0xff] %vm179, 0.0
    loop: start=0, step=1, limit=48
    $region115: #{rmpnn_forward.1} parent=1 // loop_pre_header
      _
    $region116: #{rmpnn_forward.1} parent=1 // loop_header
      %s2235 = sphi 0, %s2239
      %p2236 = scmp.ge.s32.totalorder %s2235, 48
    $region117: #{rmpnn_forward.1} parent=1 // loop_header_branch
      %2238 = sbr.rel (%p2236) target = $region121
    $region118: #{rmpnn_forward.1} parent=1 // loop_body
      %s2240 = sld [smem:[#allocation8 + %s2235]]
      %s2241 = scalar_lea.vmem [#allocation5], %s2240
      %v2242 = vld [vmem:[%s2241] sm:$0x1]
      %s2243 = scalar_lea.vmem [#allocation4], %s2235
      %v2244 = vld [vmem:[%s2243] sm:$0x1]
      %v2245 = vadd.f32 %v2242, %v2244
      %vm2246 = vcmask 516096
      %2247 = vst.msk [vmem:[%s2241] sm:$0x1] %vm2246, %v2245
    $region119: #{rmpnn_forward.1} parent=1 // loop_footer
      %s2239 = sadd.s32 1, %s2235
    $region120: #{rmpnn_forward.1} parent=1 // loop_footer_branch
      %2234 = sbr.rel target = $region116
    $region121: #{rmpnn_forward.1} parent=1 // loop_exit
      _
    %v2248 = vld [vmem:[%s14] sm:$0xff]
    %v2249 = vld [vmem:[%s14 + $0x8] sm:$0xff]
    %v2250 = vld [vmem:[#allocation5] sm:$0xff]
    %v2251 = vld [vmem:[#allocation5 + $0x8] sm:$0xff]
    %2254 = vrot.lane.b32.xlu0 %v2250, 64
    %v2255 = vpop.permute.xlu0 %2254
    %2256 = vrot.lane.b32.xlu0 %v2251, 64
    %v2257 = vpop.permute.xlu0 %2256
    %v2260 = vsel %vm179, %v2248, %v2255
    %v2261 = vsel %vm179, %v2249, %v2257
    %s2262 = scalar_lea.vmem %s10, 384
    %v2263 = vld [vmem:[%s2262] sm:$0xff]
    %v2264 = vld [vmem:[%s2262 + $0x8] sm:$0xff]
    %v2265 = vld [vmem:[%s2262 + $0x10] sm:$0xff]
    %v2266 = vld [vmem:[%s2262 + $0x18] sm:$0xff]
    %v2267 = vld [vmem:[%s2262 + $0x20] sm:$0xff]
    %v2268 = vld [vmem:[%s2262 + $0x28] sm:$0xff]
    %v2269 = vld [vmem:[%s2262 + $0x30] sm:$0xff]
    %v2270 = vld [vmem:[%s2262 + $0x38] sm:$0xff]
    %v2271 = vld [vmem:[%s2262 + $0x40] sm:$0xff]
    %v2272 = vld [vmem:[%s2262 + $0x48] sm:$0xff]
    %v2273 = vld [vmem:[%s2262 + $0x50] sm:$0xff]
    %v2274 = vld [vmem:[%s2262 + $0x58] sm:$0xff]
    %v2275 = vld [vmem:[%s2262 + $0x60] sm:$0xff]
    %v2276 = vld [vmem:[%s2262 + $0x68] sm:$0xff]
    %v2277 = vld [vmem:[%s2262 + $0x70] sm:$0xff]
    %v2278 = vld [vmem:[%s2262 + $0x78] sm:$0xff]
    %s2279 = scalar_lea.vmem %s11, 3
    %v2280 = vld [vmem:[%s2279] sm:$0x1]
    %v2282 = vlaneseq
    %v2283 = vshrl.u32 %v2282, 7
    %v2284 = vsub.s32 0, %v2283
    %v2285 = vrot.slane %v2280, %v2284
    %2287 = vmatprep.subr.mxu0 0.0
    %2288 = vmatpush1.msra.mxu0 %v2263
    %2289 = vmatprep.subr.mxu0 0.0
    %2290 = vmatpush1.msra.mxu0 %v2264
    %2291 = vmatprep.subr.mxu0 0.0
    %2292 = vmatpush1.msra.mxu0 %v2265
    %2293 = vmatprep.subr.mxu0 0.0
    %2294 = vmatpush1.msra.mxu0 %v2266
    %2295 = vmatprep.subr.mxu0 0.0
    %2296 = vmatpush1.msra.mxu0 %v2267
    %2297 = vmatprep.subr.mxu0 0.0
    %2298 = vmatpush1.msra.mxu0 %v2268
    %2299 = vmatprep.subr.mxu0 0.0
    %2300 = vmatpush1.msra.mxu0 %v2269
    %2301 = vmatprep.subr.mxu0 0.0
    %2302 = vmatpush1.msra.mxu0 %v2270
    %2303 = vmatprep.subr.mxu0 0.0
    %2304 = vmatpush1.msra.mxu0 %v2271
    %2305 = vmatprep.subr.mxu0 0.0
    %2306 = vmatpush1.msra.mxu0 %v2272
    %2307 = vmatprep.subr.mxu0 0.0
    %2308 = vmatpush1.msra.mxu0 %v2273
    %2309 = vmatprep.subr.mxu0 0.0
    %2310 = vmatpush1.msra.mxu0 %v2274
    %2311 = vmatprep.subr.mxu0 0.0
    %2312 = vmatpush1.msra.mxu0 %v2275
    %2313 = vmatprep.subr.mxu0 0.0
    %2314 = vmatpush1.msra.mxu0 %v2276
    %2315 = vmatprep.subr.mxu0 0.0
    %2316 = vmatpush1.msra.mxu0 %v2277
    %2317 = vmatprep.subr.mxu0 0.0
    %2318 = vmatpush1.msra.mxu0 %v2278
    %2319 = vmatprep.subr.mxu0 0.0
    %2320 = vmatpush1.msra.mxu0 0.0
    %2321 = vmatprep.subr.mxu0 0.0
    %2322 = vmatpush1.msra.mxu0 0.0
    %2323 = vmatprep.subr.mxu0 0.0
    %2324 = vmatpush1.msra.mxu0 0.0
    %2325 = vmatprep.subr.mxu0 0.0
    %2326 = vmatpush1.msra.mxu0 0.0
    %2327 = vmatprep.subr.mxu0 0.0
    %2328 = vmatpush1.msra.mxu0 0.0
    %2329 = vmatprep.subr.mxu0 0.0
    %2330 = vmatpush1.msra.mxu0 0.0
    %2331 = vmatprep.subr.mxu0 0.0
    %2332 = vmatpush1.msra.mxu0 0.0
    %2333 = vmatprep.subr.mxu0 0.0
    %2334 = vmatpush1.msra.mxu0 0.0
    %2335 = vmatprep.subr.mxu0 0.0
    %2336 = vmatpush1.msra.mxu0 0.0
    %2337 = vmatprep.subr.mxu0 0.0
    %2338 = vmatpush1.msra.mxu0 0.0
    %2339 = vmatprep.subr.mxu0 0.0
    %2340 = vmatpush1.msra.mxu0 0.0
    %2341 = vmatprep.subr.mxu0 0.0
    %2342 = vmatpush1.msra.mxu0 0.0
    %2343 = vmatprep.subr.mxu0 0.0
    %2344 = vmatpush1.msra.mxu0 0.0
    %2345 = vmatprep.subr.mxu0 0.0
    %2346 = vmatpush1.msra.mxu0 0.0
    %2347 = vmatprep.subr.mxu0 0.0
    %2348 = vmatpush1.msra.mxu0 0.0
    %2349 = vmatprep.subr.mxu0 0.0
    %2350 = vmatpush1.msra.mxu0 0.0
    %2351 = vmatprep.mubr.f32.mxu0 0.0
    %2352 = vmatmul.mubr.f32.gmra.mrb[0].mxu0 %v2260
    %v2353 = vpop.f32.mrb[0].mxu0
    %v2354 = vadd.f32 %v2285, %v2353
    %v2355 = vpop.f32.mrb[0].mxu0
    %2356 = vmatprep.mubr.f32.mxu0 0.0
    %2357 = vmatmul.mubr.f32.gmra.mrb[0].mxu0 %v2261
    %v2358 = vpop.f32.mrb[0].mxu0
    %v2359 = vadd.f32 %v2285, %v2358
    %v2360 = vpop.f32.mrb[0].mxu0
    %2361 = vdwg.mxu0
    %v2362 = vmax.f32 %v2354, 0.0
    %v2363 = vmax.f32 %v2359, 0.0
    %s2364 = scalar_lea.vmem %s12, 192
    %v2365 = vld [vmem:[%s2364] sm:$0xff]
    %v2366 = vld [vmem:[%s2364 + $0x8] sm:$0xff]
    %v2367 = vld [vmem:[%s2364 + $0x10] sm:$0xff]
    %v2368 = vld [vmem:[%s2364 + $0x18] sm:$0xff]
    %v2369 = vld [vmem:[%s2364 + $0x20] sm:$0xff]
    %v2370 = vld [vmem:[%s2364 + $0x28] sm:$0xff]
    %v2371 = vld [vmem:[%s2364 + $0x30] sm:$0xff]
    %v2372 = vld [vmem:[%s2364 + $0x38] sm:$0xff]
    %s2373 = scalar_lea.vmem %s13, 3
    %v2374 = vld [vmem:[%s2373] sm:$0x1]
    %v2376 = vlaneseq
    %v2377 = vshrl.u32 %v2376, 7
    %v2378 = vsub.s32 0, %v2377
    %v2379 = vrot.slane %v2374, %v2378
    %v2382 = vsel %vm179, %v2362, 0
    %v2385 = vsel %vm179, %v2363, 0
    %2387 = vmatprep.subr.mxu0 0.0
    %2388 = vmatpush1.msra.mxu0 %v2365
    %2389 = vmatprep.subr.mxu0 0.0
    %2390 = vmatpush1.msra.mxu0 %v2366
    %2391 = vmatprep.subr.mxu0 0.0
    %2392 = vmatpush1.msra.mxu0 %v2367
    %2393 = vmatprep.subr.mxu0 0.0
    %2394 = vmatpush1.msra.mxu0 %v2368
    %2395 = vmatprep.subr.mxu0 0.0
    %2396 = vmatpush1.msra.mxu0 %v2369
    %2397 = vmatprep.subr.mxu0 0.0
    %2398 = vmatpush1.msra.mxu0 %v2370
    %2399 = vmatprep.subr.mxu0 0.0
    %2400 = vmatpush1.msra.mxu0 %v2371
    %2401 = vmatprep.subr.mxu0 0.0
    %2402 = vmatpush1.msra.mxu0 %v2372
    %2403 = vmatprep.subr.mxu0 0.0
    %2404 = vmatpush1.msra.mxu0 0.0
    %2405 = vmatprep.subr.mxu0 0.0
    %2406 = vmatpush1.msra.mxu0 0.0
    %2407 = vmatprep.subr.mxu0 0.0
    %2408 = vmatpush1.msra.mxu0 0.0
    %2409 = vmatprep.subr.mxu0 0.0
    %2410 = vmatpush1.msra.mxu0 0.0
    %2411 = vmatprep.subr.mxu0 0.0
    %2412 = vmatpush1.msra.mxu0 0.0
    %2413 = vmatprep.subr.mxu0 0.0
    %2414 = vmatpush1.msra.mxu0 0.0
    %2415 = vmatprep.subr.mxu0 0.0
    %2416 = vmatpush1.msra.mxu0 0.0
    %2417 = vmatprep.subr.mxu0 0.0
    %2418 = vmatpush1.msra.mxu0 0.0
    %2419 = vmatprep.subr.mxu0 0.0
    %2420 = vmatpush1.msra.mxu0 0.0
    %2421 = vmatprep.subr.mxu0 0.0
    %2422 = vmatpush1.msra.mxu0 0.0
    %2423 = vmatprep.subr.mxu0 0.0
    %2424 = vmatpush1.msra.mxu0 0.0
    %2425 = vmatprep.subr.mxu0 0.0
    %2426 = vmatpush1.msra.mxu0 0.0
    %2427 = vmatprep.subr.mxu0 0.0
    %2428 = vmatpush1.msra.mxu0 0.0
    %2429 = vmatprep.subr.mxu0 0.0
    %2430 = vmatpush1.msra.mxu0 0.0
    %2431 = vmatprep.subr.mxu0 0.0
    %2432 = vmatpush1.msra.mxu0 0.0
    %2433 = vmatprep.subr.mxu0 0.0
    %2434 = vmatpush1.msra.mxu0 0.0
    %2435 = vmatprep.subr.mxu0 0.0
    %2436 = vmatpush1.msra.mxu0 0.0
    %2437 = vmatprep.subr.mxu0 0.0
    %2438 = vmatpush1.msra.mxu0 0.0
    %2439 = vmatprep.subr.mxu0 0.0
    %2440 = vmatpush1.msra.mxu0 0.0
    %2441 = vmatprep.subr.mxu0 0.0
    %2442 = vmatpush1.msra.mxu0 0.0
    %2443 = vmatprep.subr.mxu0 0.0
    %2444 = vmatpush1.msra.mxu0 0.0
    %2445 = vmatprep.subr.mxu0 0.0
    %2446 = vmatpush1.msra.mxu0 0.0
    %2447 = vmatprep.subr.mxu0 0.0
    %2448 = vmatpush1.msra.mxu0 0.0
    %2449 = vmatprep.subr.mxu0 0.0
    %2450 = vmatpush1.msra.mxu0 0.0
    %2451 = vmatprep.mubr.f32.mxu0 0.0
    %2452 = vmatmul.mubr.f32.gmra.mrb[0].mxu0 %v2382
    %v2453 = vpop.f32.mrb[0].mxu0
    %v2454 = vadd.f32 %v2379, %v2453
    %v2455 = vpop.f32.mrb[0].mxu0
    %2456 = vmatprep.mubr.f32.mxu0 0.0
    %2457 = vmatmul.mubr.f32.gmra.mrb[0].mxu0 %v2385
    %v2458 = vpop.f32.mrb[0].mxu0
    %v2459 = vadd.f32 %v2379, %v2458
    %v2460 = vpop.f32.mrb[0].mxu0
    %2461 = vdwg.mxu0
    %v2462 = vmax.f32 %v2454, 0.0
    %v2463 = vmax.f32 %v2459, 0.0
    %v2464 = vadd.f32 %v2248, %v2462
    %v2465 = vadd.f32 %v2249, %v2463
    %2466 = vst.msk [vmem:[%s14] sm:$0xff] %vm179, %v2464
    %2467 = vst.msk [vmem:[%s14 + $0x8] sm:$0xff] %vm179, %v2465
    // Predicated region
    $region122: #{rmpnn_forward.1} parent=1 // pred_check
      _
    $region123: #{rmpnn_forward.1} parent=1 // pred_check_branch
      %2469 = sbr.rel (0) target = $region125
    $region124: #{rmpnn_forward.1} parent=1 // pred_region
      _
    $region125: #{rmpnn_forward.1} parent=1 // pred_fallthru
      _
    // Predicated region
    $region126: #{rmpnn_forward.1} parent=1 // pred_check
      _
    $region127: #{rmpnn_forward.1} parent=1 // pred_check_branch
      %2471 = sbr.rel (0) target = $region129
    $region128: #{rmpnn_forward.1} parent=1 // pred_region
      _
    $region129: #{rmpnn_forward.1} parent=1 // pred_fallthru
      _
    %2472 = vsyncpa [#allocation7], 1
    %2473 = vsyncpa [#allocation9], 1

</llo_original>
